<compile_context>
chip_gen: v6e
topology: v6e:2x2x1
jax: 0.10.0
libtpu: 0.0.40
codegen_flags: <defaults>
</compile_context>

<pallas_src>
import jax
import jax.numpy as jnp
from jax.experimental import pallas as pl
from jax.experimental.pallas import tpu as pltpu


def _round_up(x, m):
    return ((x + m - 1) // m) * m


def linkdist_kernel(x_ref,
                    w_in_ref, b_in_ref,
                    w_mid_ref, b_mid_ref,
                    w_head_ref, b_head_ref,
                    head_ref):
    # inlayer: Linear(din, hid).  x arrives f32; cast to bf16 for the MXU,
    # accumulate in f32, keep bias add / ReLU in f32 (v5e has no bf16 VPU).
    x = x_ref[...].astype(jnp.bfloat16)
    h = jnp.dot(x, w_in_ref[...],
                preferred_element_type=jnp.float32) + b_in_ref[...]

    # middle FC (n_layers - 2 == 1): ReLU -> Linear(hid, hid)
    h = jnp.maximum(h, 0.0).astype(jnp.bfloat16)
    h = jnp.dot(h, w_mid_ref[...],
                preferred_element_type=jnp.float32) + b_mid_ref[...]

    # shared ReLU feeding both (fused) heads
    h = jnp.maximum(h, 0.0).astype(jnp.bfloat16)

    # fused outlayer+inflayer head: one lane-dense [tm, dhead_p] store (bf16)
    head_ref[...] = (jnp.dot(h, w_head_ref[...],
                             preferred_element_type=jnp.float32)
                     + b_head_ref[...]).astype(head_ref.dtype)


def pack_params(params):
    """One-time weight packing (do this at init, NOT per forward call).

    Pads output dims to multiples of 128 lanes, fuses the two heads into a
    single [hid_p, dhead_p] weight, and casts matmul operands to bf16.
    Biases stay f32.
    """
    (w_in, b_in, w_mid, b_mid, w_out, b_out, w_inf, b_inf) = params
    din, hid = w_in.shape
    dout = w_out.shape[1]
    hid_p = _round_up(hid, 128)
    dhead_p = _round_up(2 * dout, 128)

    def pad2(a, rows, cols):
        return jnp.pad(a, ((0, rows - a.shape[0]), (0, cols - a.shape[1])))

    packed = {
        "din": din,
        "hid_p": hid_p,
        "dout": dout,
        "dhead_p": dhead_p,
        # K of w_in stays at din (x is passed unpadded); pad only out dims.
        "w_in": pad2(w_in, din, hid_p).astype(jnp.bfloat16),
        "b_in": pad2(b_in, 1, hid_p),
        "w_mid": pad2(w_mid, hid_p, hid_p).astype(jnp.bfloat16),
        "b_mid": pad2(b_mid, 1, hid_p),
        "w_head": pad2(jnp.concatenate([w_out, w_inf], axis=1),
                       hid_p, dhead_p).astype(jnp.bfloat16),
        "b_head": pad2(jnp.concatenate([b_out, b_inf], axis=1), 1, dhead_p),
    }
    return packed


def _choose_tm(n_rows, tm):
    """Row tile: multiple of 16, amortizes grid overhead, and keeps the
    (megacore-parallel) grid at >= 2 steps whenever N allows (v7x has 2 TCs)."""
    tm = max(16, min(int(tm), _round_up(n_rows, 16)))
    tm = (tm // 16) * 16
    if _round_up(n_rows, 16) >= 32:
        tm = min(tm, _round_up((n_rows + 1) // 2, 16))
    return tm


def linkdist_forward(x, packed, *, tm=2048, out_dtype=jnp.bfloat16,
                     slice_outputs=True):
    """x: [N, din] float32, packed: result of pack_params().

    Returns (out [N, dout], inf [N, dout]) when slice_outputs=True, else the
    padded fused head [N, dhead_p] (cols [0:dout] = out, [dout:2*dout] = inf)
    so consumers can avoid the extra slicing passes over a store-bound output.
    """
    N, din = x.shape
    assert din == packed["din"], "x feature dim does not match packed params"
    hid_p = packed["hid_p"]
    dout = packed["dout"]
    dhead_p = packed["dhead_p"]

    w_in, b_in = packed["w_in"], packed["b_in"]
    w_mid, b_mid = packed["w_mid"], packed["b_mid"]
    w_head, b_head = packed["w_head"], packed["b_head"]

    tm = _choose_tm(N, tm)
    grid_m = pl.cdiv(N, tm)

    out_isize = jnp.dtype(out_dtype).itemsize

    # ---- cost estimate & explicit VMEM budget -------------------------------
    flops = 2 * N * (din * hid_p + hid_p * hid_p + hid_p * dhead_p)
    weight_bytes = (w_in.size + w_mid.size + w_head.size) * 2 \
                   + (b_in.size + b_mid.size + b_head.size) * 4
    bytes_accessed = N * din * 4 + weight_bytes + N * dhead_p * out_isize
    stream_bytes = 2 * (tm * din * 4 + tm * dhead_p * out_isize)  # dbl-buffered
    act_bytes = 3 * tm * hid_p * 4                                # f32 interm.
    vmem_limit = stream_bytes + 2 * weight_bytes + act_bytes + (8 << 20)
    # Floor 32 MiB (v5e default scoped is 16 MiB); cap 48 MiB so v7x (64 MiB
    # physical per TC) keeps headroom for Mosaic scratch/spills.
    vmem_limit = int(min(max(vmem_limit, 32 << 20), 48 << 20))

    def build_call(weight_mode):
        def const_spec(shape):
            # Weights/biases: constant index_map -> resident across the grid.
            if weight_mode is None:
                return pl.BlockSpec(shape, lambda i: (0, 0))
            return pl.BlockSpec(shape, lambda i: (0, 0),
                                pipeline_mode=weight_mode)

        return pl.pallas_call(
            linkdist_kernel,
            out_shape=jax.ShapeDtypeStruct((N, dhead_p), out_dtype),
            grid_spec=pltpu.PrefetchScalarGridSpec(
                num_scalar_prefetch=0,
                grid=(grid_m,),
                in_specs=[
                    pl.BlockSpec((tm, din), lambda i: (i, 0)),      # x row tile
                    const_spec((din, hid_p)), const_spec((1, hid_p)),    # inlayer
                    const_spec((hid_p, hid_p)), const_spec((1, hid_p)),  # mid FC
                    const_spec((hid_p, dhead_p)), const_spec((1, dhead_p)),  # heads
                ],
                out_specs=pl.BlockSpec((tm, dhead_p), lambda i: (i, 0)),
            ),
            compiler_params=pltpu.CompilerParams(
                dimension_semantics=("parallel",),
                vmem_limit_bytes=vmem_limit),
            cost_estimate=pl.CostEstimate(
                flops=flops, bytes_accessed=bytes_accessed, transcendentals=0),
        )

    args = (x, w_in, b_in, w_mid, b_mid, w_head, b_head)
    try:
        # Single-buffered resident weights: halves their VMEM footprint
        # (matters at production hid on v7x's 64 MiB VMEM).
        head = build_call(pl.Buffered(1))(*args)
    except Exception:
        # Fallback for JAX builds that reject single-buffered pipeline_mode.
        head = build_call(None)(*args)

    if not slice_outputs:
        return head
    return head[:, :dout], head[:, dout:2 * dout]


def init_params(key, din, hid, dout):
    ks = jax.random.split(key, 8)
    scale = 0.05
    w_in = scale * jax.random.normal(ks[0], (din, hid), jnp.float32)
    b_in = scale * jax.random.normal(ks[1], (1, hid), jnp.float32)
    w_mid = scale * jax.random.normal(ks[2], (hid, hid), jnp.float32)
    b_mid = scale * jax.random.normal(ks[3], (1, hid), jnp.float32)
    w_out = scale * jax.random.normal(ks[4], (hid, dout), jnp.float32)
    b_out = scale * jax.random.normal(ks[5], (1, dout), jnp.float32)
    w_inf = scale * jax.random.normal(ks[6], (hid, dout), jnp.float32)
    b_inf = scale * jax.random.normal(ks[7], (1, dout), jnp.float32)
    return (w_in, b_in, w_mid, b_mid, w_out, b_out, w_inf, b_inf)


def reference_forward(x, params):
    (w_in, b_in, w_mid, b_mid, w_out, b_out, w_inf, b_inf) = params
    h = x @ w_in + b_in
    h = jnp.maximum(h, 0.0) @ w_mid + b_mid
    h = jnp.maximum(h, 0.0)
    return h @ w_out + b_out, h @ w_inf + b_inf


if __name__ == "__main__":
    key = jax.random.PRNGKey(0)
    k_x, k_p = jax.random.split(key)

    # Small shapes consistent with the module (hid=256, n_layers=3);
    # din/dout/N deliberately not multiples of 128 to exercise padding and
    # the ragged last row block.
    N, din, hid, dout = 1000, 100, 256, 47

    x = jax.random.normal(k_x, (N, din), jnp.float32)
    params = init_params(k_p, din, hid, dout)
    packed = jax.tree_util.tree_map(
        lambda a: a, pack_params(params))          # one-time packing

    out, inf = linkdist_forward(x, packed, tm=2048)
    out = jax.block_until_ready(out)
    inf = jax.block_until_ready(inf)

    # Sanity check vs a plain-f32 JAX reference; tolerance reflects bf16
    # matmul operands + bf16 output (f32 MXU accumulation throughout).
    ref_out, ref_inf = reference_forward(x, params)
    assert out.shape == ref_out.shape and inf.shape == ref_inf.shape
    assert jnp.allclose(out.astype(jnp.float32), ref_out, atol=5e-2, rtol=5e-2)
    assert jnp.allclose(inf.astype(jnp.float32), ref_inf, atol=5e-2, rtol=5e-2)

    print("KERNEL_OK")
</pallas_src>

<mosaic_0001>
module attributes {stable_mosaic.version = 11 : i64} {
  func.func @linkdist_kernel(%arg0: i32, %arg1: memref<512x100xf32, #tpu.memory_space<vmem>>, %arg2: memref<100x256xbf16, #tpu.memory_space<vmem>>, %arg3: memref<1x256xf32, #tpu.memory_space<vmem>>, %arg4: memref<256x256xbf16, #tpu.memory_space<vmem>>, %arg5: memref<1x256xf32, #tpu.memory_space<vmem>>, %arg6: memref<256x128xbf16, #tpu.memory_space<vmem>>, %arg7: memref<1x128xf32, #tpu.memory_space<vmem>>, %arg8: memref<512x128xbf16, #tpu.memory_space<vmem>>) attributes {dimension_semantics = [#tpu.dimension_semantics<parallel>], iteration_bounds = array<i64: 2>, scalar_prefetch = 0 : i64, scratch_operands = 0 : i64, tpu.core_type = #tpu.core_type<tc>, window_params = [{transform_indices = @transform_0, window_bounds = array<i64: 512, 100>}, {pipeline_mode = #tpu.pipeline_mode<synchronous>, transform_indices = @transform_1, window_bounds = array<i64: 100, 256>}, {pipeline_mode = #tpu.pipeline_mode<synchronous>, transform_indices = @transform_2, window_bounds = array<i64: 1, 256>}, {pipeline_mode = #tpu.pipeline_mode<synchronous>, transform_indices = @transform_3, window_bounds = array<i64: 256, 256>}, {pipeline_mode = #tpu.pipeline_mode<synchronous>, transform_indices = @transform_4, window_bounds = array<i64: 1, 256>}, {pipeline_mode = #tpu.pipeline_mode<synchronous>, transform_indices = @transform_5, window_bounds = array<i64: 256, 128>}, {pipeline_mode = #tpu.pipeline_mode<synchronous>, transform_indices = @transform_6, window_bounds = array<i64: 1, 128>}, {transform_indices = @transform_7, window_bounds = array<i64: 512, 128>}]} {
    %c0 = arith.constant 0 : index
    %c0_0 = arith.constant 0 : index
    %0 = vector.load %arg1[%c0, %c0_0] : memref<512x100xf32, #tpu.memory_space<vmem>>, vector<512x100xf32>
    %1 = arith.truncf %0 : vector<512x100xf32> to vector<512x100xbf16>
    %c0_1 = arith.constant 0 : index
    %c0_2 = arith.constant 0 : index
    %2 = vector.load %arg2[%c0_1, %c0_2] : memref<100x256xbf16, #tpu.memory_space<vmem>>, vector<100x256xbf16>
    %cst = arith.constant dense<0.000000e+00> : vector<512x256xf32>
    %3 = tpu.matmul %1, %2, %cst {dimension_numbers = #tpu.dot_dimension_numbers<[1], [0], [0], [1], [0, 0, 1, 1], [], []>} : vector<512x100xbf16>, vector<100x256xbf16>, vector<512x256xf32> -> vector<512x256xf32>
    %c0_3 = arith.constant 0 : index
    %c0_4 = arith.constant 0 : index
    %4 = vector.load %arg3[%c0_3, %c0_4] : memref<1x256xf32, #tpu.memory_space<vmem>>, vector<1x256xf32>
    %5 = vector.broadcast %4 : vector<1x256xf32> to vector<512x256xf32>
    %6 = arith.addf %3, %5 : vector<512x256xf32>
    %cst_5 = arith.constant 0.000000e+00 : f32
    %7 = vector.broadcast %cst_5 : f32 to vector<512x256xf32>
    %8 = arith.maximumf %6, %7 : vector<512x256xf32>
    %9 = arith.truncf %8 : vector<512x256xf32> to vector<512x256xbf16>
    %c0_6 = arith.constant 0 : index
    %c0_7 = arith.constant 0 : index
    %10 = vector.load %arg4[%c0_6, %c0_7] : memref<256x256xbf16, #tpu.memory_space<vmem>>, vector<256x256xbf16>
    %cst_8 = arith.constant dense<0.000000e+00> : vector<512x256xf32>
    %11 = tpu.matmul %9, %10, %cst_8 {dimension_numbers = #tpu.dot_dimension_numbers<[1], [0], [0], [1], [0, 0, 1, 1], [], []>} : vector<512x256xbf16>, vector<256x256xbf16>, vector<512x256xf32> -> vector<512x256xf32>
    %c0_9 = arith.constant 0 : index
    %c0_10 = arith.constant 0 : index
    %12 = vector.load %arg5[%c0_9, %c0_10] : memref<1x256xf32, #tpu.memory_space<vmem>>, vector<1x256xf32>
    %13 = vector.broadcast %12 : vector<1x256xf32> to vector<512x256xf32>
    %14 = arith.addf %11, %13 : vector<512x256xf32>
    %cst_11 = arith.constant 0.000000e+00 : f32
    %15 = vector.broadcast %cst_11 : f32 to vector<512x256xf32>
    %16 = arith.maximumf %14, %15 : vector<512x256xf32>
    %17 = arith.truncf %16 : vector<512x256xf32> to vector<512x256xbf16>
    %c0_12 = arith.constant 0 : index
    %c0_13 = arith.constant 0 : index
    %18 = vector.load %arg6[%c0_12, %c0_13] : memref<256x128xbf16, #tpu.memory_space<vmem>>, vector<256x128xbf16>
    %cst_14 = arith.constant dense<0.000000e+00> : vector<512x128xf32>
    %19 = tpu.matmul %17, %18, %cst_14 {dimension_numbers = #tpu.dot_dimension_numbers<[1], [0], [0], [1], [0, 0, 1, 1], [], []>} : vector<512x256xbf16>, vector<256x128xbf16>, vector<512x128xf32> -> vector<512x128xf32>
    %c0_15 = arith.constant 0 : index
    %c0_16 = arith.constant 0 : index
    %20 = vector.load %arg7[%c0_15, %c0_16] : memref<1x128xf32, #tpu.memory_space<vmem>>, vector<1x128xf32>
    %21 = vector.broadcast %20 : vector<1x128xf32> to vector<512x128xf32>
    %22 = arith.addf %19, %21 : vector<512x128xf32>
    %23 = arith.truncf %22 : vector<512x128xf32> to vector<512x128xbf16>
    %c0_17 = arith.constant 0 : index
    %c0_18 = arith.constant 0 : index
    %24 = vector.load %arg8[%c0_17, %c0_18] : memref<512x128xbf16, #tpu.memory_space<vmem>>, vector<512x128xbf16>
    tpu.vector_store %arg8[%c0_17, %c0_18], %23 {strides = array<i32>} : memref<512x128xbf16, #tpu.memory_space<vmem>>, vector<512x128xbf16>,
    return
  }
  func.func @transform_0(%arg0: i32) -> (i32, i32) {
    %c0_i32 = arith.constant 0 : i32
    %c0_i32_0 = arith.constant 0 : i32
    return %arg0, %c0_i32 : i32, i32
  }
  func.func @transform_1(%arg0: i32) -> (i32, i32) {
    %c0_i32 = arith.constant 0 : i32
    %c0_i32_0 = arith.constant 0 : i32
    %c0_i32_1 = arith.constant 0 : i32
    return %c0_i32, %c0_i32_0 : i32, i32
  }
  func.func @transform_2(%arg0: i32) -> (i32, i32) {
    %c0_i32 = arith.constant 0 : i32
    %c0_i32_0 = arith.constant 0 : i32
    %c0_i32_1 = arith.constant 0 : i32
    return %c0_i32, %c0_i32_0 : i32, i32
  }
  func.func @transform_3(%arg0: i32) -> (i32, i32) {
    %c0_i32 = arith.constant 0 : i32
    %c0_i32_0 = arith.constant 0 : i32
    %c0_i32_1 = arith.constant 0 : i32
    return %c0_i32, %c0_i32_0 : i32, i32
  }
  func.func @transform_4(%arg0: i32) -> (i32, i32) {
    %c0_i32 = arith.constant 0 : i32
    %c0_i32_0 = arith.constant 0 : i32
    %c0_i32_1 = arith.constant 0 : i32
    return %c0_i32, %c0_i32_0 : i32, i32
  }
  func.func @transform_5(%arg0: i32) -> (i32, i32) {
    %c0_i32 = arith.constant 0 : i32
    %c0_i32_0 = arith.constant 0 : i32
    %c0_i32_1 = arith.constant 0 : i32
    return %c0_i32, %c0_i32_0 : i32, i32
  }
  func.func @transform_6(%arg0: i32) -> (i32, i32) {
    %c0_i32 = arith.constant 0 : i32
    %c0_i32_0 = arith.constant 0 : i32
    %c0_i32_1 = arith.constant 0 : i32
    return %c0_i32, %c0_i32_0 : i32, i32
  }
  func.func @transform_7(%arg0: i32) -> (i32, i32) {
    %c0_i32 = arith.constant 0 : i32
    %c0_i32_0 = arith.constant 0 : i32
    return %arg0, %c0_i32 : i32, i32
  }
}

module attributes {stable_mosaic.version = 11 : i64} {
  func.func @linkdist_kernel(%arg0: i32, %arg1: memref<512x100xf32, #tpu.memory_space<vmem>>, %arg2: memref<100x256xbf16, #tpu.memory_space<vmem>>, %arg3: memref<1x256xf32, #tpu.memory_space<vmem>>, %arg4: memref<256x256xbf16, #tpu.memory_space<vmem>>, %arg5: memref<1x256xf32, #tpu.memory_space<vmem>>, %arg6: memref<256x128xbf16, #tpu.memory_space<vmem>>, %arg7: memref<1x128xf32, #tpu.memory_space<vmem>>, %arg8: memref<512x128xbf16, #tpu.memory_space<vmem>>) attributes {dimension_semantics = [#tpu.dimension_semantics<parallel>], iteration_bounds = array<i64: 2>, scalar_prefetch = 0 : i64, scratch_operands = 0 : i64, tpu.core_type = #tpu.core_type<tc>, window_params = [{transform_indices = @transform_0, window_bounds = array<i64: 512, 100>}, {pipeline_mode = #tpu.pipeline_mode<synchronous>, transform_indices = @transform_1, window_bounds = array<i64: 100, 256>}, {pipeline_mode = #tpu.pipeline_mode<synchronous>, transform_indices = @transform_2, window_bounds = array<i64: 1, 256>}, {pipeline_mode = #tpu.pipeline_mode<synchronous>, transform_indices = @transform_3, window_bounds = array<i64: 256, 256>}, {pipeline_mode = #tpu.pipeline_mode<synchronous>, transform_indices = @transform_4, window_bounds = array<i64: 1, 256>}, {pipeline_mode = #tpu.pipeline_mode<synchronous>, transform_indices = @transform_5, window_bounds = array<i64: 256, 128>}, {pipeline_mode = #tpu.pipeline_mode<synchronous>, transform_indices = @transform_6, window_bounds = array<i64: 1, 128>}, {transform_indices = @transform_7, window_bounds = array<i64: 512, 128>}]} {
    %c0 = arith.constant 0 : index
    %c0_0 = arith.constant 0 : index
    %0 = vector.load %arg1[%c0, %c0_0] : memref<512x100xf32, #tpu.memory_space<vmem>>, vector<512x100xf32>
    %1 = arith.truncf %0 : vector<512x100xf32> to vector<512x100xbf16>
    %c0_1 = arith.constant 0 : index
    %c0_2 = arith.constant 0 : index
    %2 = vector.load %arg2[%c0_1, %c0_2] : memref<100x256xbf16, #tpu.memory_space<vmem>>, vector<100x256xbf16>
    %cst = arith.constant dense<0.000000e+00> : vector<512x256xf32>
    %3 = tpu.matmul %1, %2, %cst {dimension_numbers = #tpu.dot_dimension_numbers<[1], [0], [0], [1], [0, 0, 1, 1], [], []>} : vector<512x100xbf16>, vector<100x256xbf16>, vector<512x256xf32> -> vector<512x256xf32>
    %c0_3 = arith.constant 0 : index
    %c0_4 = arith.constant 0 : index
    %4 = vector.load %arg3[%c0_3, %c0_4] : memref<1x256xf32, #tpu.memory_space<vmem>>, vector<1x256xf32>
    %5 = vector.broadcast %4 : vector<1x256xf32> to vector<512x256xf32>
    %6 = arith.addf %3, %5 : vector<512x256xf32>
    %cst_5 = arith.constant 0.000000e+00 : f32
    %7 = vector.broadcast %cst_5 : f32 to vector<512x256xf32>
    %8 = arith.maximumf %6, %7 : vector<512x256xf32>
    %9 = arith.truncf %8 : vector<512x256xf32> to vector<512x256xbf16>
    %c0_6 = arith.constant 0 : index
    %c0_7 = arith.constant 0 : index
    %10 = vector.load %arg4[%c0_6, %c0_7] : memref<256x256xbf16, #tpu.memory_space<vmem>>, vector<256x256xbf16>
    %cst_8 = arith.constant dense<0.000000e+00> : vector<512x256xf32>
    %11 = tpu.matmul %9, %10, %cst_8 {dimension_numbers = #tpu.dot_dimension_numbers<[1], [0], [0], [1], [0, 0, 1, 1], [], []>} : vector<512x256xbf16>, vector<256x256xbf16>, vector<512x256xf32> -> vector<512x256xf32>
    %c0_9 = arith.constant 0 : index
    %c0_10 = arith.constant 0 : index
    %12 = vector.load %arg5[%c0_9, %c0_10] : memref<1x256xf32, #tpu.memory_space<vmem>>, vector<1x256xf32>
    %13 = vector.broadcast %12 : vector<1x256xf32> to vector<512x256xf32>
    %14 = arith.addf %11, %13 : vector<512x256xf32>
    %cst_11 = arith.constant 0.000000e+00 : f32
    %15 = vector.broadcast %cst_11 : f32 to vector<512x256xf32>
    %16 = arith.maximumf %14, %15 : vector<512x256xf32>
    %17 = arith.truncf %16 : vector<512x256xf32> to vector<512x256xbf16>
    %c0_12 = arith.constant 0 : index
    %c0_13 = arith.constant 0 : index
    %18 = vector.load %arg6[%c0_12, %c0_13] : memref<256x128xbf16, #tpu.memory_space<vmem>>, vector<256x128xbf16>
    %cst_14 = arith.constant dense<0.000000e+00> : vector<512x128xf32>
    %19 = tpu.matmul %17, %18, %cst_14 {dimension_numbers = #tpu.dot_dimension_numbers<[1], [0], [0], [1], [0, 0, 1, 1], [], []>} : vector<512x256xbf16>, vector<256x128xbf16>, vector<512x128xf32> -> vector<512x128xf32>
    %c0_15 = arith.constant 0 : index
    %c0_16 = arith.constant 0 : index
    %20 = vector.load %arg7[%c0_15, %c0_16] : memref<1x128xf32, #tpu.memory_space<vmem>>, vector<1x128xf32>
    %21 = vector.broadcast %20 : vector<1x128xf32> to vector<512x128xf32>
    %22 = arith.addf %19, %21 : vector<512x128xf32>
    %23 = arith.truncf %22 : vector<512x128xf32> to vector<512x128xbf16>
    %c0_17 = arith.constant 0 : index
    %c0_18 = arith.constant 0 : index
    %24 = vector.load %arg8[%c0_17, %c0_18] : memref<512x128xbf16, #tpu.memory_space<vmem>>, vector<512x128xbf16>
    tpu.vector_store %arg8[%c0_17, %c0_18], %23 {strides = array<i32>} : memref<512x128xbf16, #tpu.memory_space<vmem>>, vector<512x128xbf16>,
    return
  }
  func.func @transform_0(%arg0: i32) -> (i32, i32) {
    %c0_i32 = arith.constant 0 : i32
    %c0_i32_0 = arith.constant 0 : i32
    return %arg0, %c0_i32 : i32, i32
  }
  func.func @transform_1(%arg0: i32) -> (i32, i32) {
    %c0_i32 = arith.constant 0 : i32
    %c0_i32_0 = arith.constant 0 : i32
    %c0_i32_1 = arith.constant 0 : i32
    return %c0_i32, %c0_i32_0 : i32, i32
  }
  func.func @transform_2(%arg0: i32) -> (i32, i32) {
    %c0_i32 = arith.constant 0 : i32
    %c0_i32_0 = arith.constant 0 : i32
    %c0_i32_1 = arith.constant 0 : i32
    return %c0_i32, %c0_i32_0 : i32, i32
  }
  func.func @transform_3(%arg0: i32) -> (i32, i32) {
    %c0_i32 = arith.constant 0 : i32
    %c0_i32_0 = arith.constant 0 : i32
    %c0_i32_1 = arith.constant 0 : i32
    return %c0_i32, %c0_i32_0 : i32, i32
  }
  func.func @transform_4(%arg0: i32) -> (i32, i32) {
    %c0_i32 = arith.constant 0 : i32
    %c0_i32_0 = arith.constant 0 : i32
    %c0_i32_1 = arith.constant 0 : i32
    return %c0_i32, %c0_i32_0 : i32, i32
  }
  func.func @transform_5(%arg0: i32) -> (i32, i32) {
    %c0_i32 = arith.constant 0 : i32
    %c0_i32_0 = arith.constant 0 : i32
    %c0_i32_1 = arith.constant 0 : i32
    return %c0_i32, %c0_i32_0 : i32, i32
  }
  func.func @transform_6(%arg0: i32) -> (i32, i32) {
    %c0_i32 = arith.constant 0 : i32
    %c0_i32_0 = arith.constant 0 : i32
    %c0_i32_1 = arith.constant 0 : i32
    return %c0_i32, %c0_i32_0 : i32, i32
  }
  func.func @transform_7(%arg0: i32) -> (i32, i32) {
    %c0_i32 = arith.constant 0 : i32
    %c0_i32_0 = arith.constant 0 : i32
    return %arg0, %c0_i32 : i32, i32
  }
}

</mosaic_0001>

<llo_original>
// kernel: tpu_custom_call.1
$region0: #{tpu_custom_call.1}
  #allocation0 [shape = 'u32[]', space=smem, size = 0x4, offset = 0x4, fixed_abs, tag = 'smem constant byte address 0x4 - core index']
  #allocation1 [shape = 'u32[144,128]{1,0:T(1,128)}', space=vmem, size = 0x12000, scoped, tag = 'internal scratch']
  %s0 = inlined_call_operand.vmem [shape: f32[1000,100], index: 0, kind: input, shape index: {}]
  %s1 = inlined_call_operand.vmem [shape: bf16[100,256], index: 1, kind: input, shape index: {}]
  %s2 = inlined_call_operand.vmem [shape: f32[1,256], index: 2, kind: input, shape index: {}]
  %s3 = inlined_call_operand.vmem [shape: bf16[256,256], index: 3, kind: input, shape index: {}]
  %s4 = inlined_call_operand.vmem [shape: f32[1,256], index: 4, kind: input, shape index: {}]
  %s5 = inlined_call_operand.vmem [shape: bf16[256,128], index: 5, kind: input, shape index: {}]
  %s6 = inlined_call_operand.vmem [shape: f32[1,128], index: 6, kind: input, shape index: {}]
  %s7 = inlined_call_operand.hbm [shape: bf16[1000,128], index: 7, kind: output, shape index: {}]
  %s8 = sld [smem:[#allocation0]]
  $region61: #{tpu_custom_call.1} parent=0
    _
  %s10 = ssub.s32 1, %s8
  %s11 = scalar_select 0, %s10, %s8
  $region1: #{tpu_custom_call.1} parent=0
    #allocation2 [shape = 'u8[262144]{0}', space=vmem, size = 0x40000, scoped, tag = 'output window, operand 0']
    #allocation3 [shape = 's32[2]{0}', space=sflag, size = 0x8, scoped, tag = 'scoped memory for tpu_custom_call.1']
    %12 = vsyncpa [#allocation3], 0
    %s13 = scalar_lea.sflag [#allocation3], 1
    %14 = vsyncpa %s13, 0
    loop: start=0, step=1, limit=4
    $region2: #{tpu_custom_call.1} parent=1 // loop_pre_header
      _
    $region3: #{tpu_custom_call.1} parent=1 // loop_header
      %s16 = sphi 0, %s20
      %p17 = scmp.ge.s32.totalorder %s16, 4
      %s26 = sphi 0, %s28
      %s29 = sphi 0, %s26
      %s30 = sphi 0, %s29
      %s46 = sphi 0, %s30
      %s50 = sphi 0, %s50
      %s52 = sphi 0, %s50
      %s53 = sphi 0, %s52
      %s67 = sphi 0, %s53
      %s71 = sphi 0, %s71
      %s73 = sphi 0, %s71
      %s74 = sphi 0, %s73
      %s88 = sphi 0, %s74
      %s92 = sphi 0, %s92
      %s94 = sphi 0, %s92
      %s95 = sphi 0, %s94
      %s109 = sphi 0, %s95
      %s113 = sphi 0, %s113
      %s115 = sphi 0, %s113
      %s116 = sphi 0, %s115
      %s130 = sphi 0, %s116
      %s134 = sphi 0, %s134
      %s136 = sphi 0, %s134
      %s137 = sphi 0, %s136
      %s151 = sphi 0, %s137
      %s155 = sphi 0, %s155
      %s157 = sphi 0, %s155
      %s158 = sphi 0, %s157
      %s172 = sphi 0, %s158
      %s178 = sphi 0, %s180
      %s181 = sphi 0, %s178
      %s182 = sphi 0, %s181
      %s198 = sphi 0, %s182
    $region4: #{tpu_custom_call.1} parent=1 // loop_header_branch
      %19 = sbr.rel (%p17) target = $region8
    $region5: #{tpu_custom_call.1} parent=1 // loop_body
      %s21 = ssub.s32 %s16, 1
      %s22 = ssub.s32 %s16, 2
      %s23 = sadd.s32 %s16, 1
      %s24 = ssub.s32 %s16, %s23
      %p25 = scmp.eq.s32.totalorder %s24, 0
      %s27 = sadd.s32 %s26, 1
      %s28 = scalar_select %p25, %s26, %s27
      %p31 = pneg %p25
      %p32 = scmp.eq.s32.totalorder %s16, 1
      %p33 = por %p31, %p32
      %p34 = scmp.ne.s32.totalorder %s26, %s29
      %p35 = scmp.eq.s32.totalorder %s16, 0
      %p36 = por %p34, %p35
      %p37 = scmp.ne.s32.totalorder %s26, %s29
      %p38 = scmp.eq.s32.totalorder %s21, 1
      %p39 = por %p37, %p38
      %p40 = scmp.ne.s32.totalorder %s29, %s30
      %p41 = scmp.eq.s32.totalorder %s21, 0
      %p42 = por %p40, %p41
      %p43 = scmp.ne.s32.totalorder %s29, %s30
      %p44 = scmp.eq.s32.totalorder %s22, 1
      %p45 = por %p43, %p44
      %p47 = scmp.ne.s32.totalorder %s30, %s46
      %p48 = scmp.eq.s32.totalorder %s22, 0
      %p49 = por %p47, %p48
      %s51 = sadd.s32 %s50, 1
      %p54 = scmp.eq.s32.totalorder %s16, 1
      %p55 = scmp.ne.s32.totalorder %s50, %s52
      %p56 = scmp.eq.s32.totalorder %s16, 0
      %p57 = por %p55, %p56
      %p58 = scmp.ne.s32.totalorder %s50, %s52
      %p59 = scmp.eq.s32.totalorder %s21, 1
      %p60 = por %p58, %p59
      %p61 = scmp.ne.s32.totalorder %s52, %s53
      %p62 = scmp.eq.s32.totalorder %s21, 0
      %p63 = por %p61, %p62
      %p64 = scmp.ne.s32.totalorder %s52, %s53
      %p65 = scmp.eq.s32.totalorder %s22, 1
      %p66 = por %p64, %p65
      %p68 = scmp.ne.s32.totalorder %s53, %s67
      %p69 = scmp.eq.s32.totalorder %s22, 0
      %p70 = por %p68, %p69
      %s72 = sadd.s32 %s71, 1
      %p75 = scmp.eq.s32.totalorder %s16, 1
      %p76 = scmp.ne.s32.totalorder %s71, %s73
      %p77 = scmp.eq.s32.totalorder %s16, 0
      %p78 = por %p76, %p77
      %p79 = scmp.ne.s32.totalorder %s71, %s73
      %p80 = scmp.eq.s32.totalorder %s21, 1
      %p81 = por %p79, %p80
      %p82 = scmp.ne.s32.totalorder %s73, %s74
      %p83 = scmp.eq.s32.totalorder %s21, 0
      %p84 = por %p82, %p83
      %p85 = scmp.ne.s32.totalorder %s73, %s74
      %p86 = scmp.eq.s32.totalorder %s22, 1
      %p87 = por %p85, %p86
      %p89 = scmp.ne.s32.totalorder %s74, %s88
      %p90 = scmp.eq.s32.totalorder %s22, 0
      %p91 = por %p89, %p90
      %s93 = sadd.s32 %s92, 1
      %p96 = scmp.eq.s32.totalorder %s16, 1
      %p97 = scmp.ne.s32.totalorder %s92, %s94
      %p98 = scmp.eq.s32.totalorder %s16, 0
      %p99 = por %p97, %p98
      %p100 = scmp.ne.s32.totalorder %s92, %s94
      %p101 = scmp.eq.s32.totalorder %s21, 1
      %p102 = por %p100, %p101
      %p103 = scmp.ne.s32.totalorder %s94, %s95
      %p104 = scmp.eq.s32.totalorder %s21, 0
      %p105 = por %p103, %p104
      %p106 = scmp.ne.s32.totalorder %s94, %s95
      %p107 = scmp.eq.s32.totalorder %s22, 1
      %p108 = por %p106, %p107
      %p110 = scmp.ne.s32.totalorder %s95, %s109
      %p111 = scmp.eq.s32.totalorder %s22, 0
      %p112 = por %p110, %p111
      %s114 = sadd.s32 %s113, 1
      %p117 = scmp.eq.s32.totalorder %s16, 1
      %p118 = scmp.ne.s32.totalorder %s113, %s115
      %p119 = scmp.eq.s32.totalorder %s16, 0
      %p120 = por %p118, %p119
      %p121 = scmp.ne.s32.totalorder %s113, %s115
      %p122 = scmp.eq.s32.totalorder %s21, 1
      %p123 = por %p121, %p122
      %p124 = scmp.ne.s32.totalorder %s115, %s116
      %p125 = scmp.eq.s32.totalorder %s21, 0
      %p126 = por %p124, %p125
      %p127 = scmp.ne.s32.totalorder %s115, %s116
      %p128 = scmp.eq.s32.totalorder %s22, 1
      %p129 = por %p127, %p128
      %p131 = scmp.ne.s32.totalorder %s116, %s130
      %p132 = scmp.eq.s32.totalorder %s22, 0
      %p133 = por %p131, %p132
      %s135 = sadd.s32 %s134, 1
      %p138 = scmp.eq.s32.totalorder %s16, 1
      %p139 = scmp.ne.s32.totalorder %s134, %s136
      %p140 = scmp.eq.s32.totalorder %s16, 0
      %p141 = por %p139, %p140
      %p142 = scmp.ne.s32.totalorder %s134, %s136
      %p143 = scmp.eq.s32.totalorder %s21, 1
      %p144 = por %p142, %p143
      %p145 = scmp.ne.s32.totalorder %s136, %s137
      %p146 = scmp.eq.s32.totalorder %s21, 0
      %p147 = por %p145, %p146
      %p148 = scmp.ne.s32.totalorder %s136, %s137
      %p149 = scmp.eq.s32.totalorder %s22, 1
      %p150 = por %p148, %p149
      %p152 = scmp.ne.s32.totalorder %s137, %s151
      %p153 = scmp.eq.s32.totalorder %s22, 0
      %p154 = por %p152, %p153
      %s156 = sadd.s32 %s155, 1
      %p159 = scmp.eq.s32.totalorder %s16, 1
      %p160 = scmp.ne.s32.totalorder %s155, %s157
      %p161 = scmp.eq.s32.totalorder %s16, 0
      %p162 = por %p160, %p161
      %p163 = scmp.ne.s32.totalorder %s155, %s157
      %p164 = scmp.eq.s32.totalorder %s21, 1
      %p165 = por %p163, %p164
      %p166 = scmp.ne.s32.totalorder %s157, %s158
      %p167 = scmp.eq.s32.totalorder %s21, 0
      %p168 = por %p166, %p167
      %p169 = scmp.ne.s32.totalorder %s157, %s158
      %p170 = scmp.eq.s32.totalorder %s22, 1
      %p171 = por %p169, %p170
      %p173 = scmp.ne.s32.totalorder %s158, %s172
      %p174 = scmp.eq.s32.totalorder %s22, 0
      %p175 = por %p173, %p174
      %s176 = ssub.s32 %s16, %s23
      %p177 = scmp.eq.s32.totalorder %s176, 0
      %s179 = sadd.s32 %s178, 1
      %s180 = scalar_select %p177, %s178, %s179
      %p183 = pneg %p177
      %p184 = scmp.eq.s32.totalorder %s16, 1
      %p185 = por %p183, %p184
      %p186 = scmp.ne.s32.totalorder %s178, %s181
      %p187 = scmp.eq.s32.totalorder %s16, 0
      %p188 = por %p186, %p187
      %p189 = scmp.ne.s32.totalorder %s178, %s181
      %p190 = scmp.eq.s32.totalorder %s21, 1
      %p191 = por %p189, %p190
      %p192 = scmp.ne.s32.totalorder %s181, %s182
      %p193 = scmp.eq.s32.totalorder %s21, 0
      %p194 = por %p192, %p193
      %p195 = scmp.ne.s32.totalorder %s181, %s182
      %p196 = scmp.eq.s32.totalorder %s22, 1
      %p197 = por %p195, %p196
      %p199 = scmp.ne.s32.totalorder %s182, %s198
      %p200 = scmp.eq.s32.totalorder %s22, 0
      %p201 = por %p199, %p200
      %p202 = scmp.le.s32.totalorder 1, %s16
      %p203 = scmp.lt.s32.totalorder %s16, 3
      %p204 = pnand %p202, %p203
      %p205 = pneg %p204
      // Predicated region
      $region9: #{tpu_custom_call.1} parent=5 // pred_check
        _
      $region10: #{tpu_custom_call.1} parent=5 // pred_check_branch
        %207 = sbr.rel (%p204) target = $region12
      $region11: #{tpu_custom_call.1} parent=5 // pred_region
        %s208 = ssub.s32 %s16, 1
        // Predicated region
        $region13: #{tpu_custom_call.1} parent=11 // pred_check
          %p209 = pneg %p63
        $region14: #{tpu_custom_call.1} parent=11 // pred_check_branch
          %211 = sbr.rel (%p209) target = $region16
        $region15: #{tpu_custom_call.1} parent=11 // pred_region
          _
        $region16: #{tpu_custom_call.1} parent=11 // pred_fallthru
          _
        // Predicated region
        $region17: #{tpu_custom_call.1} parent=11 // pred_check
          %p212 = pneg %p84
        $region18: #{tpu_custom_call.1} parent=11 // pred_check_branch
          %214 = sbr.rel (%p212) target = $region20
        $region19: #{tpu_custom_call.1} parent=11 // pred_region
          _
        $region20: #{tpu_custom_call.1} parent=11 // pred_fallthru
          _
        // Predicated region
        $region21: #{tpu_custom_call.1} parent=11 // pred_check
          %p215 = pneg %p105
        $region22: #{tpu_custom_call.1} parent=11 // pred_check_branch
          %217 = sbr.rel (%p215) target = $region24
        $region23: #{tpu_custom_call.1} parent=11 // pred_region
          _
        $region24: #{tpu_custom_call.1} parent=11 // pred_fallthru
          _
        // Predicated region
        $region25: #{tpu_custom_call.1} parent=11 // pred_check
          %p218 = pneg %p126
        $region26: #{tpu_custom_call.1} parent=11 // pred_check_branch
          %220 = sbr.rel (%p218) target = $region28
        $region27: #{tpu_custom_call.1} parent=11 // pred_region
          _
        $region28: #{tpu_custom_call.1} parent=11 // pred_fallthru
          _
        // Predicated region
        $region29: #{tpu_custom_call.1} parent=11 // pred_check
          %p221 = pneg %p147
        $region30: #{tpu_custom_call.1} parent=11 // pred_check_branch
          %223 = sbr.rel (%p221) target = $region32
        $region31: #{tpu_custom_call.1} parent=11 // pred_region
          _
        $region32: #{tpu_custom_call.1} parent=11 // pred_fallthru
          _
        // Predicated region
        $region33: #{tpu_custom_call.1} parent=11 // pred_check
          %p224 = pneg %p168
        $region34: #{tpu_custom_call.1} parent=11 // pred_check_branch
          %226 = sbr.rel (%p224) target = $region36
        $region35: #{tpu_custom_call.1} parent=11 // pred_region
          _
        $region36: #{tpu_custom_call.1} parent=11 // pred_fallthru
          _
      $region12: #{tpu_custom_call.1} parent=5 // pred_fallthru
        _
      %p227 = scmp.lt.s32.totalorder %s16, 2
      // Predicated region
      $region37: #{tpu_custom_call.1} parent=5 // pred_check
        %p228 = pneg %p227
      $region38: #{tpu_custom_call.1} parent=5 // pred_check_branch
        %230 = sbr.rel (%p228) target = $region40
      $region39: #{tpu_custom_call.1} parent=5 // pred_region
        // Predicated region
        $region41: #{tpu_custom_call.1} parent=39 // pred_check
          %p231 = pneg %p36
        $region42: #{tpu_custom_call.1} parent=39 // pred_check_branch
          %233 = sbr.rel (%p231) target = $region44
        $region43: #{tpu_custom_call.1} parent=39 // pred_region
          %s234 = smul.u32 64, %s16
          %s235 = ssub.s32 125, %s234
          %p236 = scmp.lt.s32.totalorder %s235, 64
          %s237 = scalar_select %p236, %s235, 64
          %s238 = smul.u32 128, %s237
          %p239 = scmp.lt.s32.totalorder %s234, 124
          %s240 = scalar_select %p239, %s234, 124
          %s241 = smul.addr %s240, 8
          %s242 = scalar_lea.vmem %s0, %s241
          %s243 = smul.u32 64, %s16
          %s244 = ssub.s32 125, %s243
          %p245 = scmp.lt.s32.totalorder %s244, 64
          %s246 = scalar_select %p245, %s244, 64
          %s247 = smul.u32 128, %s246
        $region44: #{tpu_custom_call.1} parent=39 // pred_fallthru
          _
      $region40: #{tpu_custom_call.1} parent=5 // pred_fallthru
        _
      %p248 = scmp.le.s32.totalorder 1, %s16
      %p249 = scmp.lt.s32.totalorder %s16, 3
      %p250 = pnand %p248, %p249
      %p251 = pneg %p250
      // Predicated region
      $region45: #{tpu_custom_call.1} parent=5 // pred_check
        _
      $region46: #{tpu_custom_call.1} parent=5 // pred_check_branch
        %253 = sbr.rel (%p250) target = $region48
      $region47: #{tpu_custom_call.1} parent=5 // pred_region
        %s254 = ssub.s32 %s16, 1
        %s255 = smul.u32 64, %s21
        %s256 = ssub.s32 125, %s255
        %p257 = scmp.lt.s32.totalorder %s256, 64
        %s258 = scalar_select %p257, %s256, 64
        %s259 = smul.u32 128, %s258
        %p260 = scmp.lt.s32.totalorder %s255, 124
        %s261 = scalar_select %p260, %s255, 124
        %s262 = smul.addr %s261, 8
        %s263 = scalar_lea.vmem %s0, %s262
        %p264 = pneg %p42
        %p265 = pneg %p39
        %p266 = pneg %p63
        %p267 = pneg %p60
        %p268 = pneg %p84
        %p269 = pneg %p81
        %p270 = pneg %p105
        %p271 = pneg %p102
        %p272 = pneg %p126
        %p273 = pneg %p123
        %p274 = pneg %p147
        %p275 = pneg %p144
        %p276 = pneg %p168
        %p277 = pneg %p165
        %p278 = pneg %p194
        %p279 = pneg %p191
        %s280 = sand.u32 %s181, 1
        %s281 = scalar_lea.sflag [#allocation3], %s280
        %s282 = sand.u32 %s181, 1
        %s283 = smul.addr %s282, 256
        %s284 = scalar_lea.vmem [#allocation2], %s283
        %s285 = smul.u32 64, %s21
        %s286 = ssub.s32 125, %s285
        %p287 = scmp.lt.s32.totalorder %s286, 64
        %s288 = scalar_select %p287, %s286, 64
        %s289 = smul.u32 128, %s288
        %p290 = scmp.lt.s32.totalorder %s285, 124
        %s291 = scalar_select %p290, %s285, 124
        %s292 = smul.addr %s291, 8
        %s293 = scalar_lea.vmem %s0, %s292
        %s294 = smul.u32 64, %s21
        %s295 = ssub.s32 125, %s294
        %p296 = scmp.lt.s32.totalorder %s295, 64
        %s297 = scalar_select %p296, %s295, 64
        %s298 = smul.u32 128, %s297
        %s299 = smul.u32 64, %s21
        %s300 = ssub.s32 125, %s299
        %p301 = scmp.lt.s32.totalorder %s300, 64
        %s302 = scalar_select %p301, %s300, 64
        %s303 = smul.u32 64, %s302
        %v305 = vld [vmem:[%s293] sm:$0xff]
        %v306 = vld [vmem:[%s293 + $0x8] sm:$0xff]
        %v307 = vld [vmem:[%s293 + $0x10] sm:$0xff]
        %v308 = vld [vmem:[%s293 + $0x18] sm:$0xff]
        %v309 = vld [vmem:[%s293 + $0x20] sm:$0xff]
        %v310 = vld [vmem:[%s293 + $0x28] sm:$0xff]
        %v311 = vld [vmem:[%s293 + $0x30] sm:$0xff]
        %v312 = vld [vmem:[%s293 + $0x38] sm:$0xff]
        %v313 = vld [vmem:[%s293 + $0x40] sm:$0xff]
        %v314 = vld [vmem:[%s293 + $0x48] sm:$0xff]
        %v315 = vld [vmem:[%s293 + $0x50] sm:$0xff]
        %v316 = vld [vmem:[%s293 + $0x58] sm:$0xff]
        %v317 = vld [vmem:[%s293 + $0x60] sm:$0xff]
        %v318 = vld [vmem:[%s293 + $0x68] sm:$0xff]
        %v319 = vld [vmem:[%s293 + $0x70] sm:$0xff]
        %v320 = vld [vmem:[%s293 + $0x78] sm:$0xff]
        %v321 = vld [vmem:[%s293 + $0x80] sm:$0xff]
        %v322 = vld [vmem:[%s293 + $0x88] sm:$0xff]
        %v323 = vld [vmem:[%s293 + $0x90] sm:$0xff]
        %v324 = vld [vmem:[%s293 + $0x98] sm:$0xff]
        %v325 = vld [vmem:[%s293 + $0xa0] sm:$0xff]
        %v326 = vld [vmem:[%s293 + $0xa8] sm:$0xff]
        %v327 = vld [vmem:[%s293 + $0xb0] sm:$0xff]
        %v328 = vld [vmem:[%s293 + $0xb8] sm:$0xff]
        %v329 = vld [vmem:[%s293 + $0xc0] sm:$0xff]
        %v330 = vld [vmem:[%s293 + $0xc8] sm:$0xff]
        %v331 = vld [vmem:[%s293 + $0xd0] sm:$0xff]
        %v332 = vld [vmem:[%s293 + $0xd8] sm:$0xff]
        %v333 = vld [vmem:[%s293 + $0xe0] sm:$0xff]
        %v334 = vld [vmem:[%s293 + $0xe8] sm:$0xff]
        %v335 = vld [vmem:[%s293 + $0xf0] sm:$0xff]
        %v336 = vld [vmem:[%s293 + $0xf8] sm:$0xff]
        %v337 = vld [vmem:[%s293 + $0x100] sm:$0xff]
        %v338 = vld [vmem:[%s293 + $0x108] sm:$0xff]
        %v339 = vld [vmem:[%s293 + $0x110] sm:$0xff]
        %v340 = vld [vmem:[%s293 + $0x118] sm:$0xff]
        %v341 = vld [vmem:[%s293 + $0x120] sm:$0xff]
        %v342 = vld [vmem:[%s293 + $0x128] sm:$0xff]
        %v343 = vld [vmem:[%s293 + $0x130] sm:$0xff]
        %v344 = vld [vmem:[%s293 + $0x138] sm:$0xff]
        %v345 = vld [vmem:[%s293 + $0x140] sm:$0xff]
        %v346 = vld [vmem:[%s293 + $0x148] sm:$0xff]
        %v347 = vld [vmem:[%s293 + $0x150] sm:$0xff]
        %v348 = vld [vmem:[%s293 + $0x158] sm:$0xff]
        %v349 = vld [vmem:[%s293 + $0x160] sm:$0xff]
        %v350 = vld [vmem:[%s293 + $0x168] sm:$0xff]
        %v351 = vld [vmem:[%s293 + $0x170] sm:$0xff]
        %v352 = vld [vmem:[%s293 + $0x178] sm:$0xff]
        %v353 = vld [vmem:[%s293 + $0x180] sm:$0xff]
        %v354 = vld [vmem:[%s293 + $0x188] sm:$0xff]
        %v355 = vld [vmem:[%s293 + $0x190] sm:$0xff]
        %v356 = vld [vmem:[%s293 + $0x198] sm:$0xff]
        %v357 = vld [vmem:[%s293 + $0x1a0] sm:$0xff]
        %v358 = vld [vmem:[%s293 + $0x1a8] sm:$0xff]
        %v359 = vld [vmem:[%s293 + $0x1b0] sm:$0xff]
        %v360 = vld [vmem:[%s293 + $0x1b8] sm:$0xff]
        %v361 = vld [vmem:[%s293 + $0x1c0] sm:$0xff]
        %v362 = vld [vmem:[%s293 + $0x1c8] sm:$0xff]
        %v363 = vld [vmem:[%s293 + $0x1d0] sm:$0xff]
        %v364 = vld [vmem:[%s293 + $0x1d8] sm:$0xff]
        %v365 = vld [vmem:[%s293 + $0x1e0] sm:$0xff]
        %v366 = vld [vmem:[%s293 + $0x1e8] sm:$0xff]
        %v367 = vld [vmem:[%s293 + $0x1f0] sm:$0xff]
        %v368 = vld [vmem:[%s293 + $0x1f8] sm:$0xff]
        %v369 = vpack.c.bf16 %v306, %v305
        %v370 = vpack.c.bf16 %v308, %v307
        %v371 = vpack.c.bf16 %v310, %v309
        %v372 = vpack.c.bf16 %v312, %v311
        %v373 = vpack.c.bf16 %v314, %v313
        %v374 = vpack.c.bf16 %v316, %v315
        %v375 = vpack.c.bf16 %v318, %v317
        %v376 = vpack.c.bf16 %v320, %v319
        %v377 = vpack.c.bf16 %v322, %v321
        %v378 = vpack.c.bf16 %v324, %v323
        %v379 = vpack.c.bf16 %v326, %v325
        %v380 = vpack.c.bf16 %v328, %v327
        %v381 = vpack.c.bf16 %v330, %v329
        %v382 = vpack.c.bf16 %v332, %v331
        %v383 = vpack.c.bf16 %v334, %v333
        %v384 = vpack.c.bf16 %v336, %v335
        %v385 = vpack.c.bf16 %v338, %v337
        %v386 = vpack.c.bf16 %v340, %v339
        %v387 = vpack.c.bf16 %v342, %v341
        %v388 = vpack.c.bf16 %v344, %v343
        %v389 = vpack.c.bf16 %v346, %v345
        %v390 = vpack.c.bf16 %v348, %v347
        %v391 = vpack.c.bf16 %v350, %v349
        %v392 = vpack.c.bf16 %v352, %v351
        %v393 = vpack.c.bf16 %v354, %v353
        %v394 = vpack.c.bf16 %v356, %v355
        %v395 = vpack.c.bf16 %v358, %v357
        %v396 = vpack.c.bf16 %v360, %v359
        %v397 = vpack.c.bf16 %v362, %v361
        %v398 = vpack.c.bf16 %v364, %v363
        %v399 = vpack.c.bf16 %v366, %v365
        %v400 = vpack.c.bf16 %v368, %v367
        %v401 = vld [vmem:[%s1] sm:$0xff]
        %v402 = vld [vmem:[%s1 + $0x8] sm:$0xff]
        %v403 = vld [vmem:[%s1 + $0x10] sm:$0xff]
        %v404 = vld [vmem:[%s1 + $0x18] sm:$0xff]
        %v405 = vld [vmem:[%s1 + $0x20] sm:$0xff]
        %v406 = vld [vmem:[%s1 + $0x28] sm:$0xff]
        %v407 = vld [vmem:[%s1 + $0x30] sm:$0xff]
        %v408 = vld [vmem:[%s1 + $0x38] sm:$0xff]
        %v409 = vld [vmem:[%s1 + $0x40] sm:$0xff]
        %v410 = vld [vmem:[%s1 + $0x48] sm:$0xff]
        %v411 = vld [vmem:[%s1 + $0x50] sm:$0xff]
        %v412 = vld [vmem:[%s1 + $0x58] sm:$0xff]
        %v413 = vld [vmem:[%s1 + $0x60] sm:$0x33]
        %v414 = vld [vmem:[%s2] sm:$0x3]
        %v416 = vlaneseq
        %v417 = vshrl.u32 %v416, 7
        %v418 = vsub.s32 0, %v417
        %v419 = vrot.slane %v414, %v418
        %v420 = vlaneseq
        %v421 = vshrl.u32 %v420, 7
        %v422 = vsub.s32 1, %v421
        %v423 = vrot.slane %v414, %v422
        %v439 = vunpack.c.l.b16 %v401
        %v440 = vunpack.c.h.b16 %v401
        %v441 = vunpack.c.l.b16 %v402
        %v442 = vunpack.c.h.b16 %v402
        %v443 = vunpack.c.l.b16 %v403
        %v444 = vunpack.c.h.b16 %v403
        %v445 = vunpack.c.l.b16 %v404
        %v446 = vunpack.c.h.b16 %v404
        %v447 = vunpack.c.l.b16 %v405
        %v448 = vunpack.c.h.b16 %v405
        %v449 = vunpack.c.l.b16 %v406
        %v450 = vunpack.c.h.b16 %v406
        %v451 = vunpack.c.l.b16 %v407
        %v452 = vunpack.c.h.b16 %v407
        %v453 = vunpack.c.l.b16 %v408
        %v454 = vunpack.c.h.b16 %v408
        %v455 = vunpack.c.l.b16 %v409
        %v456 = vunpack.c.h.b16 %v409
        %v457 = vunpack.c.l.b16 %v410
        %v458 = vunpack.c.h.b16 %v410
        %v459 = vunpack.c.l.b16 %v411
        %v460 = vunpack.c.h.b16 %v411
        %v461 = vunpack.c.l.b16 %v412
        %v462 = vunpack.c.h.b16 %v412
        %v463 = vunpack.c.l.b16 %v413
        %v464 = vunpack.c.h.b16 %v413
        %v465 = vpack.c.b16 %v441, %v439
        %v466 = vpack.c.b16 %v442, %v440
        %v467 = vpack.c.b16 %v445, %v443
        %v468 = vpack.c.b16 %v446, %v444
        %v469 = vpack.c.b16 %v449, %v447
        %v470 = vpack.c.b16 %v450, %v448
        %v471 = vpack.c.b16 %v453, %v451
        %v472 = vpack.c.b16 %v454, %v452
        %v473 = vpack.c.b16 %v457, %v455
        %v474 = vpack.c.b16 %v458, %v456
        %v475 = vpack.c.b16 %v461, %v459
        %v476 = vpack.c.b16 %v462, %v460
        %v477 = vpack.c.b16 %v463, %v463
        %v478 = vpack.c.b16 %v464, %v464
        %vm491 = vcmask 818176
        %v493 = vsel %vm491, %v369, 0
        %v496 = vsel %vm491, %v370, 0
        %v499 = vsel %vm491, %v371, 0
        %v502 = vsel %vm491, %v372, 0
        %v505 = vsel %vm491, %v373, 0
        %v508 = vsel %vm491, %v374, 0
        %v511 = vsel %vm491, %v375, 0
        %v514 = vsel %vm491, %v376, 0
        %v517 = vsel %vm491, %v377, 0
        %v520 = vsel %vm491, %v378, 0
        %v523 = vsel %vm491, %v379, 0
        %v526 = vsel %vm491, %v380, 0
        %v529 = vsel %vm491, %v381, 0
        %v532 = vsel %vm491, %v382, 0
        %v535 = vsel %vm491, %v383, 0
        %v538 = vsel %vm491, %v384, 0
        %v541 = vsel %vm491, %v385, 0
        %v544 = vsel %vm491, %v386, 0
        %v547 = vsel %vm491, %v387, 0
        %v550 = vsel %vm491, %v388, 0
        %v553 = vsel %vm491, %v389, 0
        %v556 = vsel %vm491, %v390, 0
        %v559 = vsel %vm491, %v391, 0
        %v562 = vsel %vm491, %v392, 0
        %v565 = vsel %vm491, %v393, 0
        %v568 = vsel %vm491, %v394, 0
        %v571 = vsel %vm491, %v395, 0
        %v574 = vsel %vm491, %v396, 0
        %v577 = vsel %vm491, %v397, 0
        %v580 = vsel %vm491, %v398, 0
        %v583 = vsel %vm491, %v399, 0
        %v586 = vsel %vm491, %v400, 0
        %vm588 = vcmask 1041408
        %v590 = vsel %vm588, %v477, 0
        %v593 = vsel %vm588, %v478, 0
        %595 = vmatprep.subr.bf16.mxu0 0
        %596 = vmatpush1.bf16.msra.mxu0 0
        %597 = vmatprep.subr.bf16.mxu0 %v593
        %598 = vmatpush1.bf16.msra.mxu0 %v590
        %599 = vmatprep.subr.bf16.mxu0 %v476
        %600 = vmatpush1.bf16.msra.mxu0 %v475
        %601 = vmatprep.subr.bf16.mxu0 %v474
        %602 = vmatpush1.bf16.msra.mxu0 %v473
        %603 = vmatprep.subr.bf16.mxu0 %v472
        %604 = vmatpush1.bf16.msra.mxu0 %v471
        %605 = vmatprep.subr.bf16.mxu0 %v470
        %606 = vmatpush1.bf16.msra.mxu0 %v469
        %607 = vmatprep.subr.bf16.mxu0 %v468
        %608 = vmatpush1.bf16.msra.mxu0 %v467
        %609 = vmatprep.subr.bf16.mxu0 %v466
        %610 = vmatpush1.bf16.msra.mxu0 %v465
        %611 = vmatprep.subr.bf16.mxu0 0
        %612 = vmatpush2.bf16.msra.mxu0 0
        %613 = vmatprep.subr.bf16.mxu0 0
        %614 = vmatpush2.bf16.msra.mxu0 0
        %615 = vmatprep.subr.bf16.mxu0 0
        %616 = vmatpush2.bf16.msra.mxu0 0
        %617 = vmatprep.subr.bf16.mxu0 0
        %618 = vmatpush2.bf16.msra.mxu0 0
        %619 = vmatprep.subr.bf16.mxu0 0
        %620 = vmatpush2.bf16.msra.mxu0 0
        %621 = vmatprep.subr.bf16.mxu0 0
        %622 = vmatpush2.bf16.msra.mxu0 0
        %623 = vmatprep.subr.bf16.mxu0 0
        %624 = vmatpush2.bf16.msra.mxu0 0
        %625 = vmatprep.subr.bf16.mxu0 0
        %626 = vmatpush2.bf16.msra.mxu0 0
        %627 = vmatprep.mubr.bf16.mxu0 0
        %628 = vmatmul.mubr.bf16.gmra.mxu0 %v493
        %v629 = vpop.f32.mrf.mxu0
        %v630 = vadd.f32 %v419, %v629
        %v631 = vpop.f32.mrf.mxu0
        %v632 = vadd.f32 %v423, %v631
        %v633 = vpop.f32.mrf.mxu0
        %v634 = vadd.f32 %v419, %v633
        %v635 = vpop.f32.mrf.mxu0
        %v636 = vadd.f32 %v423, %v635
        %637 = vmatprep.mubr.bf16.mxu0 0
        %638 = vmatmul.mubr.bf16.gmra.mxu0 %v496
        %v639 = vpop.f32.mrf.mxu0
        %v640 = vadd.f32 %v419, %v639
        %v641 = vpop.f32.mrf.mxu0
        %v642 = vadd.f32 %v423, %v641
        %v643 = vpop.f32.mrf.mxu0
        %v644 = vadd.f32 %v419, %v643
        %v645 = vpop.f32.mrf.mxu0
        %v646 = vadd.f32 %v423, %v645
        %647 = vmatprep.mubr.bf16.mxu0 0
        %648 = vmatmul.mubr.bf16.gmra.mxu0 %v499
        %v649 = vpop.f32.mrf.mxu0
        %v650 = vadd.f32 %v419, %v649
        %v651 = vpop.f32.mrf.mxu0
        %v652 = vadd.f32 %v423, %v651
        %v653 = vpop.f32.mrf.mxu0
        %v654 = vadd.f32 %v419, %v653
        %v655 = vpop.f32.mrf.mxu0
        %v656 = vadd.f32 %v423, %v655
        %657 = vmatprep.mubr.bf16.mxu0 0
        %658 = vmatmul.mubr.bf16.gmra.mxu0 %v502
        %v659 = vpop.f32.mrf.mxu0
        %v660 = vadd.f32 %v419, %v659
        %v661 = vpop.f32.mrf.mxu0
        %v662 = vadd.f32 %v423, %v661
        %v663 = vpop.f32.mrf.mxu0
        %v664 = vadd.f32 %v419, %v663
        %v665 = vpop.f32.mrf.mxu0
        %v666 = vadd.f32 %v423, %v665
        %667 = vmatprep.mubr.bf16.mxu0 0
        %668 = vmatmul.mubr.bf16.gmra.mxu0 %v505
        %v669 = vpop.f32.mrf.mxu0
        %v670 = vadd.f32 %v419, %v669
        %v671 = vpop.f32.mrf.mxu0
        %v672 = vadd.f32 %v423, %v671
        %v673 = vpop.f32.mrf.mxu0
        %v674 = vadd.f32 %v419, %v673
        %v675 = vpop.f32.mrf.mxu0
        %v676 = vadd.f32 %v423, %v675
        %677 = vmatprep.mubr.bf16.mxu0 0
        %678 = vmatmul.mubr.bf16.gmra.mxu0 %v508
        %v679 = vpop.f32.mrf.mxu0
        %v680 = vadd.f32 %v419, %v679
        %v681 = vpop.f32.mrf.mxu0
        %v682 = vadd.f32 %v423, %v681
        %v683 = vpop.f32.mrf.mxu0
        %v684 = vadd.f32 %v419, %v683
        %v685 = vpop.f32.mrf.mxu0
        %v686 = vadd.f32 %v423, %v685
        %687 = vmatprep.mubr.bf16.mxu0 0
        %688 = vmatmul.mubr.bf16.gmra.mxu0 %v511
        %v689 = vpop.f32.mrf.mxu0
        %v690 = vadd.f32 %v419, %v689
        %v691 = vpop.f32.mrf.mxu0
        %v692 = vadd.f32 %v423, %v691
        %v693 = vpop.f32.mrf.mxu0
        %v694 = vadd.f32 %v419, %v693
        %v695 = vpop.f32.mrf.mxu0
        %v696 = vadd.f32 %v423, %v695
        %697 = vmatprep.mubr.bf16.mxu0 0
        %698 = vmatmul.mubr.bf16.gmra.mxu0 %v514
        %v699 = vpop.f32.mrf.mxu0
        %v700 = vadd.f32 %v419, %v699
        %v701 = vpop.f32.mrf.mxu0
        %v702 = vadd.f32 %v423, %v701
        %v703 = vpop.f32.mrf.mxu0
        %v704 = vadd.f32 %v419, %v703
        %v705 = vpop.f32.mrf.mxu0
        %v706 = vadd.f32 %v423, %v705
        %707 = vmatprep.mubr.bf16.mxu0 0
        %708 = vmatmul.mubr.bf16.gmra.mxu0 %v517
        %v709 = vpop.f32.mrf.mxu0
        %v710 = vadd.f32 %v419, %v709
        %v711 = vpop.f32.mrf.mxu0
        %v712 = vadd.f32 %v423, %v711
        %v713 = vpop.f32.mrf.mxu0
        %v714 = vadd.f32 %v419, %v713
        %v715 = vpop.f32.mrf.mxu0
        %v716 = vadd.f32 %v423, %v715
        %717 = vmatprep.mubr.bf16.mxu0 0
        %718 = vmatmul.mubr.bf16.gmra.mxu0 %v520
        %v719 = vpop.f32.mrf.mxu0
        %v720 = vadd.f32 %v419, %v719
        %v721 = vpop.f32.mrf.mxu0
        %v722 = vadd.f32 %v423, %v721
        %v723 = vpop.f32.mrf.mxu0
        %v724 = vadd.f32 %v419, %v723
        %v725 = vpop.f32.mrf.mxu0
        %v726 = vadd.f32 %v423, %v725
        %727 = vmatprep.mubr.bf16.mxu0 0
        %728 = vmatmul.mubr.bf16.gmra.mxu0 %v523
        %v729 = vpop.f32.mrf.mxu0
        %v730 = vadd.f32 %v419, %v729
        %v731 = vpop.f32.mrf.mxu0
        %v732 = vadd.f32 %v423, %v731
        %v733 = vpop.f32.mrf.mxu0
        %v734 = vadd.f32 %v419, %v733
        %v735 = vpop.f32.mrf.mxu0
        %v736 = vadd.f32 %v423, %v735
        %737 = vmatprep.mubr.bf16.mxu0 0
        %738 = vmatmul.mubr.bf16.gmra.mxu0 %v526
        %v739 = vpop.f32.mrf.mxu0
        %v740 = vadd.f32 %v419, %v739
        %v741 = vpop.f32.mrf.mxu0
        %v742 = vadd.f32 %v423, %v741
        %v743 = vpop.f32.mrf.mxu0
        %v744 = vadd.f32 %v419, %v743
        %v745 = vpop.f32.mrf.mxu0
        %v746 = vadd.f32 %v423, %v745
        %747 = vmatprep.mubr.bf16.mxu0 0
        %748 = vmatmul.mubr.bf16.gmra.mxu0 %v529
        %v749 = vpop.f32.mrf.mxu0
        %v750 = vadd.f32 %v419, %v749
        %v751 = vpop.f32.mrf.mxu0
        %v752 = vadd.f32 %v423, %v751
        %v753 = vpop.f32.mrf.mxu0
        %v754 = vadd.f32 %v419, %v753
        %v755 = vpop.f32.mrf.mxu0
        %v756 = vadd.f32 %v423, %v755
        %757 = vmatprep.mubr.bf16.mxu0 0
        %758 = vmatmul.mubr.bf16.gmra.mxu0 %v532
        %v759 = vpop.f32.mrf.mxu0
        %v760 = vadd.f32 %v419, %v759
        %v761 = vpop.f32.mrf.mxu0
        %v762 = vadd.f32 %v423, %v761
        %v763 = vpop.f32.mrf.mxu0
        %v764 = vadd.f32 %v419, %v763
        %v765 = vpop.f32.mrf.mxu0
        %v766 = vadd.f32 %v423, %v765
        %767 = vmatprep.mubr.bf16.mxu0 0
        %768 = vmatmul.mubr.bf16.gmra.mxu0 %v535
        %v769 = vpop.f32.mrf.mxu0
        %v770 = vadd.f32 %v419, %v769
        %v771 = vpop.f32.mrf.mxu0
        %v772 = vadd.f32 %v423, %v771
        %v773 = vpop.f32.mrf.mxu0
        %v774 = vadd.f32 %v419, %v773
        %v775 = vpop.f32.mrf.mxu0
        %v776 = vadd.f32 %v423, %v775
        %777 = vmatprep.mubr.bf16.mxu0 0
        %778 = vmatmul.mubr.bf16.gmra.mxu0 %v538
        %v779 = vpop.f32.mrf.mxu0
        %v780 = vadd.f32 %v419, %v779
        %v781 = vpop.f32.mrf.mxu0
        %v782 = vadd.f32 %v423, %v781
        %v783 = vpop.f32.mrf.mxu0
        %v784 = vadd.f32 %v419, %v783
        %v785 = vpop.f32.mrf.mxu0
        %v786 = vadd.f32 %v423, %v785
        %787 = vmatprep.mubr.bf16.mxu0 0
        %788 = vmatmul.mubr.bf16.gmra.mxu0 %v541
        %v789 = vpop.f32.mrf.mxu0
        %v790 = vadd.f32 %v419, %v789
        %v791 = vpop.f32.mrf.mxu0
        %v792 = vadd.f32 %v423, %v791
        %v793 = vpop.f32.mrf.mxu0
        %v794 = vadd.f32 %v419, %v793
        %v795 = vpop.f32.mrf.mxu0
        %v796 = vadd.f32 %v423, %v795
        %797 = vmatprep.mubr.bf16.mxu0 0
        %798 = vmatmul.mubr.bf16.gmra.mxu0 %v544
        %v799 = vpop.f32.mrf.mxu0
        %v800 = vadd.f32 %v419, %v799
        %v801 = vpop.f32.mrf.mxu0
        %v802 = vadd.f32 %v423, %v801
        %v803 = vpop.f32.mrf.mxu0
        %v804 = vadd.f32 %v419, %v803
        %v805 = vpop.f32.mrf.mxu0
        %v806 = vadd.f32 %v423, %v805
        %807 = vmatprep.mubr.bf16.mxu0 0
        %808 = vmatmul.mubr.bf16.gmra.mxu0 %v547
        %v809 = vpop.f32.mrf.mxu0
        %v810 = vadd.f32 %v419, %v809
        %v811 = vpop.f32.mrf.mxu0
        %v812 = vadd.f32 %v423, %v811
        %v813 = vpop.f32.mrf.mxu0
        %v814 = vadd.f32 %v419, %v813
        %v815 = vpop.f32.mrf.mxu0
        %v816 = vadd.f32 %v423, %v815
        %817 = vmatprep.mubr.bf16.mxu0 0
        %818 = vmatmul.mubr.bf16.gmra.mxu0 %v550
        %v819 = vpop.f32.mrf.mxu0
        %v820 = vadd.f32 %v419, %v819
        %v821 = vpop.f32.mrf.mxu0
        %v822 = vadd.f32 %v423, %v821
        %v823 = vpop.f32.mrf.mxu0
        %v824 = vadd.f32 %v419, %v823
        %v825 = vpop.f32.mrf.mxu0
        %v826 = vadd.f32 %v423, %v825
        %827 = vmatprep.mubr.bf16.mxu0 0
        %828 = vmatmul.mubr.bf16.gmra.mxu0 %v553
        %v829 = vpop.f32.mrf.mxu0
        %v830 = vadd.f32 %v419, %v829
        %v831 = vpop.f32.mrf.mxu0
        %v832 = vadd.f32 %v423, %v831
        %v833 = vpop.f32.mrf.mxu0
        %v834 = vadd.f32 %v419, %v833
        %v835 = vpop.f32.mrf.mxu0
        %v836 = vadd.f32 %v423, %v835
        %837 = vmatprep.mubr.bf16.mxu0 0
        %838 = vmatmul.mubr.bf16.gmra.mxu0 %v556
        %v839 = vpop.f32.mrf.mxu0
        %v840 = vadd.f32 %v419, %v839
        %v841 = vpop.f32.mrf.mxu0
        %v842 = vadd.f32 %v423, %v841
        %v843 = vpop.f32.mrf.mxu0
        %v844 = vadd.f32 %v419, %v843
        %v845 = vpop.f32.mrf.mxu0
        %v846 = vadd.f32 %v423, %v845
        %847 = vmatprep.mubr.bf16.mxu0 0
        %848 = vmatmul.mubr.bf16.gmra.mxu0 %v559
        %v849 = vpop.f32.mrf.mxu0
        %v850 = vadd.f32 %v419, %v849
        %v851 = vpop.f32.mrf.mxu0
        %v852 = vadd.f32 %v423, %v851
        %v853 = vpop.f32.mrf.mxu0
        %v854 = vadd.f32 %v419, %v853
        %v855 = vpop.f32.mrf.mxu0
        %v856 = vadd.f32 %v423, %v855
        %857 = vmatprep.mubr.bf16.mxu0 0
        %858 = vmatmul.mubr.bf16.gmra.mxu0 %v562
        %v859 = vpop.f32.mrf.mxu0
        %v860 = vadd.f32 %v419, %v859
        %v861 = vpop.f32.mrf.mxu0
        %v862 = vadd.f32 %v423, %v861
        %v863 = vpop.f32.mrf.mxu0
        %v864 = vadd.f32 %v419, %v863
        %v865 = vpop.f32.mrf.mxu0
        %v866 = vadd.f32 %v423, %v865
        %867 = vmatprep.mubr.bf16.mxu0 0
        %868 = vmatmul.mubr.bf16.gmra.mxu0 %v565
        %v869 = vpop.f32.mrf.mxu0
        %v870 = vadd.f32 %v419, %v869
        %v871 = vpop.f32.mrf.mxu0
        %v872 = vadd.f32 %v423, %v871
        %v873 = vpop.f32.mrf.mxu0
        %v874 = vadd.f32 %v419, %v873
        %v875 = vpop.f32.mrf.mxu0
        %v876 = vadd.f32 %v423, %v875
        %877 = vmatprep.mubr.bf16.mxu0 0
        %878 = vmatmul.mubr.bf16.gmra.mxu0 %v568
        %v879 = vpop.f32.mrf.mxu0
        %v880 = vadd.f32 %v419, %v879
        %v881 = vpop.f32.mrf.mxu0
        %v882 = vadd.f32 %v423, %v881
        %v883 = vpop.f32.mrf.mxu0
        %v884 = vadd.f32 %v419, %v883
        %v885 = vpop.f32.mrf.mxu0
        %v886 = vadd.f32 %v423, %v885
        %887 = vmatprep.mubr.bf16.mxu0 0
        %888 = vmatmul.mubr.bf16.gmra.mxu0 %v571
        %v889 = vpop.f32.mrf.mxu0
        %v890 = vadd.f32 %v419, %v889
        %v891 = vpop.f32.mrf.mxu0
        %v892 = vadd.f32 %v423, %v891
        %v893 = vpop.f32.mrf.mxu0
        %v894 = vadd.f32 %v419, %v893
        %v895 = vpop.f32.mrf.mxu0
        %v896 = vadd.f32 %v423, %v895
        %897 = vmatprep.mubr.bf16.mxu0 0
        %898 = vmatmul.mubr.bf16.gmra.mxu0 %v574
        %v899 = vpop.f32.mrf.mxu0
        %v900 = vadd.f32 %v419, %v899
        %v901 = vpop.f32.mrf.mxu0
        %v902 = vadd.f32 %v423, %v901
        %v903 = vpop.f32.mrf.mxu0
        %v904 = vadd.f32 %v419, %v903
        %v905 = vpop.f32.mrf.mxu0
        %v906 = vadd.f32 %v423, %v905
        %907 = vmatprep.mubr.bf16.mxu0 0
        %908 = vmatmul.mubr.bf16.gmra.mxu0 %v577
        %v909 = vpop.f32.mrf.mxu0
        %v910 = vadd.f32 %v419, %v909
        %v911 = vpop.f32.mrf.mxu0
        %v912 = vadd.f32 %v423, %v911
        %v913 = vpop.f32.mrf.mxu0
        %v914 = vadd.f32 %v419, %v913
        %v915 = vpop.f32.mrf.mxu0
        %v916 = vadd.f32 %v423, %v915
        %917 = vmatprep.mubr.bf16.mxu0 0
        %918 = vmatmul.mubr.bf16.gmra.mxu0 %v580
        %v919 = vpop.f32.mrf.mxu0
        %v920 = vadd.f32 %v419, %v919
        %v921 = vpop.f32.mrf.mxu0
        %v922 = vadd.f32 %v423, %v921
        %v923 = vpop.f32.mrf.mxu0
        %v924 = vadd.f32 %v419, %v923
        %v925 = vpop.f32.mrf.mxu0
        %v926 = vadd.f32 %v423, %v925
        %927 = vmatprep.mubr.bf16.mxu0 0
        %928 = vmatmul.mubr.bf16.gmra.mxu0 %v583
        %v929 = vpop.f32.mrf.mxu0
        %v930 = vadd.f32 %v419, %v929
        %v931 = vpop.f32.mrf.mxu0
        %v932 = vadd.f32 %v423, %v931
        %v933 = vpop.f32.mrf.mxu0
        %v934 = vadd.f32 %v419, %v933
        %v935 = vpop.f32.mrf.mxu0
        %v936 = vadd.f32 %v423, %v935
        %937 = vmatprep.mubr.bf16.mxu0 0
        %938 = vmatmul.mubr.bf16.gmra.mxu0 %v586
        %v939 = vpop.f32.mrf.mxu0
        %v940 = vadd.f32 %v419, %v939
        %v941 = vpop.f32.mrf.mxu0
        %v942 = vadd.f32 %v423, %v941
        %v943 = vpop.f32.mrf.mxu0
        %v944 = vadd.f32 %v419, %v943
        %v945 = vpop.f32.mrf.mxu0
        %v946 = vadd.f32 %v423, %v945
        %947 = vdwg.mxu0
        %v948 = vmax.f32 %v630, 0.0
        %v949 = vmax.f32 %v632, 0.0
        %v950 = vmax.f32 %v634, 0.0
        %v951 = vmax.f32 %v636, 0.0
        %v952 = vmax.f32 %v640, 0.0
        %v953 = vmax.f32 %v642, 0.0
        %v954 = vmax.f32 %v644, 0.0
        %v955 = vmax.f32 %v646, 0.0
        %v956 = vmax.f32 %v650, 0.0
        %v957 = vmax.f32 %v652, 0.0
        %v958 = vmax.f32 %v654, 0.0
        %v959 = vmax.f32 %v656, 0.0
        %v960 = vmax.f32 %v660, 0.0
        %v961 = vmax.f32 %v662, 0.0
        %v962 = vmax.f32 %v664, 0.0
        %v963 = vmax.f32 %v666, 0.0
        %v964 = vmax.f32 %v670, 0.0
        %v965 = vmax.f32 %v672, 0.0
        %v966 = vmax.f32 %v674, 0.0
        %v967 = vmax.f32 %v676, 0.0
        %v968 = vmax.f32 %v680, 0.0
        %v969 = vmax.f32 %v682, 0.0
        %v970 = vmax.f32 %v684, 0.0
        %v971 = vmax.f32 %v686, 0.0
        %v972 = vmax.f32 %v690, 0.0
        %v973 = vmax.f32 %v692, 0.0
        %v974 = vmax.f32 %v694, 0.0
        %v975 = vmax.f32 %v696, 0.0
        %v976 = vmax.f32 %v700, 0.0
        %v977 = vmax.f32 %v702, 0.0
        %v978 = vmax.f32 %v704, 0.0
        %v979 = vmax.f32 %v706, 0.0
        %v980 = vmax.f32 %v710, 0.0
        %v981 = vmax.f32 %v712, 0.0
        %v982 = vmax.f32 %v714, 0.0
        %v983 = vmax.f32 %v716, 0.0
        %v984 = vmax.f32 %v720, 0.0
        %v985 = vmax.f32 %v722, 0.0
        %v986 = vmax.f32 %v724, 0.0
        %v987 = vmax.f32 %v726, 0.0
        %v988 = vmax.f32 %v730, 0.0
        %v989 = vmax.f32 %v732, 0.0
        %v990 = vmax.f32 %v734, 0.0
        %v991 = vmax.f32 %v736, 0.0
        %v992 = vmax.f32 %v740, 0.0
        %v993 = vmax.f32 %v742, 0.0
        %v994 = vmax.f32 %v744, 0.0
        %v995 = vmax.f32 %v746, 0.0
        %v996 = vmax.f32 %v750, 0.0
        %v997 = vmax.f32 %v752, 0.0
        %v998 = vmax.f32 %v754, 0.0
        %v999 = vmax.f32 %v756, 0.0
        %v1000 = vmax.f32 %v760, 0.0
        %v1001 = vmax.f32 %v762, 0.0
        %v1002 = vmax.f32 %v764, 0.0
        %v1003 = vmax.f32 %v766, 0.0
        %v1004 = vmax.f32 %v770, 0.0
        %v1005 = vmax.f32 %v772, 0.0
        %v1006 = vmax.f32 %v774, 0.0
        %v1007 = vmax.f32 %v776, 0.0
        %v1008 = vmax.f32 %v780, 0.0
        %v1009 = vmax.f32 %v782, 0.0
        %v1010 = vmax.f32 %v784, 0.0
        %v1011 = vmax.f32 %v786, 0.0
        %v1012 = vmax.f32 %v790, 0.0
        %v1013 = vmax.f32 %v792, 0.0
        %v1014 = vmax.f32 %v794, 0.0
        %v1015 = vmax.f32 %v796, 0.0
        %v1016 = vmax.f32 %v800, 0.0
        %v1017 = vmax.f32 %v802, 0.0
        %v1018 = vmax.f32 %v804, 0.0
        %v1019 = vmax.f32 %v806, 0.0
        %v1020 = vmax.f32 %v810, 0.0
        %v1021 = vmax.f32 %v812, 0.0
        %v1022 = vmax.f32 %v814, 0.0
        %v1023 = vmax.f32 %v816, 0.0
        %v1024 = vmax.f32 %v820, 0.0
        %v1025 = vmax.f32 %v822, 0.0
        %v1026 = vmax.f32 %v824, 0.0
        %v1027 = vmax.f32 %v826, 0.0
        %v1028 = vmax.f32 %v830, 0.0
        %v1029 = vmax.f32 %v832, 0.0
        %v1030 = vmax.f32 %v834, 0.0
        %v1031 = vmax.f32 %v836, 0.0
        %v1032 = vmax.f32 %v840, 0.0
        %v1033 = vmax.f32 %v842, 0.0
        %v1034 = vmax.f32 %v844, 0.0
        %v1035 = vmax.f32 %v846, 0.0
        %v1036 = vmax.f32 %v850, 0.0
        %v1037 = vmax.f32 %v852, 0.0
        %v1038 = vmax.f32 %v854, 0.0
        %v1039 = vmax.f32 %v856, 0.0
        %v1040 = vmax.f32 %v860, 0.0
        %v1041 = vmax.f32 %v862, 0.0
        %v1042 = vmax.f32 %v864, 0.0
        %v1043 = vmax.f32 %v866, 0.0
        %v1044 = vmax.f32 %v870, 0.0
        %v1045 = vmax.f32 %v872, 0.0
        %v1046 = vmax.f32 %v874, 0.0
        %v1047 = vmax.f32 %v876, 0.0
        %v1048 = vmax.f32 %v880, 0.0
        %v1049 = vmax.f32 %v882, 0.0
        %v1050 = vmax.f32 %v884, 0.0
        %v1051 = vmax.f32 %v886, 0.0
        %v1052 = vmax.f32 %v890, 0.0
        %v1053 = vmax.f32 %v892, 0.0
        %v1054 = vmax.f32 %v894, 0.0
        %v1055 = vmax.f32 %v896, 0.0
        %v1056 = vmax.f32 %v900, 0.0
        %v1057 = vmax.f32 %v902, 0.0
        %v1058 = vmax.f32 %v904, 0.0
        %v1059 = vmax.f32 %v906, 0.0
        %v1060 = vmax.f32 %v910, 0.0
        %v1061 = vmax.f32 %v912, 0.0
        %v1062 = vmax.f32 %v914, 0.0
        %v1063 = vmax.f32 %v916, 0.0
        %v1064 = vmax.f32 %v920, 0.0
        %v1065 = vmax.f32 %v922, 0.0
        %v1066 = vmax.f32 %v924, 0.0
        %v1067 = vmax.f32 %v926, 0.0
        %v1068 = vmax.f32 %v930, 0.0
        %v1069 = vmax.f32 %v932, 0.0
        %v1070 = vmax.f32 %v934, 0.0
        %v1071 = vmax.f32 %v936, 0.0
        %v1072 = vmax.f32 %v940, 0.0
        %v1073 = vmax.f32 %v942, 0.0
        %v1074 = vmax.f32 %v944, 0.0
        %v1075 = vmax.f32 %v946, 0.0
        %v1076 = vpack.c.bf16 %v950, %v948
        %v1077 = vpack.c.bf16 %v951, %v949
        %v1078 = vpack.c.bf16 %v954, %v952
        %v1079 = vpack.c.bf16 %v955, %v953
        %v1080 = vpack.c.bf16 %v958, %v956
        %v1081 = vpack.c.bf16 %v959, %v957
        %v1082 = vpack.c.bf16 %v962, %v960
        %v1083 = vpack.c.bf16 %v963, %v961
        %v1084 = vpack.c.bf16 %v966, %v964
        %v1085 = vpack.c.bf16 %v967, %v965
        %v1086 = vpack.c.bf16 %v970, %v968
        %v1087 = vpack.c.bf16 %v971, %v969
        %v1088 = vpack.c.bf16 %v974, %v972
        %v1089 = vpack.c.bf16 %v975, %v973
        %v1090 = vpack.c.bf16 %v978, %v976
        %v1091 = vpack.c.bf16 %v979, %v977
        %v1092 = vpack.c.bf16 %v982, %v980
        %v1093 = vpack.c.bf16 %v983, %v981
        %v1094 = vpack.c.bf16 %v986, %v984
        %v1095 = vpack.c.bf16 %v987, %v985
        %v1096 = vpack.c.bf16 %v990, %v988
        %v1097 = vpack.c.bf16 %v991, %v989
        %v1098 = vpack.c.bf16 %v994, %v992
        %v1099 = vpack.c.bf16 %v995, %v993
        %v1100 = vpack.c.bf16 %v998, %v996
        %v1101 = vpack.c.bf16 %v999, %v997
        %v1102 = vpack.c.bf16 %v1002, %v1000
        %v1103 = vpack.c.bf16 %v1003, %v1001
        %v1104 = vpack.c.bf16 %v1006, %v1004
        %v1105 = vpack.c.bf16 %v1007, %v1005
        %v1106 = vpack.c.bf16 %v1010, %v1008
        %v1107 = vpack.c.bf16 %v1011, %v1009
        %v1108 = vpack.c.bf16 %v1014, %v1012
        %v1109 = vpack.c.bf16 %v1015, %v1013
        %v1110 = vpack.c.bf16 %v1018, %v1016
        %v1111 = vpack.c.bf16 %v1019, %v1017
        %v1112 = vpack.c.bf16 %v1022, %v1020
        %v1113 = vpack.c.bf16 %v1023, %v1021
        %v1114 = vpack.c.bf16 %v1026, %v1024
        %v1115 = vpack.c.bf16 %v1027, %v1025
        %v1116 = vpack.c.bf16 %v1030, %v1028
        %v1117 = vpack.c.bf16 %v1031, %v1029
        %v1118 = vpack.c.bf16 %v1034, %v1032
        %v1119 = vpack.c.bf16 %v1035, %v1033
        %v1120 = vpack.c.bf16 %v1038, %v1036
        %v1121 = vpack.c.bf16 %v1039, %v1037
        %v1122 = vpack.c.bf16 %v1042, %v1040
        %v1123 = vpack.c.bf16 %v1043, %v1041
        %v1124 = vpack.c.bf16 %v1046, %v1044
        %v1125 = vpack.c.bf16 %v1047, %v1045
        %v1126 = vpack.c.bf16 %v1050, %v1048
        %v1127 = vpack.c.bf16 %v1051, %v1049
        %v1128 = vpack.c.bf16 %v1054, %v1052
        %v1129 = vpack.c.bf16 %v1055, %v1053
        %v1130 = vpack.c.bf16 %v1058, %v1056
        %v1131 = vpack.c.bf16 %v1059, %v1057
        %v1132 = vpack.c.bf16 %v1062, %v1060
        %v1133 = vpack.c.bf16 %v1063, %v1061
        %v1134 = vpack.c.bf16 %v1066, %v1064
        %v1135 = vpack.c.bf16 %v1067, %v1065
        %v1136 = vpack.c.bf16 %v1070, %v1068
        %v1137 = vpack.c.bf16 %v1071, %v1069
        %v1138 = vpack.c.bf16 %v1074, %v1072
        %v1139 = vpack.c.bf16 %v1075, %v1073
        %v1140 = vld [vmem:[%s3] sm:$0xff]
        %v1141 = vld [vmem:[%s3 + $0x8] sm:$0xff]
        %v1142 = vld [vmem:[%s3 + $0x10] sm:$0xff]
        %v1143 = vld [vmem:[%s3 + $0x18] sm:$0xff]
        %v1144 = vld [vmem:[%s3 + $0x20] sm:$0xff]
        %v1145 = vld [vmem:[%s3 + $0x28] sm:$0xff]
        %v1146 = vld [vmem:[%s3 + $0x30] sm:$0xff]
        %v1147 = vld [vmem:[%s3 + $0x38] sm:$0xff]
        %v1148 = vld [vmem:[%s3 + $0x40] sm:$0xff]
        %v1149 = vld [vmem:[%s3 + $0x48] sm:$0xff]
        %v1150 = vld [vmem:[%s3 + $0x50] sm:$0xff]
        %v1151 = vld [vmem:[%s3 + $0x58] sm:$0xff]
        %v1152 = vld [vmem:[%s3 + $0x60] sm:$0xff]
        %v1153 = vld [vmem:[%s3 + $0x68] sm:$0xff]
        %v1154 = vld [vmem:[%s3 + $0x70] sm:$0xff]
        %v1155 = vld [vmem:[%s3 + $0x78] sm:$0xff]
        %v1156 = vld [vmem:[%s3 + $0x80] sm:$0xff]
        %v1157 = vld [vmem:[%s3 + $0x88] sm:$0xff]
        %v1158 = vld [vmem:[%s3 + $0x90] sm:$0xff]
        %v1159 = vld [vmem:[%s3 + $0x98] sm:$0xff]
        %v1160 = vld [vmem:[%s3 + $0xa0] sm:$0xff]
        %v1161 = vld [vmem:[%s3 + $0xa8] sm:$0xff]
        %v1162 = vld [vmem:[%s3 + $0xb0] sm:$0xff]
        %v1163 = vld [vmem:[%s3 + $0xb8] sm:$0xff]
        %v1164 = vld [vmem:[%s3 + $0xc0] sm:$0xff]
        %v1165 = vld [vmem:[%s3 + $0xc8] sm:$0xff]
        %v1166 = vld [vmem:[%s3 + $0xd0] sm:$0xff]
        %v1167 = vld [vmem:[%s3 + $0xd8] sm:$0xff]
        %v1168 = vld [vmem:[%s3 + $0xe0] sm:$0xff]
        %v1169 = vld [vmem:[%s3 + $0xe8] sm:$0xff]
        %v1170 = vld [vmem:[%s3 + $0xf0] sm:$0xff]
        %v1171 = vld [vmem:[%s3 + $0xf8] sm:$0xff]
        %v1172 = vld [vmem:[%s4] sm:$0x3]
        %v1174 = vlaneseq
        %v1175 = vshrl.u32 %v1174, 7
        %v1176 = vsub.s32 0, %v1175
        %v1177 = vrot.slane %v1172, %v1176
        %v1178 = vlaneseq
        %v1179 = vshrl.u32 %v1178, 7
        %v1180 = vsub.s32 1, %v1179
        %v1181 = vrot.slane %v1172, %v1180
        %v1216 = vunpack.c.l.b16 %v1140
        %v1217 = vunpack.c.h.b16 %v1140
        %v1218 = vunpack.c.l.b16 %v1141
        %v1219 = vunpack.c.h.b16 %v1141
        %v1220 = vunpack.c.l.b16 %v1142
        %v1221 = vunpack.c.h.b16 %v1142
        %v1222 = vunpack.c.l.b16 %v1143
        %v1223 = vunpack.c.h.b16 %v1143
        %v1224 = vunpack.c.l.b16 %v1144
        %v1225 = vunpack.c.h.b16 %v1144
        %v1226 = vunpack.c.l.b16 %v1145
        %v1227 = vunpack.c.h.b16 %v1145
        %v1228 = vunpack.c.l.b16 %v1146
        %v1229 = vunpack.c.h.b16 %v1146
        %v1230 = vunpack.c.l.b16 %v1147
        %v1231 = vunpack.c.h.b16 %v1147
        %v1232 = vunpack.c.l.b16 %v1148
        %v1233 = vunpack.c.h.b16 %v1148
        %v1234 = vunpack.c.l.b16 %v1149
        %v1235 = vunpack.c.h.b16 %v1149
        %v1236 = vunpack.c.l.b16 %v1150
        %v1237 = vunpack.c.h.b16 %v1150
        %v1238 = vunpack.c.l.b16 %v1151
        %v1239 = vunpack.c.h.b16 %v1151
        %v1240 = vunpack.c.l.b16 %v1152
        %v1241 = vunpack.c.h.b16 %v1152
        %v1242 = vunpack.c.l.b16 %v1153
        %v1243 = vunpack.c.h.b16 %v1153
        %v1244 = vunpack.c.l.b16 %v1154
        %v1245 = vunpack.c.h.b16 %v1154
        %v1246 = vunpack.c.l.b16 %v1155
        %v1247 = vunpack.c.h.b16 %v1155
        %v1248 = vunpack.c.l.b16 %v1156
        %v1249 = vunpack.c.h.b16 %v1156
        %v1250 = vunpack.c.l.b16 %v1157
        %v1251 = vunpack.c.h.b16 %v1157
        %v1252 = vunpack.c.l.b16 %v1158
        %v1253 = vunpack.c.h.b16 %v1158
        %v1254 = vunpack.c.l.b16 %v1159
        %v1255 = vunpack.c.h.b16 %v1159
        %v1256 = vunpack.c.l.b16 %v1160
        %v1257 = vunpack.c.h.b16 %v1160
        %v1258 = vunpack.c.l.b16 %v1161
        %v1259 = vunpack.c.h.b16 %v1161
        %v1260 = vunpack.c.l.b16 %v1162
        %v1261 = vunpack.c.h.b16 %v1162
        %v1262 = vunpack.c.l.b16 %v1163
        %v1263 = vunpack.c.h.b16 %v1163
        %v1264 = vunpack.c.l.b16 %v1164
        %v1265 = vunpack.c.h.b16 %v1164
        %v1266 = vunpack.c.l.b16 %v1165
        %v1267 = vunpack.c.h.b16 %v1165
        %v1268 = vunpack.c.l.b16 %v1166
        %v1269 = vunpack.c.h.b16 %v1166
        %v1270 = vunpack.c.l.b16 %v1167
        %v1271 = vunpack.c.h.b16 %v1167
        %v1272 = vunpack.c.l.b16 %v1168
        %v1273 = vunpack.c.h.b16 %v1168
        %v1274 = vunpack.c.l.b16 %v1169
        %v1275 = vunpack.c.h.b16 %v1169
        %v1276 = vunpack.c.l.b16 %v1170
        %v1277 = vunpack.c.h.b16 %v1170
        %v1278 = vunpack.c.l.b16 %v1171
        %v1279 = vunpack.c.h.b16 %v1171
        %v1280 = vpack.c.b16 %v1218, %v1216
        %v1281 = vpack.c.b16 %v1219, %v1217
        %v1282 = vpack.c.b16 %v1222, %v1220
        %v1283 = vpack.c.b16 %v1223, %v1221
        %v1284 = vpack.c.b16 %v1226, %v1224
        %v1285 = vpack.c.b16 %v1227, %v1225
        %v1286 = vpack.c.b16 %v1230, %v1228
        %v1287 = vpack.c.b16 %v1231, %v1229
        %v1288 = vpack.c.b16 %v1234, %v1232
        %v1289 = vpack.c.b16 %v1235, %v1233
        %v1290 = vpack.c.b16 %v1238, %v1236
        %v1291 = vpack.c.b16 %v1239, %v1237
        %v1292 = vpack.c.b16 %v1242, %v1240
        %v1293 = vpack.c.b16 %v1243, %v1241
        %v1294 = vpack.c.b16 %v1246, %v1244
        %v1295 = vpack.c.b16 %v1247, %v1245
        %v1296 = vpack.c.b16 %v1250, %v1248
        %v1297 = vpack.c.b16 %v1251, %v1249
        %v1298 = vpack.c.b16 %v1254, %v1252
        %v1299 = vpack.c.b16 %v1255, %v1253
        %v1300 = vpack.c.b16 %v1258, %v1256
        %v1301 = vpack.c.b16 %v1259, %v1257
        %v1302 = vpack.c.b16 %v1262, %v1260
        %v1303 = vpack.c.b16 %v1263, %v1261
        %v1304 = vpack.c.b16 %v1266, %v1264
        %v1305 = vpack.c.b16 %v1267, %v1265
        %v1306 = vpack.c.b16 %v1270, %v1268
        %v1307 = vpack.c.b16 %v1271, %v1269
        %v1308 = vpack.c.b16 %v1274, %v1272
        %v1309 = vpack.c.b16 %v1275, %v1273
        %v1310 = vpack.c.b16 %v1278, %v1276
        %v1311 = vpack.c.b16 %v1279, %v1277
        %1344 = vmatprep.subr.bf16.mxu0 %v1295
        %1345 = vmatpush1.bf16.msra.mxu0 %v1294
        %1346 = vmatprep.subr.bf16.mxu0 %v1293
        %1347 = vmatpush1.bf16.msra.mxu0 %v1292
        %1348 = vmatprep.subr.bf16.mxu0 %v1291
        %1349 = vmatpush1.bf16.msra.mxu0 %v1290
        %1350 = vmatprep.subr.bf16.mxu0 %v1289
        %1351 = vmatpush1.bf16.msra.mxu0 %v1288
        %1352 = vmatprep.subr.bf16.mxu0 %v1287
        %1353 = vmatpush1.bf16.msra.mxu0 %v1286
        %1354 = vmatprep.subr.bf16.mxu0 %v1285
        %1355 = vmatpush1.bf16.msra.mxu0 %v1284
        %1356 = vmatprep.subr.bf16.mxu0 %v1283
        %1357 = vmatpush1.bf16.msra.mxu0 %v1282
        %1358 = vmatprep.subr.bf16.mxu0 %v1281
        %1359 = vmatpush1.bf16.msra.mxu0 %v1280
        %1360 = vmatprep.subr.bf16.mxu0 %v1311
        %1361 = vmatpush2.bf16.msra.mxu0 %v1310
        %1362 = vmatprep.subr.bf16.mxu0 %v1309
        %1363 = vmatpush2.bf16.msra.mxu0 %v1308
        %1364 = vmatprep.subr.bf16.mxu0 %v1307
        %1365 = vmatpush2.bf16.msra.mxu0 %v1306
        %1366 = vmatprep.subr.bf16.mxu0 %v1305
        %1367 = vmatpush2.bf16.msra.mxu0 %v1304
        %1368 = vmatprep.subr.bf16.mxu0 %v1303
        %1369 = vmatpush2.bf16.msra.mxu0 %v1302
        %1370 = vmatprep.subr.bf16.mxu0 %v1301
        %1371 = vmatpush2.bf16.msra.mxu0 %v1300
        %1372 = vmatprep.subr.bf16.mxu0 %v1299
        %1373 = vmatpush2.bf16.msra.mxu0 %v1298
        %1374 = vmatprep.subr.bf16.mxu0 %v1297
        %1375 = vmatpush2.bf16.msra.mxu0 %v1296
        %1376 = vmatprep.mubr.bf16.mxu0 %v1077
        %1377 = vmatmul.mubr.bf16.gmra.mxu0 %v1076
        %v1378 = vpop.f32.mrf.mxu0
        %v1379 = vadd.f32 %v1177, %v1378
        %v1380 = vpop.f32.mrf.mxu0
        %v1381 = vadd.f32 %v1181, %v1380
        %v1382 = vpop.f32.mrf.mxu0
        %v1383 = vadd.f32 %v1177, %v1382
        %v1384 = vpop.f32.mrf.mxu0
        %v1385 = vadd.f32 %v1181, %v1384
        %1386 = vmatprep.mubr.bf16.mxu0 %v1079
        %1387 = vmatmul.mubr.bf16.gmra.mxu0 %v1078
        %v1388 = vpop.f32.mrf.mxu0
        %v1389 = vadd.f32 %v1177, %v1388
        %v1390 = vpop.f32.mrf.mxu0
        %v1391 = vadd.f32 %v1181, %v1390
        %v1392 = vpop.f32.mrf.mxu0
        %v1393 = vadd.f32 %v1177, %v1392
        %v1394 = vpop.f32.mrf.mxu0
        %v1395 = vadd.f32 %v1181, %v1394
        %1396 = vmatprep.mubr.bf16.mxu0 %v1081
        %1397 = vmatmul.mubr.bf16.gmra.mxu0 %v1080
        %v1398 = vpop.f32.mrf.mxu0
        %v1399 = vadd.f32 %v1177, %v1398
        %v1400 = vpop.f32.mrf.mxu0
        %v1401 = vadd.f32 %v1181, %v1400
        %v1402 = vpop.f32.mrf.mxu0
        %v1403 = vadd.f32 %v1177, %v1402
        %v1404 = vpop.f32.mrf.mxu0
        %v1405 = vadd.f32 %v1181, %v1404
        %1406 = vmatprep.mubr.bf16.mxu0 %v1083
        %1407 = vmatmul.mubr.bf16.gmra.mxu0 %v1082
        %v1408 = vpop.f32.mrf.mxu0
        %v1409 = vadd.f32 %v1177, %v1408
        %v1410 = vpop.f32.mrf.mxu0
        %v1411 = vadd.f32 %v1181, %v1410
        %v1412 = vpop.f32.mrf.mxu0
        %v1413 = vadd.f32 %v1177, %v1412
        %v1414 = vpop.f32.mrf.mxu0
        %v1415 = vadd.f32 %v1181, %v1414
        %1416 = vmatprep.mubr.bf16.mxu0 %v1085
        %1417 = vmatmul.mubr.bf16.gmra.mxu0 %v1084
        %v1418 = vpop.f32.mrf.mxu0
        %v1419 = vadd.f32 %v1177, %v1418
        %v1420 = vpop.f32.mrf.mxu0
        %v1421 = vadd.f32 %v1181, %v1420
        %v1422 = vpop.f32.mrf.mxu0
        %v1423 = vadd.f32 %v1177, %v1422
        %v1424 = vpop.f32.mrf.mxu0
        %v1425 = vadd.f32 %v1181, %v1424
        %1426 = vmatprep.mubr.bf16.mxu0 %v1087
        %1427 = vmatmul.mubr.bf16.gmra.mxu0 %v1086
        %v1428 = vpop.f32.mrf.mxu0
        %v1429 = vadd.f32 %v1177, %v1428
        %v1430 = vpop.f32.mrf.mxu0
        %v1431 = vadd.f32 %v1181, %v1430
        %v1432 = vpop.f32.mrf.mxu0
        %v1433 = vadd.f32 %v1177, %v1432
        %v1434 = vpop.f32.mrf.mxu0
        %v1435 = vadd.f32 %v1181, %v1434
        %1436 = vmatprep.mubr.bf16.mxu0 %v1089
        %1437 = vmatmul.mubr.bf16.gmra.mxu0 %v1088
        %v1438 = vpop.f32.mrf.mxu0
        %v1439 = vadd.f32 %v1177, %v1438
        %v1440 = vpop.f32.mrf.mxu0
        %v1441 = vadd.f32 %v1181, %v1440
        %v1442 = vpop.f32.mrf.mxu0
        %v1443 = vadd.f32 %v1177, %v1442
        %v1444 = vpop.f32.mrf.mxu0
        %v1445 = vadd.f32 %v1181, %v1444
        %1446 = vmatprep.mubr.bf16.mxu0 %v1091
        %1447 = vmatmul.mubr.bf16.gmra.mxu0 %v1090
        %v1448 = vpop.f32.mrf.mxu0
        %v1449 = vadd.f32 %v1177, %v1448
        %v1450 = vpop.f32.mrf.mxu0
        %v1451 = vadd.f32 %v1181, %v1450
        %v1452 = vpop.f32.mrf.mxu0
        %v1453 = vadd.f32 %v1177, %v1452
        %v1454 = vpop.f32.mrf.mxu0
        %v1455 = vadd.f32 %v1181, %v1454
        %1456 = vmatprep.mubr.bf16.mxu0 %v1093
        %1457 = vmatmul.mubr.bf16.gmra.mxu0 %v1092
        %v1458 = vpop.f32.mrf.mxu0
        %v1459 = vadd.f32 %v1177, %v1458
        %v1460 = vpop.f32.mrf.mxu0
        %v1461 = vadd.f32 %v1181, %v1460
        %v1462 = vpop.f32.mrf.mxu0
        %v1463 = vadd.f32 %v1177, %v1462
        %v1464 = vpop.f32.mrf.mxu0
        %v1465 = vadd.f32 %v1181, %v1464
        %1466 = vmatprep.mubr.bf16.mxu0 %v1095
        %1467 = vmatmul.mubr.bf16.gmra.mxu0 %v1094
        %v1468 = vpop.f32.mrf.mxu0
        %v1469 = vadd.f32 %v1177, %v1468
        %v1470 = vpop.f32.mrf.mxu0
        %v1471 = vadd.f32 %v1181, %v1470
        %v1472 = vpop.f32.mrf.mxu0
        %v1473 = vadd.f32 %v1177, %v1472
        %v1474 = vpop.f32.mrf.mxu0
        %v1475 = vadd.f32 %v1181, %v1474
        %1476 = vmatprep.mubr.bf16.mxu0 %v1097
        %1477 = vmatmul.mubr.bf16.gmra.mxu0 %v1096
        %v1478 = vpop.f32.mrf.mxu0
        %v1479 = vadd.f32 %v1177, %v1478
        %v1480 = vpop.f32.mrf.mxu0
        %v1481 = vadd.f32 %v1181, %v1480
        %v1482 = vpop.f32.mrf.mxu0
        %v1483 = vadd.f32 %v1177, %v1482
        %v1484 = vpop.f32.mrf.mxu0
        %v1485 = vadd.f32 %v1181, %v1484
        %1486 = vmatprep.mubr.bf16.mxu0 %v1099
        %1487 = vmatmul.mubr.bf16.gmra.mxu0 %v1098
        %v1488 = vpop.f32.mrf.mxu0
        %v1489 = vadd.f32 %v1177, %v1488
        %v1490 = vpop.f32.mrf.mxu0
        %v1491 = vadd.f32 %v1181, %v1490
        %v1492 = vpop.f32.mrf.mxu0
        %v1493 = vadd.f32 %v1177, %v1492
        %v1494 = vpop.f32.mrf.mxu0
        %v1495 = vadd.f32 %v1181, %v1494
        %1496 = vmatprep.mubr.bf16.mxu0 %v1101
        %1497 = vmatmul.mubr.bf16.gmra.mxu0 %v1100
        %v1498 = vpop.f32.mrf.mxu0
        %v1499 = vadd.f32 %v1177, %v1498
        %v1500 = vpop.f32.mrf.mxu0
        %v1501 = vadd.f32 %v1181, %v1500
        %v1502 = vpop.f32.mrf.mxu0
        %v1503 = vadd.f32 %v1177, %v1502
        %v1504 = vpop.f32.mrf.mxu0
        %v1505 = vadd.f32 %v1181, %v1504
        %1506 = vmatprep.mubr.bf16.mxu0 %v1103
        %1507 = vmatmul.mubr.bf16.gmra.mxu0 %v1102
        %v1508 = vpop.f32.mrf.mxu0
        %v1509 = vadd.f32 %v1177, %v1508
        %v1510 = vpop.f32.mrf.mxu0
        %v1511 = vadd.f32 %v1181, %v1510
        %v1512 = vpop.f32.mrf.mxu0
        %v1513 = vadd.f32 %v1177, %v1512
        %v1514 = vpop.f32.mrf.mxu0
        %v1515 = vadd.f32 %v1181, %v1514
        %1516 = vmatprep.mubr.bf16.mxu0 %v1105
        %1517 = vmatmul.mubr.bf16.gmra.mxu0 %v1104
        %v1518 = vpop.f32.mrf.mxu0
        %v1519 = vadd.f32 %v1177, %v1518
        %v1520 = vpop.f32.mrf.mxu0
        %v1521 = vadd.f32 %v1181, %v1520
        %v1522 = vpop.f32.mrf.mxu0
        %v1523 = vadd.f32 %v1177, %v1522
        %v1524 = vpop.f32.mrf.mxu0
        %v1525 = vadd.f32 %v1181, %v1524
        %1526 = vmatprep.mubr.bf16.mxu0 %v1107
        %1527 = vmatmul.mubr.bf16.gmra.mxu0 %v1106
        %v1528 = vpop.f32.mrf.mxu0
        %v1529 = vadd.f32 %v1177, %v1528
        %v1530 = vpop.f32.mrf.mxu0
        %v1531 = vadd.f32 %v1181, %v1530
        %v1532 = vpop.f32.mrf.mxu0
        %v1533 = vadd.f32 %v1177, %v1532
        %v1534 = vpop.f32.mrf.mxu0
        %v1535 = vadd.f32 %v1181, %v1534
        %1536 = vmatprep.mubr.bf16.mxu0 %v1109
        %1537 = vmatmul.mubr.bf16.gmra.mxu0 %v1108
        %v1538 = vpop.f32.mrf.mxu0
        %v1539 = vadd.f32 %v1177, %v1538
        %v1540 = vpop.f32.mrf.mxu0
        %v1541 = vadd.f32 %v1181, %v1540
        %v1542 = vpop.f32.mrf.mxu0
        %v1543 = vadd.f32 %v1177, %v1542
        %v1544 = vpop.f32.mrf.mxu0
        %v1545 = vadd.f32 %v1181, %v1544
        %1546 = vmatprep.mubr.bf16.mxu0 %v1111
        %1547 = vmatmul.mubr.bf16.gmra.mxu0 %v1110
        %v1548 = vpop.f32.mrf.mxu0
        %v1549 = vadd.f32 %v1177, %v1548
        %v1550 = vpop.f32.mrf.mxu0
        %v1551 = vadd.f32 %v1181, %v1550
        %v1552 = vpop.f32.mrf.mxu0
        %v1553 = vadd.f32 %v1177, %v1552
        %v1554 = vpop.f32.mrf.mxu0
        %v1555 = vadd.f32 %v1181, %v1554
        %1556 = vmatprep.mubr.bf16.mxu0 %v1113
        %1557 = vmatmul.mubr.bf16.gmra.mxu0 %v1112
        %v1558 = vpop.f32.mrf.mxu0
        %v1559 = vadd.f32 %v1177, %v1558
        %v1560 = vpop.f32.mrf.mxu0
        %v1561 = vadd.f32 %v1181, %v1560
        %v1562 = vpop.f32.mrf.mxu0
        %v1563 = vadd.f32 %v1177, %v1562
        %v1564 = vpop.f32.mrf.mxu0
        %v1565 = vadd.f32 %v1181, %v1564
        %1566 = vmatprep.mubr.bf16.mxu0 %v1115
        %1567 = vmatmul.mubr.bf16.gmra.mxu0 %v1114
        %v1568 = vpop.f32.mrf.mxu0
        %v1569 = vadd.f32 %v1177, %v1568
        %v1570 = vpop.f32.mrf.mxu0
        %v1571 = vadd.f32 %v1181, %v1570
        %v1572 = vpop.f32.mrf.mxu0
        %v1573 = vadd.f32 %v1177, %v1572
        %v1574 = vpop.f32.mrf.mxu0
        %v1575 = vadd.f32 %v1181, %v1574
        %1576 = vmatprep.mubr.bf16.mxu0 %v1117
        %1577 = vmatmul.mubr.bf16.gmra.mxu0 %v1116
        %v1578 = vpop.f32.mrf.mxu0
        %v1579 = vadd.f32 %v1177, %v1578
        %v1580 = vpop.f32.mrf.mxu0
        %v1581 = vadd.f32 %v1181, %v1580
        %v1582 = vpop.f32.mrf.mxu0
        %v1583 = vadd.f32 %v1177, %v1582
        %v1584 = vpop.f32.mrf.mxu0
        %v1585 = vadd.f32 %v1181, %v1584
        %1586 = vmatprep.mubr.bf16.mxu0 %v1119
        %1587 = vmatmul.mubr.bf16.gmra.mxu0 %v1118
        %v1588 = vpop.f32.mrf.mxu0
        %v1589 = vadd.f32 %v1177, %v1588
        %v1590 = vpop.f32.mrf.mxu0
        %v1591 = vadd.f32 %v1181, %v1590
        %v1592 = vpop.f32.mrf.mxu0
        %v1593 = vadd.f32 %v1177, %v1592
        %v1594 = vpop.f32.mrf.mxu0
        %v1595 = vadd.f32 %v1181, %v1594
        %1596 = vmatprep.mubr.bf16.mxu0 %v1121
        %1597 = vmatmul.mubr.bf16.gmra.mxu0 %v1120
        %v1598 = vpop.f32.mrf.mxu0
        %v1599 = vadd.f32 %v1177, %v1598
        %v1600 = vpop.f32.mrf.mxu0
        %v1601 = vadd.f32 %v1181, %v1600
        %v1602 = vpop.f32.mrf.mxu0
        %v1603 = vadd.f32 %v1177, %v1602
        %v1604 = vpop.f32.mrf.mxu0
        %v1605 = vadd.f32 %v1181, %v1604
        %1606 = vmatprep.mubr.bf16.mxu0 %v1123
        %1607 = vmatmul.mubr.bf16.gmra.mxu0 %v1122
        %v1608 = vpop.f32.mrf.mxu0
        %v1609 = vadd.f32 %v1177, %v1608
        %v1610 = vpop.f32.mrf.mxu0
        %v1611 = vadd.f32 %v1181, %v1610
        %v1612 = vpop.f32.mrf.mxu0
        %v1613 = vadd.f32 %v1177, %v1612
        %v1614 = vpop.f32.mrf.mxu0
        %v1615 = vadd.f32 %v1181, %v1614
        %1616 = vmatprep.mubr.bf16.mxu0 %v1125
        %1617 = vmatmul.mubr.bf16.gmra.mxu0 %v1124
        %v1618 = vpop.f32.mrf.mxu0
        %v1619 = vadd.f32 %v1177, %v1618
        %v1620 = vpop.f32.mrf.mxu0
        %v1621 = vadd.f32 %v1181, %v1620
        %v1622 = vpop.f32.mrf.mxu0
        %v1623 = vadd.f32 %v1177, %v1622
        %v1624 = vpop.f32.mrf.mxu0
        %v1625 = vadd.f32 %v1181, %v1624
        %1626 = vmatprep.mubr.bf16.mxu0 %v1127
        %1627 = vmatmul.mubr.bf16.gmra.mxu0 %v1126
        %v1628 = vpop.f32.mrf.mxu0
        %v1629 = vadd.f32 %v1177, %v1628
        %v1630 = vpop.f32.mrf.mxu0
        %v1631 = vadd.f32 %v1181, %v1630
        %v1632 = vpop.f32.mrf.mxu0
        %v1633 = vadd.f32 %v1177, %v1632
        %v1634 = vpop.f32.mrf.mxu0
        %v1635 = vadd.f32 %v1181, %v1634
        %1636 = vmatprep.mubr.bf16.mxu0 %v1129
        %1637 = vmatmul.mubr.bf16.gmra.mxu0 %v1128
        %v1638 = vpop.f32.mrf.mxu0
        %v1639 = vadd.f32 %v1177, %v1638
        %v1640 = vpop.f32.mrf.mxu0
        %v1641 = vadd.f32 %v1181, %v1640
        %v1642 = vpop.f32.mrf.mxu0
        %v1643 = vadd.f32 %v1177, %v1642
        %v1644 = vpop.f32.mrf.mxu0
        %v1645 = vadd.f32 %v1181, %v1644
        %1646 = vmatprep.mubr.bf16.mxu0 %v1131
        %1647 = vmatmul.mubr.bf16.gmra.mxu0 %v1130
        %v1648 = vpop.f32.mrf.mxu0
        %v1649 = vadd.f32 %v1177, %v1648
        %v1650 = vpop.f32.mrf.mxu0
        %v1651 = vadd.f32 %v1181, %v1650
        %v1652 = vpop.f32.mrf.mxu0
        %v1653 = vadd.f32 %v1177, %v1652
        %v1654 = vpop.f32.mrf.mxu0
        %v1655 = vadd.f32 %v1181, %v1654
        %1656 = vmatprep.mubr.bf16.mxu0 %v1133
        %1657 = vmatmul.mubr.bf16.gmra.mxu0 %v1132
        %v1658 = vpop.f32.mrf.mxu0
        %v1659 = vadd.f32 %v1177, %v1658
        %v1660 = vpop.f32.mrf.mxu0
        %v1661 = vadd.f32 %v1181, %v1660
        %v1662 = vpop.f32.mrf.mxu0
        %v1663 = vadd.f32 %v1177, %v1662
        %v1664 = vpop.f32.mrf.mxu0
        %v1665 = vadd.f32 %v1181, %v1664
        %1666 = vmatprep.mubr.bf16.mxu0 %v1135
        %1667 = vmatmul.mubr.bf16.gmra.mxu0 %v1134
        %v1668 = vpop.f32.mrf.mxu0
        %v1669 = vadd.f32 %v1177, %v1668
        %v1670 = vpop.f32.mrf.mxu0
        %v1671 = vadd.f32 %v1181, %v1670
        %v1672 = vpop.f32.mrf.mxu0
        %v1673 = vadd.f32 %v1177, %v1672
        %v1674 = vpop.f32.mrf.mxu0
        %v1675 = vadd.f32 %v1181, %v1674
        %1676 = vmatprep.mubr.bf16.mxu0 %v1137
        %1677 = vmatmul.mubr.bf16.gmra.mxu0 %v1136
        %v1678 = vpop.f32.mrf.mxu0
        %v1679 = vadd.f32 %v1177, %v1678
        %v1680 = vpop.f32.mrf.mxu0
        %v1681 = vadd.f32 %v1181, %v1680
        %v1682 = vpop.f32.mrf.mxu0
        %v1683 = vadd.f32 %v1177, %v1682
        %v1684 = vpop.f32.mrf.mxu0
        %v1685 = vadd.f32 %v1181, %v1684
        %1686 = vmatprep.mubr.bf16.mxu0 %v1139
        %1687 = vmatmul.mubr.bf16.gmra.mxu0 %v1138
        %v1688 = vpop.f32.mrf.mxu0
        %v1689 = vadd.f32 %v1177, %v1688
        %v1690 = vpop.f32.mrf.mxu0
        %v1691 = vadd.f32 %v1181, %v1690
        %v1692 = vpop.f32.mrf.mxu0
        %v1693 = vadd.f32 %v1177, %v1692
        %v1694 = vpop.f32.mrf.mxu0
        %v1695 = vadd.f32 %v1181, %v1694
        %1696 = vdwg.mxu0
        %v1697 = vmax.f32 %v1379, 0.0
        %v1698 = vmax.f32 %v1381, 0.0
        %v1699 = vmax.f32 %v1383, 0.0
        %v1700 = vmax.f32 %v1385, 0.0
        %v1701 = vmax.f32 %v1389, 0.0
        %v1702 = vmax.f32 %v1391, 0.0
        %v1703 = vmax.f32 %v1393, 0.0
        %v1704 = vmax.f32 %v1395, 0.0
        %v1705 = vmax.f32 %v1399, 0.0
        %v1706 = vmax.f32 %v1401, 0.0
        %v1707 = vmax.f32 %v1403, 0.0
        %v1708 = vmax.f32 %v1405, 0.0
        %v1709 = vmax.f32 %v1409, 0.0
        %v1710 = vmax.f32 %v1411, 0.0
        %v1711 = vmax.f32 %v1413, 0.0
        %v1712 = vmax.f32 %v1415, 0.0
        %v1713 = vmax.f32 %v1419, 0.0
        %v1714 = vmax.f32 %v1421, 0.0
        %v1715 = vmax.f32 %v1423, 0.0
        %v1716 = vmax.f32 %v1425, 0.0
        %v1717 = vmax.f32 %v1429, 0.0
        %v1718 = vmax.f32 %v1431, 0.0
        %v1719 = vmax.f32 %v1433, 0.0
        %v1720 = vmax.f32 %v1435, 0.0
        %v1721 = vmax.f32 %v1439, 0.0
        %v1722 = vmax.f32 %v1441, 0.0
        %v1723 = vmax.f32 %v1443, 0.0
        %v1724 = vmax.f32 %v1445, 0.0
        %v1725 = vmax.f32 %v1449, 0.0
        %v1726 = vmax.f32 %v1451, 0.0
        %v1727 = vmax.f32 %v1453, 0.0
        %v1728 = vmax.f32 %v1455, 0.0
        %v1729 = vmax.f32 %v1459, 0.0
        %v1730 = vmax.f32 %v1461, 0.0
        %v1731 = vmax.f32 %v1463, 0.0
        %v1732 = vmax.f32 %v1465, 0.0
        %v1733 = vmax.f32 %v1469, 0.0
        %v1734 = vmax.f32 %v1471, 0.0
        %v1735 = vmax.f32 %v1473, 0.0
        %v1736 = vmax.f32 %v1475, 0.0
        %v1737 = vmax.f32 %v1479, 0.0
        %v1738 = vmax.f32 %v1481, 0.0
        %v1739 = vmax.f32 %v1483, 0.0
        %v1740 = vmax.f32 %v1485, 0.0
        %v1741 = vmax.f32 %v1489, 0.0
        %v1742 = vmax.f32 %v1491, 0.0
        %v1743 = vmax.f32 %v1493, 0.0
        %v1744 = vmax.f32 %v1495, 0.0
        %v1745 = vmax.f32 %v1499, 0.0
        %v1746 = vmax.f32 %v1501, 0.0
        %v1747 = vmax.f32 %v1503, 0.0
        %v1748 = vmax.f32 %v1505, 0.0
        %v1749 = vmax.f32 %v1509, 0.0
        %v1750 = vmax.f32 %v1511, 0.0
        %v1751 = vmax.f32 %v1513, 0.0
        %v1752 = vmax.f32 %v1515, 0.0
        %v1753 = vmax.f32 %v1519, 0.0
        %v1754 = vmax.f32 %v1521, 0.0
        %v1755 = vmax.f32 %v1523, 0.0
        %v1756 = vmax.f32 %v1525, 0.0
        %v1757 = vmax.f32 %v1529, 0.0
        %v1758 = vmax.f32 %v1531, 0.0
        %v1759 = vmax.f32 %v1533, 0.0
        %v1760 = vmax.f32 %v1535, 0.0
        %v1761 = vmax.f32 %v1539, 0.0
        %v1762 = vmax.f32 %v1541, 0.0
        %v1763 = vmax.f32 %v1543, 0.0
        %v1764 = vmax.f32 %v1545, 0.0
        %v1765 = vmax.f32 %v1549, 0.0
        %v1766 = vmax.f32 %v1551, 0.0
        %v1767 = vmax.f32 %v1553, 0.0
        %v1768 = vmax.f32 %v1555, 0.0
        %v1769 = vmax.f32 %v1559, 0.0
        %v1770 = vmax.f32 %v1561, 0.0
        %v1771 = vmax.f32 %v1563, 0.0
        %v1772 = vmax.f32 %v1565, 0.0
        %v1773 = vmax.f32 %v1569, 0.0
        %v1774 = vmax.f32 %v1571, 0.0
        %v1775 = vmax.f32 %v1573, 0.0
        %v1776 = vmax.f32 %v1575, 0.0
        %v1777 = vmax.f32 %v1579, 0.0
        %v1778 = vmax.f32 %v1581, 0.0
        %v1779 = vmax.f32 %v1583, 0.0
        %v1780 = vmax.f32 %v1585, 0.0
        %v1781 = vmax.f32 %v1589, 0.0
        %v1782 = vmax.f32 %v1591, 0.0
        %v1783 = vmax.f32 %v1593, 0.0
        %v1784 = vmax.f32 %v1595, 0.0
        %v1785 = vmax.f32 %v1599, 0.0
        %v1786 = vmax.f32 %v1601, 0.0
        %v1787 = vmax.f32 %v1603, 0.0
        %v1788 = vmax.f32 %v1605, 0.0
        %v1789 = vmax.f32 %v1609, 0.0
        %v1790 = vmax.f32 %v1611, 0.0
        %v1791 = vmax.f32 %v1613, 0.0
        %v1792 = vmax.f32 %v1615, 0.0
        %v1793 = vmax.f32 %v1619, 0.0
        %v1794 = vmax.f32 %v1621, 0.0
        %v1795 = vmax.f32 %v1623, 0.0
        %v1796 = vmax.f32 %v1625, 0.0
        %v1797 = vmax.f32 %v1629, 0.0
        %v1798 = vmax.f32 %v1631, 0.0
        %v1799 = vmax.f32 %v1633, 0.0
        %v1800 = vmax.f32 %v1635, 0.0
        %v1801 = vmax.f32 %v1639, 0.0
        %v1802 = vmax.f32 %v1641, 0.0
        %v1803 = vmax.f32 %v1643, 0.0
        %v1804 = vmax.f32 %v1645, 0.0
        %v1805 = vmax.f32 %v1649, 0.0
        %v1806 = vmax.f32 %v1651, 0.0
        %v1807 = vmax.f32 %v1653, 0.0
        %v1808 = vmax.f32 %v1655, 0.0
        %v1809 = vmax.f32 %v1659, 0.0
        %v1810 = vmax.f32 %v1661, 0.0
        %v1811 = vmax.f32 %v1663, 0.0
        %v1812 = vmax.f32 %v1665, 0.0
        %v1813 = vmax.f32 %v1669, 0.0
        %v1814 = vmax.f32 %v1671, 0.0
        %v1815 = vmax.f32 %v1673, 0.0
        %v1816 = vmax.f32 %v1675, 0.0
        %v1817 = vmax.f32 %v1679, 0.0
        %v1818 = vmax.f32 %v1681, 0.0
        %v1819 = vmax.f32 %v1683, 0.0
        %v1820 = vmax.f32 %v1685, 0.0
        %v1821 = vmax.f32 %v1689, 0.0
        %v1822 = vmax.f32 %v1691, 0.0
        %v1823 = vmax.f32 %v1693, 0.0
        %v1824 = vmax.f32 %v1695, 0.0
        %v1825 = vpack.c.bf16 %v1699, %v1697
        %v1826 = vpack.c.bf16 %v1700, %v1698
        %v1827 = vpack.c.bf16 %v1703, %v1701
        %v1828 = vpack.c.bf16 %v1704, %v1702
        %v1829 = vpack.c.bf16 %v1707, %v1705
        %v1830 = vpack.c.bf16 %v1708, %v1706
        %v1831 = vpack.c.bf16 %v1711, %v1709
        %v1832 = vpack.c.bf16 %v1712, %v1710
        %v1833 = vpack.c.bf16 %v1715, %v1713
        %v1834 = vpack.c.bf16 %v1716, %v1714
        %v1835 = vpack.c.bf16 %v1719, %v1717
        %v1836 = vpack.c.bf16 %v1720, %v1718
        %v1837 = vpack.c.bf16 %v1723, %v1721
        %v1838 = vpack.c.bf16 %v1724, %v1722
        %v1839 = vpack.c.bf16 %v1727, %v1725
        %v1840 = vpack.c.bf16 %v1728, %v1726
        %v1841 = vpack.c.bf16 %v1731, %v1729
        %v1842 = vpack.c.bf16 %v1732, %v1730
        %v1843 = vpack.c.bf16 %v1735, %v1733
        %v1844 = vpack.c.bf16 %v1736, %v1734
        %v1845 = vpack.c.bf16 %v1739, %v1737
        %v1846 = vpack.c.bf16 %v1740, %v1738
        %v1847 = vpack.c.bf16 %v1743, %v1741
        %v1848 = vpack.c.bf16 %v1744, %v1742
        %v1849 = vpack.c.bf16 %v1747, %v1745
        %v1850 = vpack.c.bf16 %v1748, %v1746
        %v1851 = vpack.c.bf16 %v1751, %v1749
        %v1852 = vpack.c.bf16 %v1752, %v1750
        %v1853 = vpack.c.bf16 %v1755, %v1753
        %v1854 = vpack.c.bf16 %v1756, %v1754
        %v1855 = vpack.c.bf16 %v1759, %v1757
        %v1856 = vpack.c.bf16 %v1760, %v1758
        %v1857 = vpack.c.bf16 %v1763, %v1761
        %v1858 = vpack.c.bf16 %v1764, %v1762
        %v1859 = vpack.c.bf16 %v1767, %v1765
        %v1860 = vpack.c.bf16 %v1768, %v1766
        %v1861 = vpack.c.bf16 %v1771, %v1769
        %v1862 = vpack.c.bf16 %v1772, %v1770
        %v1863 = vpack.c.bf16 %v1775, %v1773
        %v1864 = vpack.c.bf16 %v1776, %v1774
        %v1865 = vpack.c.bf16 %v1779, %v1777
        %v1866 = vpack.c.bf16 %v1780, %v1778
        %v1867 = vpack.c.bf16 %v1783, %v1781
        %v1868 = vpack.c.bf16 %v1784, %v1782
        %v1869 = vpack.c.bf16 %v1787, %v1785
        %v1870 = vpack.c.bf16 %v1788, %v1786
        %v1871 = vpack.c.bf16 %v1791, %v1789
        %v1872 = vpack.c.bf16 %v1792, %v1790
        %v1873 = vpack.c.bf16 %v1795, %v1793
        %v1874 = vpack.c.bf16 %v1796, %v1794
        %v1875 = vpack.c.bf16 %v1799, %v1797
        %v1876 = vpack.c.bf16 %v1800, %v1798
        %v1877 = vpack.c.bf16 %v1803, %v1801
        %v1878 = vpack.c.bf16 %v1804, %v1802
        %v1879 = vpack.c.bf16 %v1807, %v1805
        %v1880 = vpack.c.bf16 %v1808, %v1806
        %v1881 = vpack.c.bf16 %v1811, %v1809
        %v1882 = vpack.c.bf16 %v1812, %v1810
        %v1883 = vpack.c.bf16 %v1815, %v1813
        %v1884 = vpack.c.bf16 %v1816, %v1814
        %v1885 = vpack.c.bf16 %v1819, %v1817
        %v1886 = vpack.c.bf16 %v1820, %v1818
        %v1887 = vpack.c.bf16 %v1823, %v1821
        %v1888 = vpack.c.bf16 %v1824, %v1822
        %v1889 = vld [vmem:[%s5] sm:$0xf]
        %v1890 = vld [vmem:[%s5 + $0x4] sm:$0xf]
        %v1891 = vld [vmem:[%s5 + $0x8] sm:$0xf]
        %v1892 = vld [vmem:[%s5 + $0xc] sm:$0xf]
        %v1893 = vld [vmem:[%s5 + $0x10] sm:$0xf]
        %v1894 = vld [vmem:[%s5 + $0x14] sm:$0xf]
        %v1895 = vld [vmem:[%s5 + $0x18] sm:$0xf]
        %v1896 = vld [vmem:[%s5 + $0x1c] sm:$0xf]
        %v1897 = vld [vmem:[%s5 + $0x20] sm:$0xf]
        %v1898 = vld [vmem:[%s5 + $0x24] sm:$0xf]
        %v1899 = vld [vmem:[%s5 + $0x28] sm:$0xf]
        %v1900 = vld [vmem:[%s5 + $0x2c] sm:$0xf]
        %v1901 = vld [vmem:[%s5 + $0x30] sm:$0xf]
        %v1902 = vld [vmem:[%s5 + $0x34] sm:$0xf]
        %v1903 = vld [vmem:[%s5 + $0x38] sm:$0xf]
        %v1904 = vld [vmem:[%s5 + $0x3c] sm:$0xf]
        %v1905 = vld [vmem:[%s5 + $0x40] sm:$0xf]
        %v1906 = vld [vmem:[%s5 + $0x44] sm:$0xf]
        %v1907 = vld [vmem:[%s5 + $0x48] sm:$0xf]
        %v1908 = vld [vmem:[%s5 + $0x4c] sm:$0xf]
        %v1909 = vld [vmem:[%s5 + $0x50] sm:$0xf]
        %v1910 = vld [vmem:[%s5 + $0x54] sm:$0xf]
        %v1911 = vld [vmem:[%s5 + $0x58] sm:$0xf]
        %v1912 = vld [vmem:[%s5 + $0x5c] sm:$0xf]
        %v1913 = vld [vmem:[%s5 + $0x60] sm:$0xf]
        %v1914 = vld [vmem:[%s5 + $0x64] sm:$0xf]
        %v1915 = vld [vmem:[%s5 + $0x68] sm:$0xf]
        %v1916 = vld [vmem:[%s5 + $0x6c] sm:$0xf]
        %v1917 = vld [vmem:[%s5 + $0x70] sm:$0xf]
        %v1918 = vld [vmem:[%s5 + $0x74] sm:$0xf]
        %v1919 = vld [vmem:[%s5 + $0x78] sm:$0xf]
        %v1920 = vld [vmem:[%s5 + $0x7c] sm:$0xf]
        %v1921 = vld [vmem:[%s6] sm:$0x1]
        %v1923 = vlaneseq
        %v1924 = vshrl.u32 %v1923, 7
        %v1925 = vsub.s32 0, %v1924
        %v1926 = vrot.slane %v1921, %v1925
        %v1960 = vunpack.c.l.b16 %v1889
        %v1961 = vunpack.c.l.b16 %v1890
        %v1962 = vunpack.c.l.b16 %v1891
        %v1963 = vunpack.c.l.b16 %v1892
        %v1964 = vunpack.c.l.b16 %v1893
        %v1965 = vunpack.c.l.b16 %v1894
        %v1966 = vunpack.c.l.b16 %v1895
        %v1967 = vunpack.c.l.b16 %v1896
        %v1968 = vunpack.c.l.b16 %v1897
        %v1969 = vunpack.c.l.b16 %v1898
        %v1970 = vunpack.c.l.b16 %v1899
        %v1971 = vunpack.c.l.b16 %v1900
        %v1972 = vunpack.c.l.b16 %v1901
        %v1973 = vunpack.c.l.b16 %v1902
        %v1974 = vunpack.c.l.b16 %v1903
        %v1975 = vunpack.c.l.b16 %v1904
        %v1976 = vunpack.c.l.b16 %v1905
        %v1977 = vunpack.c.l.b16 %v1906
        %v1978 = vunpack.c.l.b16 %v1907
        %v1979 = vunpack.c.l.b16 %v1908
        %v1980 = vunpack.c.l.b16 %v1909
        %v1981 = vunpack.c.l.b16 %v1910
        %v1982 = vunpack.c.l.b16 %v1911
        %v1983 = vunpack.c.l.b16 %v1912
        %v1984 = vunpack.c.l.b16 %v1913
        %v1985 = vunpack.c.l.b16 %v1914
        %v1986 = vunpack.c.l.b16 %v1915
        %v1987 = vunpack.c.l.b16 %v1916
        %v1988 = vunpack.c.l.b16 %v1917
        %v1989 = vunpack.c.l.b16 %v1918
        %v1990 = vunpack.c.l.b16 %v1919
        %v1991 = vunpack.c.l.b16 %v1920
        %v1992 = vpack.c.b16 %v1961, %v1960
        %v1993 = vpack.c.b16 %v1963, %v1962
        %v1994 = vpack.c.b16 %v1965, %v1964
        %v1995 = vpack.c.b16 %v1967, %v1966
        %v1996 = vpack.c.b16 %v1969, %v1968
        %v1997 = vpack.c.b16 %v1971, %v1970
        %v1998 = vpack.c.b16 %v1973, %v1972
        %v1999 = vpack.c.b16 %v1975, %v1974
        %v2000 = vpack.c.b16 %v1977, %v1976
        %v2001 = vpack.c.b16 %v1979, %v1978
        %v2002 = vpack.c.b16 %v1981, %v1980
        %v2003 = vpack.c.b16 %v1983, %v1982
        %v2004 = vpack.c.b16 %v1985, %v1984
        %v2005 = vpack.c.b16 %v1987, %v1986
        %v2006 = vpack.c.b16 %v1989, %v1988
        %v2007 = vpack.c.b16 %v1991, %v1990
        %2024 = vmatprep.subr.bf16.mxu0 0
        %2025 = vmatpush1.bf16.msra.mxu0 %v1999
        %2026 = vmatprep.subr.bf16.mxu0 0
        %2027 = vmatpush1.bf16.msra.mxu0 %v1998
        %2028 = vmatprep.subr.bf16.mxu0 0
        %2029 = vmatpush1.bf16.msra.mxu0 %v1997
        %2030 = vmatprep.subr.bf16.mxu0 0
        %2031 = vmatpush1.bf16.msra.mxu0 %v1996
        %2032 = vmatprep.subr.bf16.mxu0 0
        %2033 = vmatpush1.bf16.msra.mxu0 %v1995
        %2034 = vmatprep.subr.bf16.mxu0 0
        %2035 = vmatpush1.bf16.msra.mxu0 %v1994
        %2036 = vmatprep.subr.bf16.mxu0 0
        %2037 = vmatpush1.bf16.msra.mxu0 %v1993
        %2038 = vmatprep.subr.bf16.mxu0 0
        %2039 = vmatpush1.bf16.msra.mxu0 %v1992
        %2040 = vmatprep.subr.bf16.mxu0 0
        %2041 = vmatpush2.bf16.msra.mxu0 %v2007
        %2042 = vmatprep.subr.bf16.mxu0 0
        %2043 = vmatpush2.bf16.msra.mxu0 %v2006
        %2044 = vmatprep.subr.bf16.mxu0 0
        %2045 = vmatpush2.bf16.msra.mxu0 %v2005
        %2046 = vmatprep.subr.bf16.mxu0 0
        %2047 = vmatpush2.bf16.msra.mxu0 %v2004
        %2048 = vmatprep.subr.bf16.mxu0 0
        %2049 = vmatpush2.bf16.msra.mxu0 %v2003
        %2050 = vmatprep.subr.bf16.mxu0 0
        %2051 = vmatpush2.bf16.msra.mxu0 %v2002
        %2052 = vmatprep.subr.bf16.mxu0 0
        %2053 = vmatpush2.bf16.msra.mxu0 %v2001
        %2054 = vmatprep.subr.bf16.mxu0 0
        %2055 = vmatpush2.bf16.msra.mxu0 %v2000
        %2056 = vmatprep.mubr.bf16.mxu0 %v1826
        %2057 = vmatmul.mubr.bf16.gmra.mxu0 %v1825
        %v2058 = vpop.f32.mrf.mxu0
        %v2059 = vadd.f32 %v1926, %v2058
        %v2060 = vpop.f32.mrf.mxu0
        %v2061 = vpop.f32.mrf.mxu0
        %v2062 = vadd.f32 %v1926, %v2061
        %v2063 = vpop.f32.mrf.mxu0
        %2064 = vmatprep.mubr.bf16.mxu0 %v1828
        %2065 = vmatmul.mubr.bf16.gmra.mxu0 %v1827
        %v2066 = vpop.f32.mrf.mxu0
        %v2067 = vadd.f32 %v1926, %v2066
        %v2068 = vpop.f32.mrf.mxu0
        %v2069 = vpop.f32.mrf.mxu0
        %v2070 = vadd.f32 %v1926, %v2069
        %v2071 = vpop.f32.mrf.mxu0
        %2072 = vmatprep.mubr.bf16.mxu0 %v1830
        %2073 = vmatmul.mubr.bf16.gmra.mxu0 %v1829
        %v2074 = vpop.f32.mrf.mxu0
        %v2075 = vadd.f32 %v1926, %v2074
        %v2076 = vpop.f32.mrf.mxu0
        %v2077 = vpop.f32.mrf.mxu0
        %v2078 = vadd.f32 %v1926, %v2077
        %v2079 = vpop.f32.mrf.mxu0
        %2080 = vmatprep.mubr.bf16.mxu0 %v1832
        %2081 = vmatmul.mubr.bf16.gmra.mxu0 %v1831
        %v2082 = vpop.f32.mrf.mxu0
        %v2083 = vadd.f32 %v1926, %v2082
        %v2084 = vpop.f32.mrf.mxu0
        %v2085 = vpop.f32.mrf.mxu0
        %v2086 = vadd.f32 %v1926, %v2085
        %v2087 = vpop.f32.mrf.mxu0
        %2088 = vmatprep.mubr.bf16.mxu0 %v1834
        %2089 = vmatmul.mubr.bf16.gmra.mxu0 %v1833
        %v2090 = vpop.f32.mrf.mxu0
        %v2091 = vadd.f32 %v1926, %v2090
        %v2092 = vpop.f32.mrf.mxu0
        %v2093 = vpop.f32.mrf.mxu0
        %v2094 = vadd.f32 %v1926, %v2093
        %v2095 = vpop.f32.mrf.mxu0
        %2096 = vmatprep.mubr.bf16.mxu0 %v1836
        %2097 = vmatmul.mubr.bf16.gmra.mxu0 %v1835
        %v2098 = vpop.f32.mrf.mxu0
        %v2099 = vadd.f32 %v1926, %v2098
        %v2100 = vpop.f32.mrf.mxu0
        %v2101 = vpop.f32.mrf.mxu0
        %v2102 = vadd.f32 %v1926, %v2101
        %v2103 = vpop.f32.mrf.mxu0
        %2104 = vmatprep.mubr.bf16.mxu0 %v1838
        %2105 = vmatmul.mubr.bf16.gmra.mxu0 %v1837
        %v2106 = vpop.f32.mrf.mxu0
        %v2107 = vadd.f32 %v1926, %v2106
        %v2108 = vpop.f32.mrf.mxu0
        %v2109 = vpop.f32.mrf.mxu0
        %v2110 = vadd.f32 %v1926, %v2109
        %v2111 = vpop.f32.mrf.mxu0
        %2112 = vmatprep.mubr.bf16.mxu0 %v1840
        %2113 = vmatmul.mubr.bf16.gmra.mxu0 %v1839
        %v2114 = vpop.f32.mrf.mxu0
        %v2115 = vadd.f32 %v1926, %v2114
        %v2116 = vpop.f32.mrf.mxu0
        %v2117 = vpop.f32.mrf.mxu0
        %v2118 = vadd.f32 %v1926, %v2117
        %v2119 = vpop.f32.mrf.mxu0
        %2120 = vmatprep.mubr.bf16.mxu0 %v1842
        %2121 = vmatmul.mubr.bf16.gmra.mxu0 %v1841
        %v2122 = vpop.f32.mrf.mxu0
        %v2123 = vadd.f32 %v1926, %v2122
        %v2124 = vpop.f32.mrf.mxu0
        %v2125 = vpop.f32.mrf.mxu0
        %v2126 = vadd.f32 %v1926, %v2125
        %v2127 = vpop.f32.mrf.mxu0
        %2128 = vmatprep.mubr.bf16.mxu0 %v1844
        %2129 = vmatmul.mubr.bf16.gmra.mxu0 %v1843
        %v2130 = vpop.f32.mrf.mxu0
        %v2131 = vadd.f32 %v1926, %v2130
        %v2132 = vpop.f32.mrf.mxu0
        %v2133 = vpop.f32.mrf.mxu0
        %v2134 = vadd.f32 %v1926, %v2133
        %v2135 = vpop.f32.mrf.mxu0
        %2136 = vmatprep.mubr.bf16.mxu0 %v1846
        %2137 = vmatmul.mubr.bf16.gmra.mxu0 %v1845
        %v2138 = vpop.f32.mrf.mxu0
        %v2139 = vadd.f32 %v1926, %v2138
        %v2140 = vpop.f32.mrf.mxu0
        %v2141 = vpop.f32.mrf.mxu0
        %v2142 = vadd.f32 %v1926, %v2141
        %v2143 = vpop.f32.mrf.mxu0
        %2144 = vmatprep.mubr.bf16.mxu0 %v1848
        %2145 = vmatmul.mubr.bf16.gmra.mxu0 %v1847
        %v2146 = vpop.f32.mrf.mxu0
        %v2147 = vadd.f32 %v1926, %v2146
        %v2148 = vpop.f32.mrf.mxu0
        %v2149 = vpop.f32.mrf.mxu0
        %v2150 = vadd.f32 %v1926, %v2149
        %v2151 = vpop.f32.mrf.mxu0
        %2152 = vmatprep.mubr.bf16.mxu0 %v1850
        %2153 = vmatmul.mubr.bf16.gmra.mxu0 %v1849
        %v2154 = vpop.f32.mrf.mxu0
        %v2155 = vadd.f32 %v1926, %v2154
        %v2156 = vpop.f32.mrf.mxu0
        %v2157 = vpop.f32.mrf.mxu0
        %v2158 = vadd.f32 %v1926, %v2157
        %v2159 = vpop.f32.mrf.mxu0
        %2160 = vmatprep.mubr.bf16.mxu0 %v1852
        %2161 = vmatmul.mubr.bf16.gmra.mxu0 %v1851
        %v2162 = vpop.f32.mrf.mxu0
        %v2163 = vadd.f32 %v1926, %v2162
        %v2164 = vpop.f32.mrf.mxu0
        %v2165 = vpop.f32.mrf.mxu0
        %v2166 = vadd.f32 %v1926, %v2165
        %v2167 = vpop.f32.mrf.mxu0
        %2168 = vmatprep.mubr.bf16.mxu0 %v1854
        %2169 = vmatmul.mubr.bf16.gmra.mxu0 %v1853
        %v2170 = vpop.f32.mrf.mxu0
        %v2171 = vadd.f32 %v1926, %v2170
        %v2172 = vpop.f32.mrf.mxu0
        %v2173 = vpop.f32.mrf.mxu0
        %v2174 = vadd.f32 %v1926, %v2173
        %v2175 = vpop.f32.mrf.mxu0
        %2176 = vmatprep.mubr.bf16.mxu0 %v1856
        %2177 = vmatmul.mubr.bf16.gmra.mxu0 %v1855
        %v2178 = vpop.f32.mrf.mxu0
        %v2179 = vadd.f32 %v1926, %v2178
        %v2180 = vpop.f32.mrf.mxu0
        %v2181 = vpop.f32.mrf.mxu0
        %v2182 = vadd.f32 %v1926, %v2181
        %v2183 = vpop.f32.mrf.mxu0
        %2184 = vmatprep.mubr.bf16.mxu0 %v1858
        %2185 = vmatmul.mubr.bf16.gmra.mxu0 %v1857
        %v2186 = vpop.f32.mrf.mxu0
        %v2187 = vadd.f32 %v1926, %v2186
        %v2188 = vpop.f32.mrf.mxu0
        %v2189 = vpop.f32.mrf.mxu0
        %v2190 = vadd.f32 %v1926, %v2189
        %v2191 = vpop.f32.mrf.mxu0
        %2192 = vmatprep.mubr.bf16.mxu0 %v1860
        %2193 = vmatmul.mubr.bf16.gmra.mxu0 %v1859
        %v2194 = vpop.f32.mrf.mxu0
        %v2195 = vadd.f32 %v1926, %v2194
        %v2196 = vpop.f32.mrf.mxu0
        %v2197 = vpop.f32.mrf.mxu0
        %v2198 = vadd.f32 %v1926, %v2197
        %v2199 = vpop.f32.mrf.mxu0
        %2200 = vmatprep.mubr.bf16.mxu0 %v1862
        %2201 = vmatmul.mubr.bf16.gmra.mxu0 %v1861
        %v2202 = vpop.f32.mrf.mxu0
        %v2203 = vadd.f32 %v1926, %v2202
        %v2204 = vpop.f32.mrf.mxu0
        %v2205 = vpop.f32.mrf.mxu0
        %v2206 = vadd.f32 %v1926, %v2205
        %v2207 = vpop.f32.mrf.mxu0
        %2208 = vmatprep.mubr.bf16.mxu0 %v1864
        %2209 = vmatmul.mubr.bf16.gmra.mxu0 %v1863
        %v2210 = vpop.f32.mrf.mxu0
        %v2211 = vadd.f32 %v1926, %v2210
        %v2212 = vpop.f32.mrf.mxu0
        %v2213 = vpop.f32.mrf.mxu0
        %v2214 = vadd.f32 %v1926, %v2213
        %v2215 = vpop.f32.mrf.mxu0
        %2216 = vmatprep.mubr.bf16.mxu0 %v1866
        %2217 = vmatmul.mubr.bf16.gmra.mxu0 %v1865
        %v2218 = vpop.f32.mrf.mxu0
        %v2219 = vadd.f32 %v1926, %v2218
        %v2220 = vpop.f32.mrf.mxu0
        %v2221 = vpop.f32.mrf.mxu0
        %v2222 = vadd.f32 %v1926, %v2221
        %v2223 = vpop.f32.mrf.mxu0
        %2224 = vmatprep.mubr.bf16.mxu0 %v1868
        %2225 = vmatmul.mubr.bf16.gmra.mxu0 %v1867
        %v2226 = vpop.f32.mrf.mxu0
        %v2227 = vadd.f32 %v1926, %v2226
        %v2228 = vpop.f32.mrf.mxu0
        %v2229 = vpop.f32.mrf.mxu0
        %v2230 = vadd.f32 %v1926, %v2229
        %v2231 = vpop.f32.mrf.mxu0
        %2232 = vmatprep.mubr.bf16.mxu0 %v1870
        %2233 = vmatmul.mubr.bf16.gmra.mxu0 %v1869
        %v2234 = vpop.f32.mrf.mxu0
        %v2235 = vadd.f32 %v1926, %v2234
        %v2236 = vpop.f32.mrf.mxu0
        %v2237 = vpop.f32.mrf.mxu0
        %v2238 = vadd.f32 %v1926, %v2237
        %v2239 = vpop.f32.mrf.mxu0
        %2240 = vmatprep.mubr.bf16.mxu0 %v1872
        %2241 = vmatmul.mubr.bf16.gmra.mxu0 %v1871
        %v2242 = vpop.f32.mrf.mxu0
        %v2243 = vadd.f32 %v1926, %v2242
        %v2244 = vpop.f32.mrf.mxu0
        %v2245 = vpop.f32.mrf.mxu0
        %v2246 = vadd.f32 %v1926, %v2245
        %v2247 = vpop.f32.mrf.mxu0
        %2248 = vmatprep.mubr.bf16.mxu0 %v1874
        %2249 = vmatmul.mubr.bf16.gmra.mxu0 %v1873
        %v2250 = vpop.f32.mrf.mxu0
        %v2251 = vadd.f32 %v1926, %v2250
        %v2252 = vpop.f32.mrf.mxu0
        %v2253 = vpop.f32.mrf.mxu0
        %v2254 = vadd.f32 %v1926, %v2253
        %v2255 = vpop.f32.mrf.mxu0
        %2256 = vmatprep.mubr.bf16.mxu0 %v1876
        %2257 = vmatmul.mubr.bf16.gmra.mxu0 %v1875
        %v2258 = vpop.f32.mrf.mxu0
        %v2259 = vadd.f32 %v1926, %v2258
        %v2260 = vpop.f32.mrf.mxu0
        %v2261 = vpop.f32.mrf.mxu0
        %v2262 = vadd.f32 %v1926, %v2261
        %v2263 = vpop.f32.mrf.mxu0
        %2264 = vmatprep.mubr.bf16.mxu0 %v1878
        %2265 = vmatmul.mubr.bf16.gmra.mxu0 %v1877
        %v2266 = vpop.f32.mrf.mxu0
        %v2267 = vadd.f32 %v1926, %v2266
        %v2268 = vpop.f32.mrf.mxu0
        %v2269 = vpop.f32.mrf.mxu0
        %v2270 = vadd.f32 %v1926, %v2269
        %v2271 = vpop.f32.mrf.mxu0
        %2272 = vmatprep.mubr.bf16.mxu0 %v1880
        %2273 = vmatmul.mubr.bf16.gmra.mxu0 %v1879
        %v2274 = vpop.f32.mrf.mxu0
        %v2275 = vadd.f32 %v1926, %v2274
        %v2276 = vpop.f32.mrf.mxu0
        %v2277 = vpop.f32.mrf.mxu0
        %v2278 = vadd.f32 %v1926, %v2277
        %v2279 = vpop.f32.mrf.mxu0
        %2280 = vmatprep.mubr.bf16.mxu0 %v1882
        %2281 = vmatmul.mubr.bf16.gmra.mxu0 %v1881
        %v2282 = vpop.f32.mrf.mxu0
        %v2283 = vadd.f32 %v1926, %v2282
        %v2284 = vpop.f32.mrf.mxu0
        %v2285 = vpop.f32.mrf.mxu0
        %v2286 = vadd.f32 %v1926, %v2285
        %v2287 = vpop.f32.mrf.mxu0
        %2288 = vmatprep.mubr.bf16.mxu0 %v1884
        %2289 = vmatmul.mubr.bf16.gmra.mxu0 %v1883
        %v2290 = vpop.f32.mrf.mxu0
        %v2291 = vadd.f32 %v1926, %v2290
        %v2292 = vpop.f32.mrf.mxu0
        %v2293 = vpop.f32.mrf.mxu0
        %v2294 = vadd.f32 %v1926, %v2293
        %v2295 = vpop.f32.mrf.mxu0
        %2296 = vmatprep.mubr.bf16.mxu0 %v1886
        %2297 = vmatmul.mubr.bf16.gmra.mxu0 %v1885
        %v2298 = vpop.f32.mrf.mxu0
        %v2299 = vadd.f32 %v1926, %v2298
        %v2300 = vpop.f32.mrf.mxu0
        %v2301 = vpop.f32.mrf.mxu0
        %v2302 = vadd.f32 %v1926, %v2301
        %v2303 = vpop.f32.mrf.mxu0
        %2304 = vmatprep.mubr.bf16.mxu0 %v1888
        %2305 = vmatmul.mubr.bf16.gmra.mxu0 %v1887
        %v2306 = vpop.f32.mrf.mxu0
        %v2307 = vadd.f32 %v1926, %v2306
        %v2308 = vpop.f32.mrf.mxu0
        %v2309 = vpop.f32.mrf.mxu0
        %v2310 = vadd.f32 %v1926, %v2309
        %v2311 = vpop.f32.mrf.mxu0
        %2312 = vdwg.mxu0
        %v2313 = vpack.c.bf16 %v2062, %v2059
        %v2314 = vpack.c.bf16 %v2070, %v2067
        %v2315 = vpack.c.bf16 %v2078, %v2075
        %v2316 = vpack.c.bf16 %v2086, %v2083
        %v2317 = vpack.c.bf16 %v2094, %v2091
        %v2318 = vpack.c.bf16 %v2102, %v2099
        %v2319 = vpack.c.bf16 %v2110, %v2107
        %v2320 = vpack.c.bf16 %v2118, %v2115
        %v2321 = vpack.c.bf16 %v2126, %v2123
        %v2322 = vpack.c.bf16 %v2134, %v2131
        %v2323 = vpack.c.bf16 %v2142, %v2139
        %v2324 = vpack.c.bf16 %v2150, %v2147
        %v2325 = vpack.c.bf16 %v2158, %v2155
        %v2326 = vpack.c.bf16 %v2166, %v2163
        %v2327 = vpack.c.bf16 %v2174, %v2171
        %v2328 = vpack.c.bf16 %v2182, %v2179
        %v2329 = vpack.c.bf16 %v2190, %v2187
        %v2330 = vpack.c.bf16 %v2198, %v2195
        %v2331 = vpack.c.bf16 %v2206, %v2203
        %v2332 = vpack.c.bf16 %v2214, %v2211
        %v2333 = vpack.c.bf16 %v2222, %v2219
        %v2334 = vpack.c.bf16 %v2230, %v2227
        %v2335 = vpack.c.bf16 %v2238, %v2235
        %v2336 = vpack.c.bf16 %v2246, %v2243
        %v2337 = vpack.c.bf16 %v2254, %v2251
        %v2338 = vpack.c.bf16 %v2262, %v2259
        %v2339 = vpack.c.bf16 %v2270, %v2267
        %v2340 = vpack.c.bf16 %v2278, %v2275
        %v2341 = vpack.c.bf16 %v2286, %v2283
        %v2342 = vpack.c.bf16 %v2294, %v2291
        %v2343 = vpack.c.bf16 %v2302, %v2299
        %v2344 = vpack.c.bf16 %v2310, %v2307
        %v2377 = vunpack.c.l.b16 %v2313
        %v2378 = vunpack.c.h.b16 %v2313
        %v2379 = vunpack.c.l.b16 %v2314
        %v2380 = vunpack.c.h.b16 %v2314
        %v2381 = vunpack.c.l.b16 %v2315
        %v2382 = vunpack.c.h.b16 %v2315
        %v2383 = vunpack.c.l.b16 %v2316
        %v2384 = vunpack.c.h.b16 %v2316
        %v2385 = vunpack.c.l.b16 %v2317
        %v2386 = vunpack.c.h.b16 %v2317
        %v2387 = vunpack.c.l.b16 %v2318
        %v2388 = vunpack.c.h.b16 %v2318
        %v2389 = vunpack.c.l.b16 %v2319
        %v2390 = vunpack.c.h.b16 %v2319
        %v2391 = vunpack.c.l.b16 %v2320
        %v2392 = vunpack.c.h.b16 %v2320
        %v2393 = vunpack.c.l.b16 %v2321
        %v2394 = vunpack.c.h.b16 %v2321
        %v2395 = vunpack.c.l.b16 %v2322
        %v2396 = vunpack.c.h.b16 %v2322
        %v2397 = vunpack.c.l.b16 %v2323
        %v2398 = vunpack.c.h.b16 %v2323
        %v2399 = vunpack.c.l.b16 %v2324
        %v2400 = vunpack.c.h.b16 %v2324
        %v2401 = vunpack.c.l.b16 %v2325
        %v2402 = vunpack.c.h.b16 %v2325
        %v2403 = vunpack.c.l.b16 %v2326
        %v2404 = vunpack.c.h.b16 %v2326
        %v2405 = vunpack.c.l.b16 %v2327
        %v2406 = vunpack.c.h.b16 %v2327
        %v2407 = vunpack.c.l.b16 %v2328
        %v2408 = vunpack.c.h.b16 %v2328
        %v2409 = vunpack.c.l.b16 %v2329
        %v2410 = vunpack.c.h.b16 %v2329
        %v2411 = vunpack.c.l.b16 %v2330
        %v2412 = vunpack.c.h.b16 %v2330
        %v2413 = vunpack.c.l.b16 %v2331
        %v2414 = vunpack.c.h.b16 %v2331
        %v2415 = vunpack.c.l.b16 %v2332
        %v2416 = vunpack.c.h.b16 %v2332
        %v2417 = vunpack.c.l.b16 %v2333
        %v2418 = vunpack.c.h.b16 %v2333
        %v2419 = vunpack.c.l.b16 %v2334
        %v2420 = vunpack.c.h.b16 %v2334
        %v2421 = vunpack.c.l.b16 %v2335
        %v2422 = vunpack.c.h.b16 %v2335
        %v2423 = vunpack.c.l.b16 %v2336
        %v2424 = vunpack.c.h.b16 %v2336
        %v2425 = vunpack.c.l.b16 %v2337
        %v2426 = vunpack.c.h.b16 %v2337
        %v2427 = vunpack.c.l.b16 %v2338
        %v2428 = vunpack.c.h.b16 %v2338
        %v2429 = vunpack.c.l.b16 %v2339
        %v2430 = vunpack.c.h.b16 %v2339
        %v2431 = vunpack.c.l.b16 %v2340
        %v2432 = vunpack.c.h.b16 %v2340
        %v2433 = vunpack.c.l.b16 %v2341
        %v2434 = vunpack.c.h.b16 %v2341
        %v2435 = vunpack.c.l.b16 %v2342
        %v2436 = vunpack.c.h.b16 %v2342
        %v2437 = vunpack.c.l.b16 %v2343
        %v2438 = vunpack.c.h.b16 %v2343
        %v2439 = vunpack.c.l.b16 %v2344
        %v2440 = vunpack.c.h.b16 %v2344
        %v2441 = vpack.c.b16 %v2377, %v2377
        %v2442 = vpack.c.b16 %v2378, %v2378
        %v2443 = vpack.c.b16 %v2379, %v2379
        %v2444 = vpack.c.b16 %v2380, %v2380
        %v2445 = vpack.c.b16 %v2381, %v2381
        %v2446 = vpack.c.b16 %v2382, %v2382
        %v2447 = vpack.c.b16 %v2383, %v2383
        %v2448 = vpack.c.b16 %v2384, %v2384
        %v2449 = vpack.c.b16 %v2385, %v2385
        %v2450 = vpack.c.b16 %v2386, %v2386
        %v2451 = vpack.c.b16 %v2387, %v2387
        %v2452 = vpack.c.b16 %v2388, %v2388
        %v2453 = vpack.c.b16 %v2389, %v2389
        %v2454 = vpack.c.b16 %v2390, %v2390
        %v2455 = vpack.c.b16 %v2391, %v2391
        %v2456 = vpack.c.b16 %v2392, %v2392
        %v2457 = vpack.c.b16 %v2393, %v2393
        %v2458 = vpack.c.b16 %v2394, %v2394
        %v2459 = vpack.c.b16 %v2395, %v2395
        %v2460 = vpack.c.b16 %v2396, %v2396
        %v2461 = vpack.c.b16 %v2397, %v2397
        %v2462 = vpack.c.b16 %v2398, %v2398
        %v2463 = vpack.c.b16 %v2399, %v2399
        %v2464 = vpack.c.b16 %v2400, %v2400
        %v2465 = vpack.c.b16 %v2401, %v2401
        %v2466 = vpack.c.b16 %v2402, %v2402
        %v2467 = vpack.c.b16 %v2403, %v2403
        %v2468 = vpack.c.b16 %v2404, %v2404
        %v2469 = vpack.c.b16 %v2405, %v2405
        %v2470 = vpack.c.b16 %v2406, %v2406
        %v2471 = vpack.c.b16 %v2407, %v2407
        %v2472 = vpack.c.b16 %v2408, %v2408
        %v2473 = vpack.c.b16 %v2409, %v2409
        %v2474 = vpack.c.b16 %v2410, %v2410
        %v2475 = vpack.c.b16 %v2411, %v2411
        %v2476 = vpack.c.b16 %v2412, %v2412
        %v2477 = vpack.c.b16 %v2413, %v2413
        %v2478 = vpack.c.b16 %v2414, %v2414
        %v2479 = vpack.c.b16 %v2415, %v2415
        %v2480 = vpack.c.b16 %v2416, %v2416
        %v2481 = vpack.c.b16 %v2417, %v2417
        %v2482 = vpack.c.b16 %v2418, %v2418
        %v2483 = vpack.c.b16 %v2419, %v2419
        %v2484 = vpack.c.b16 %v2420, %v2420
        %v2485 = vpack.c.b16 %v2421, %v2421
        %v2486 = vpack.c.b16 %v2422, %v2422
        %v2487 = vpack.c.b16 %v2423, %v2423
        %v2488 = vpack.c.b16 %v2424, %v2424
        %v2489 = vpack.c.b16 %v2425, %v2425
        %v2490 = vpack.c.b16 %v2426, %v2426
        %v2491 = vpack.c.b16 %v2427, %v2427
        %v2492 = vpack.c.b16 %v2428, %v2428
        %v2493 = vpack.c.b16 %v2429, %v2429
        %v2494 = vpack.c.b16 %v2430, %v2430
        %v2495 = vpack.c.b16 %v2431, %v2431
        %v2496 = vpack.c.b16 %v2432, %v2432
        %v2497 = vpack.c.b16 %v2433, %v2433
        %v2498 = vpack.c.b16 %v2434, %v2434
        %v2499 = vpack.c.b16 %v2435, %v2435
        %v2500 = vpack.c.b16 %v2436, %v2436
        %v2501 = vpack.c.b16 %v2437, %v2437
        %v2502 = vpack.c.b16 %v2438, %v2438
        %v2503 = vpack.c.b16 %v2439, %v2439
        %v2504 = vpack.c.b16 %v2440, %v2440
        %2569 = vst [vmem:[%s284] sm:$0xf] %v2441
        %2570 = vst [vmem:[%s284 + $0x4] sm:$0xf] %v2442
        %2571 = vst [vmem:[%s284 + $0x8] sm:$0xf] %v2443
        %2572 = vst [vmem:[%s284 + $0xc] sm:$0xf] %v2444
        %2573 = vst [vmem:[%s284 + $0x10] sm:$0xf] %v2445
        %2574 = vst [vmem:[%s284 + $0x14] sm:$0xf] %v2446
        %2575 = vst [vmem:[%s284 + $0x18] sm:$0xf] %v2447
        %2576 = vst [vmem:[%s284 + $0x1c] sm:$0xf] %v2448
        %2577 = vst [vmem:[%s284 + $0x20] sm:$0xf] %v2449
        %2578 = vst [vmem:[%s284 + $0x24] sm:$0xf] %v2450
        %2579 = vst [vmem:[%s284 + $0x28] sm:$0xf] %v2451
        %2580 = vst [vmem:[%s284 + $0x2c] sm:$0xf] %v2452
        %2581 = vst [vmem:[%s284 + $0x30] sm:$0xf] %v2453
        %2582 = vst [vmem:[%s284 + $0x34] sm:$0xf] %v2454
        %2583 = vst [vmem:[%s284 + $0x38] sm:$0xf] %v2455
        %2584 = vst [vmem:[%s284 + $0x3c] sm:$0xf] %v2456
        %2585 = vst [vmem:[%s284 + $0x40] sm:$0xf] %v2457
        %2586 = vst [vmem:[%s284 + $0x44] sm:$0xf] %v2458
        %2587 = vst [vmem:[%s284 + $0x48] sm:$0xf] %v2459
        %2588 = vst [vmem:[%s284 + $0x4c] sm:$0xf] %v2460
        %2589 = vst [vmem:[%s284 + $0x50] sm:$0xf] %v2461
        %2590 = vst [vmem:[%s284 + $0x54] sm:$0xf] %v2462
        %2591 = vst [vmem:[%s284 + $0x58] sm:$0xf] %v2463
        %2592 = vst [vmem:[%s284 + $0x5c] sm:$0xf] %v2464
        %2593 = vst [vmem:[%s284 + $0x60] sm:$0xf] %v2465
        %2594 = vst [vmem:[%s284 + $0x64] sm:$0xf] %v2466
        %2595 = vst [vmem:[%s284 + $0x68] sm:$0xf] %v2467
        %2596 = vst [vmem:[%s284 + $0x6c] sm:$0xf] %v2468
        %2597 = vst [vmem:[%s284 + $0x70] sm:$0xf] %v2469
        %2598 = vst [vmem:[%s284 + $0x74] sm:$0xf] %v2470
        %2599 = vst [vmem:[%s284 + $0x78] sm:$0xf] %v2471
        %2600 = vst [vmem:[%s284 + $0x7c] sm:$0xf] %v2472
        %2601 = vst [vmem:[%s284 + $0x80] sm:$0xf] %v2473
        %2602 = vst [vmem:[%s284 + $0x84] sm:$0xf] %v2474
        %2603 = vst [vmem:[%s284 + $0x88] sm:$0xf] %v2475
        %2604 = vst [vmem:[%s284 + $0x8c] sm:$0xf] %v2476
        %2605 = vst [vmem:[%s284 + $0x90] sm:$0xf] %v2477
        %2606 = vst [vmem:[%s284 + $0x94] sm:$0xf] %v2478
        %2607 = vst [vmem:[%s284 + $0x98] sm:$0xf] %v2479
        %2608 = vst [vmem:[%s284 + $0x9c] sm:$0xf] %v2480
        %2609 = vst [vmem:[%s284 + $0xa0] sm:$0xf] %v2481
        %2610 = vst [vmem:[%s284 + $0xa4] sm:$0xf] %v2482
        %2611 = vst [vmem:[%s284 + $0xa8] sm:$0xf] %v2483
        %2612 = vst [vmem:[%s284 + $0xac] sm:$0xf] %v2484
        %2613 = vst [vmem:[%s284 + $0xb0] sm:$0xf] %v2485
        %2614 = vst [vmem:[%s284 + $0xb4] sm:$0xf] %v2486
        %2615 = vst [vmem:[%s284 + $0xb8] sm:$0xf] %v2487
        %2616 = vst [vmem:[%s284 + $0xbc] sm:$0xf] %v2488
        %2617 = vst [vmem:[%s284 + $0xc0] sm:$0xf] %v2489
        %2618 = vst [vmem:[%s284 + $0xc4] sm:$0xf] %v2490
        %2619 = vst [vmem:[%s284 + $0xc8] sm:$0xf] %v2491
        %2620 = vst [vmem:[%s284 + $0xcc] sm:$0xf] %v2492
        %2621 = vst [vmem:[%s284 + $0xd0] sm:$0xf] %v2493
        %2622 = vst [vmem:[%s284 + $0xd4] sm:$0xf] %v2494
        %2623 = vst [vmem:[%s284 + $0xd8] sm:$0xf] %v2495
        %2624 = vst [vmem:[%s284 + $0xdc] sm:$0xf] %v2496
        %2625 = vst [vmem:[%s284 + $0xe0] sm:$0xf] %v2497
        %2626 = vst [vmem:[%s284 + $0xe4] sm:$0xf] %v2498
        %2627 = vst [vmem:[%s284 + $0xe8] sm:$0xf] %v2499
        %2628 = vst [vmem:[%s284 + $0xec] sm:$0xf] %v2500
        %2629 = vst [vmem:[%s284 + $0xf0] sm:$0xf] %v2501
        %2630 = vst [vmem:[%s284 + $0xf4] sm:$0xf] %v2502
        %2631 = vst [vmem:[%s284 + $0xf8] sm:$0xf] %v2503
        %2632 = vst [vmem:[%s284 + $0xfc] sm:$0xf] %v2504
        %s2633 = sand.u32 %s181, 1
        %s2634 = scalar_lea.sflag [#allocation3], %s2633
        %s2635 = sand.u32 %s181, 1
        %s2636 = smul.addr %s2635, 256
        %s2637 = scalar_lea.vmem [#allocation2], %s2636
        // Predicated region
        $region49: #{tpu_custom_call.1} parent=47 // pred_check
          %p2638 = pneg %p191
        $region50: #{tpu_custom_call.1} parent=47 // pred_check_branch
          %2640 = sbr.rel (%p2638) target = $region52
        $region51: #{tpu_custom_call.1} parent=47 // pred_region
          %s2641 = smul.u32 64, %s21
          %s2642 = ssub.s32 125, %s2641
          %p2643 = scmp.lt.s32.totalorder %s2642, 64
          %s2644 = scalar_select %p2643, %s2642, 64
          %s2645 = smul.u32 64, %s2644
          %s2647 = ssub.s32 4096, %s2645
          %2648 = vsyncadd %s2634, %s2647
          %p2649 = scmp.ne.s32.totalorder 0, %s2645
          %s2650 = smul.addr %s2641, 64
          %s2651 = scalar_lea.hbm %s7, %s2650
          %s2652 = smul.u32 4, %s2644
          %s2653 = sshll.u32 %s2637, 4
          %s2654 = int_to_ptr.vmem [resolvable:$true] %s2653
          %s2655 = sshll.u32 %s2652, 4
          %2659 = dma.vmem_to_hbm [thread:$0]  (%p2649), %s2654, %s2655, %s2651, %s2634, 64, 64, 4
        $region52: #{tpu_custom_call.1} parent=47 // pred_fallthru
          _
      $region48: #{tpu_custom_call.1} parent=5 // pred_fallthru
        _
      %p2660 = scmp.le.s32.totalorder 2, %s16
      // Predicated region
      $region53: #{tpu_custom_call.1} parent=5 // pred_check
        %p2661 = pneg %p2660
      $region54: #{tpu_custom_call.1} parent=5 // pred_check_branch
        %2663 = sbr.rel (%p2661) target = $region56
      $region55: #{tpu_custom_call.1} parent=5 // pred_region
        %s2664 = ssub.s32 %s16, 2
        // Predicated region
        $region57: #{tpu_custom_call.1} parent=55 // pred_check
          %p2665 = pneg %p197
        $region58: #{tpu_custom_call.1} parent=55 // pred_check_branch
          %2667 = sbr.rel (%p2665) target = $region60
        $region59: #{tpu_custom_call.1} parent=55 // pred_region
          %s2668 = sand.u32 %s182, 1
          %s2669 = scalar_lea.sflag [#allocation3], %s2668
          %s2670 = sand.u32 %s182, 1
          %s2671 = smul.addr %s2670, 256
          %s2672 = scalar_lea.vmem [#allocation2], %s2671
          %2673 = dma.done %s2669, 4096
        $region60: #{tpu_custom_call.1} parent=55 // pred_fallthru
          _
      $region56: #{tpu_custom_call.1} parent=5 // pred_fallthru
        _
    $region6: #{tpu_custom_call.1} parent=1 // loop_footer
      %s20 = sadd.s32 1, %s16
    $region7: #{tpu_custom_call.1} parent=1 // loop_footer_branch
      %15 = sbr.rel target = $region3
    $region8: #{tpu_custom_call.1} parent=1 // loop_exit
      _
    %2674 = vsyncpa [#allocation3], 1
    %s2675 = scalar_lea.sflag [#allocation3], 1
    %2676 = vsyncpa %s2675, 1

// kernel: tpu_custom_call.1
$region0: #{tpu_custom_call.1}
  #allocation0 [shape = 'u32[]', space=smem, size = 0x4, offset = 0x4, fixed_abs, tag = 'smem constant byte address 0x4 - core index']
  #allocation1 [shape = 'u32[144,128]{1,0:T(1,128)}', space=vmem, size = 0x12000, scoped, tag = 'internal scratch']
  %s0 = inlined_call_operand.vmem [shape: f32[1000,100], index: 0, kind: input, shape index: {}]
  %s1 = inlined_call_operand.vmem [shape: bf16[100,256], index: 1, kind: input, shape index: {}]
  %s2 = inlined_call_operand.vmem [shape: f32[1,256], index: 2, kind: input, shape index: {}]
  %s3 = inlined_call_operand.vmem [shape: bf16[256,256], index: 3, kind: input, shape index: {}]
  %s4 = inlined_call_operand.vmem [shape: f32[1,256], index: 4, kind: input, shape index: {}]
  %s5 = inlined_call_operand.vmem [shape: bf16[256,128], index: 5, kind: input, shape index: {}]
  %s6 = inlined_call_operand.vmem [shape: f32[1,128], index: 6, kind: input, shape index: {}]
  %s7 = inlined_call_operand.hbm [shape: bf16[1000,128], index: 7, kind: output, shape index: {}]
  %s8 = sld [smem:[#allocation0]]
  $region61: #{tpu_custom_call.1} parent=0
    _
  %s10 = ssub.s32 1, %s8
  %s11 = scalar_select 0, %s10, %s8
  $region1: #{tpu_custom_call.1} parent=0
    #allocation2 [shape = 'u8[262144]{0}', space=vmem, size = 0x40000, scoped, tag = 'output window, operand 0']
    #allocation3 [shape = 's32[2]{0}', space=sflag, size = 0x8, scoped, tag = 'scoped memory for tpu_custom_call.1']
    %12 = vsyncpa [#allocation3], 0
    %s13 = scalar_lea.sflag [#allocation3], 1
    %14 = vsyncpa %s13, 0
    loop: start=0, step=1, limit=4
    $region2: #{tpu_custom_call.1} parent=1 // loop_pre_header
      _
    $region3: #{tpu_custom_call.1} parent=1 // loop_header
      %s16 = sphi 0, %s20
      %p17 = scmp.ge.s32.totalorder %s16, 4
      %s26 = sphi 0, %s28
      %s29 = sphi 0, %s26
      %s30 = sphi 0, %s29
      %s46 = sphi 0, %s30
      %s50 = sphi 0, %s50
      %s52 = sphi 0, %s50
      %s53 = sphi 0, %s52
      %s67 = sphi 0, %s53
      %s71 = sphi 0, %s71
      %s73 = sphi 0, %s71
      %s74 = sphi 0, %s73
      %s88 = sphi 0, %s74
      %s92 = sphi 0, %s92
      %s94 = sphi 0, %s92
      %s95 = sphi 0, %s94
      %s109 = sphi 0, %s95
      %s113 = sphi 0, %s113
      %s115 = sphi 0, %s113
      %s116 = sphi 0, %s115
      %s130 = sphi 0, %s116
      %s134 = sphi 0, %s134
      %s136 = sphi 0, %s134
      %s137 = sphi 0, %s136
      %s151 = sphi 0, %s137
      %s155 = sphi 0, %s155
      %s157 = sphi 0, %s155
      %s158 = sphi 0, %s157
      %s172 = sphi 0, %s158
      %s178 = sphi 0, %s180
      %s181 = sphi 0, %s178
      %s182 = sphi 0, %s181
      %s198 = sphi 0, %s182
    $region4: #{tpu_custom_call.1} parent=1 // loop_header_branch
      %19 = sbr.rel (%p17) target = $region8
    $region5: #{tpu_custom_call.1} parent=1 // loop_body
      %s21 = ssub.s32 %s16, 1
      %s22 = ssub.s32 %s16, 2
      %s23 = sadd.s32 %s16, 1
      %s24 = ssub.s32 %s16, %s23
      %p25 = scmp.eq.s32.totalorder %s24, 0
      %s27 = sadd.s32 %s26, 1
      %s28 = scalar_select %p25, %s26, %s27
      %p31 = pneg %p25
      %p32 = scmp.eq.s32.totalorder %s16, 1
      %p33 = por %p31, %p32
      %p34 = scmp.ne.s32.totalorder %s26, %s29
      %p35 = scmp.eq.s32.totalorder %s16, 0
      %p36 = por %p34, %p35
      %p37 = scmp.ne.s32.totalorder %s26, %s29
      %p38 = scmp.eq.s32.totalorder %s21, 1
      %p39 = por %p37, %p38
      %p40 = scmp.ne.s32.totalorder %s29, %s30
      %p41 = scmp.eq.s32.totalorder %s21, 0
      %p42 = por %p40, %p41
      %p43 = scmp.ne.s32.totalorder %s29, %s30
      %p44 = scmp.eq.s32.totalorder %s22, 1
      %p45 = por %p43, %p44
      %p47 = scmp.ne.s32.totalorder %s30, %s46
      %p48 = scmp.eq.s32.totalorder %s22, 0
      %p49 = por %p47, %p48
      %s51 = sadd.s32 %s50, 1
      %p54 = scmp.eq.s32.totalorder %s16, 1
      %p55 = scmp.ne.s32.totalorder %s50, %s52
      %p56 = scmp.eq.s32.totalorder %s16, 0
      %p57 = por %p55, %p56
      %p58 = scmp.ne.s32.totalorder %s50, %s52
      %p59 = scmp.eq.s32.totalorder %s21, 1
      %p60 = por %p58, %p59
      %p61 = scmp.ne.s32.totalorder %s52, %s53
      %p62 = scmp.eq.s32.totalorder %s21, 0
      %p63 = por %p61, %p62
      %p64 = scmp.ne.s32.totalorder %s52, %s53
      %p65 = scmp.eq.s32.totalorder %s22, 1
      %p66 = por %p64, %p65
      %p68 = scmp.ne.s32.totalorder %s53, %s67
      %p69 = scmp.eq.s32.totalorder %s22, 0
      %p70 = por %p68, %p69
      %s72 = sadd.s32 %s71, 1
      %p75 = scmp.eq.s32.totalorder %s16, 1
      %p76 = scmp.ne.s32.totalorder %s71, %s73
      %p77 = scmp.eq.s32.totalorder %s16, 0
      %p78 = por %p76, %p77
      %p79 = scmp.ne.s32.totalorder %s71, %s73
      %p80 = scmp.eq.s32.totalorder %s21, 1
      %p81 = por %p79, %p80
      %p82 = scmp.ne.s32.totalorder %s73, %s74
      %p83 = scmp.eq.s32.totalorder %s21, 0
      %p84 = por %p82, %p83
      %p85 = scmp.ne.s32.totalorder %s73, %s74
      %p86 = scmp.eq.s32.totalorder %s22, 1
      %p87 = por %p85, %p86
      %p89 = scmp.ne.s32.totalorder %s74, %s88
      %p90 = scmp.eq.s32.totalorder %s22, 0
      %p91 = por %p89, %p90
      %s93 = sadd.s32 %s92, 1
      %p96 = scmp.eq.s32.totalorder %s16, 1
      %p97 = scmp.ne.s32.totalorder %s92, %s94
      %p98 = scmp.eq.s32.totalorder %s16, 0
      %p99 = por %p97, %p98
      %p100 = scmp.ne.s32.totalorder %s92, %s94
      %p101 = scmp.eq.s32.totalorder %s21, 1
      %p102 = por %p100, %p101
      %p103 = scmp.ne.s32.totalorder %s94, %s95
      %p104 = scmp.eq.s32.totalorder %s21, 0
      %p105 = por %p103, %p104
      %p106 = scmp.ne.s32.totalorder %s94, %s95
      %p107 = scmp.eq.s32.totalorder %s22, 1
      %p108 = por %p106, %p107
      %p110 = scmp.ne.s32.totalorder %s95, %s109
      %p111 = scmp.eq.s32.totalorder %s22, 0
      %p112 = por %p110, %p111
      %s114 = sadd.s32 %s113, 1
      %p117 = scmp.eq.s32.totalorder %s16, 1
      %p118 = scmp.ne.s32.totalorder %s113, %s115
      %p119 = scmp.eq.s32.totalorder %s16, 0
      %p120 = por %p118, %p119
      %p121 = scmp.ne.s32.totalorder %s113, %s115
      %p122 = scmp.eq.s32.totalorder %s21, 1
      %p123 = por %p121, %p122
      %p124 = scmp.ne.s32.totalorder %s115, %s116
      %p125 = scmp.eq.s32.totalorder %s21, 0
      %p126 = por %p124, %p125
      %p127 = scmp.ne.s32.totalorder %s115, %s116
      %p128 = scmp.eq.s32.totalorder %s22, 1
      %p129 = por %p127, %p128
      %p131 = scmp.ne.s32.totalorder %s116, %s130
      %p132 = scmp.eq.s32.totalorder %s22, 0
      %p133 = por %p131, %p132
      %s135 = sadd.s32 %s134, 1
      %p138 = scmp.eq.s32.totalorder %s16, 1
      %p139 = scmp.ne.s32.totalorder %s134, %s136
      %p140 = scmp.eq.s32.totalorder %s16, 0
      %p141 = por %p139, %p140
      %p142 = scmp.ne.s32.totalorder %s134, %s136
      %p143 = scmp.eq.s32.totalorder %s21, 1
      %p144 = por %p142, %p143
      %p145 = scmp.ne.s32.totalorder %s136, %s137
      %p146 = scmp.eq.s32.totalorder %s21, 0
      %p147 = por %p145, %p146
      %p148 = scmp.ne.s32.totalorder %s136, %s137
      %p149 = scmp.eq.s32.totalorder %s22, 1
      %p150 = por %p148, %p149
      %p152 = scmp.ne.s32.totalorder %s137, %s151
      %p153 = scmp.eq.s32.totalorder %s22, 0
      %p154 = por %p152, %p153
      %s156 = sadd.s32 %s155, 1
      %p159 = scmp.eq.s32.totalorder %s16, 1
      %p160 = scmp.ne.s32.totalorder %s155, %s157
      %p161 = scmp.eq.s32.totalorder %s16, 0
      %p162 = por %p160, %p161
      %p163 = scmp.ne.s32.totalorder %s155, %s157
      %p164 = scmp.eq.s32.totalorder %s21, 1
      %p165 = por %p163, %p164
      %p166 = scmp.ne.s32.totalorder %s157, %s158
      %p167 = scmp.eq.s32.totalorder %s21, 0
      %p168 = por %p166, %p167
      %p169 = scmp.ne.s32.totalorder %s157, %s158
      %p170 = scmp.eq.s32.totalorder %s22, 1
      %p171 = por %p169, %p170
      %p173 = scmp.ne.s32.totalorder %s158, %s172
      %p174 = scmp.eq.s32.totalorder %s22, 0
      %p175 = por %p173, %p174
      %s176 = ssub.s32 %s16, %s23
      %p177 = scmp.eq.s32.totalorder %s176, 0
      %s179 = sadd.s32 %s178, 1
      %s180 = scalar_select %p177, %s178, %s179
      %p183 = pneg %p177
      %p184 = scmp.eq.s32.totalorder %s16, 1
      %p185 = por %p183, %p184
      %p186 = scmp.ne.s32.totalorder %s178, %s181
      %p187 = scmp.eq.s32.totalorder %s16, 0
      %p188 = por %p186, %p187
      %p189 = scmp.ne.s32.totalorder %s178, %s181
      %p190 = scmp.eq.s32.totalorder %s21, 1
      %p191 = por %p189, %p190
      %p192 = scmp.ne.s32.totalorder %s181, %s182
      %p193 = scmp.eq.s32.totalorder %s21, 0
      %p194 = por %p192, %p193
      %p195 = scmp.ne.s32.totalorder %s181, %s182
      %p196 = scmp.eq.s32.totalorder %s22, 1
      %p197 = por %p195, %p196
      %p199 = scmp.ne.s32.totalorder %s182, %s198
      %p200 = scmp.eq.s32.totalorder %s22, 0
      %p201 = por %p199, %p200
      %p202 = scmp.le.s32.totalorder 1, %s16
      %p203 = scmp.lt.s32.totalorder %s16, 3
      %p204 = pnand %p202, %p203
      %p205 = pneg %p204
      // Predicated region
      $region9: #{tpu_custom_call.1} parent=5 // pred_check
        _
      $region10: #{tpu_custom_call.1} parent=5 // pred_check_branch
        %207 = sbr.rel (%p204) target = $region12
      $region11: #{tpu_custom_call.1} parent=5 // pred_region
        %s208 = ssub.s32 %s16, 1
        // Predicated region
        $region13: #{tpu_custom_call.1} parent=11 // pred_check
          %p209 = pneg %p63
        $region14: #{tpu_custom_call.1} parent=11 // pred_check_branch
          %211 = sbr.rel (%p209) target = $region16
        $region15: #{tpu_custom_call.1} parent=11 // pred_region
          _
        $region16: #{tpu_custom_call.1} parent=11 // pred_fallthru
          _
        // Predicated region
        $region17: #{tpu_custom_call.1} parent=11 // pred_check
          %p212 = pneg %p84
        $region18: #{tpu_custom_call.1} parent=11 // pred_check_branch
          %214 = sbr.rel (%p212) target = $region20
        $region19: #{tpu_custom_call.1} parent=11 // pred_region
          _
        $region20: #{tpu_custom_call.1} parent=11 // pred_fallthru
          _
        // Predicated region
        $region21: #{tpu_custom_call.1} parent=11 // pred_check
          %p215 = pneg %p105
        $region22: #{tpu_custom_call.1} parent=11 // pred_check_branch
          %217 = sbr.rel (%p215) target = $region24
        $region23: #{tpu_custom_call.1} parent=11 // pred_region
          _
        $region24: #{tpu_custom_call.1} parent=11 // pred_fallthru
          _
        // Predicated region
        $region25: #{tpu_custom_call.1} parent=11 // pred_check
          %p218 = pneg %p126
        $region26: #{tpu_custom_call.1} parent=11 // pred_check_branch
          %220 = sbr.rel (%p218) target = $region28
        $region27: #{tpu_custom_call.1} parent=11 // pred_region
          _
        $region28: #{tpu_custom_call.1} parent=11 // pred_fallthru
          _
        // Predicated region
        $region29: #{tpu_custom_call.1} parent=11 // pred_check
          %p221 = pneg %p147
        $region30: #{tpu_custom_call.1} parent=11 // pred_check_branch
          %223 = sbr.rel (%p221) target = $region32
        $region31: #{tpu_custom_call.1} parent=11 // pred_region
          _
        $region32: #{tpu_custom_call.1} parent=11 // pred_fallthru
          _
        // Predicated region
        $region33: #{tpu_custom_call.1} parent=11 // pred_check
          %p224 = pneg %p168
        $region34: #{tpu_custom_call.1} parent=11 // pred_check_branch
          %226 = sbr.rel (%p224) target = $region36
        $region35: #{tpu_custom_call.1} parent=11 // pred_region
          _
        $region36: #{tpu_custom_call.1} parent=11 // pred_fallthru
          _
      $region12: #{tpu_custom_call.1} parent=5 // pred_fallthru
        _
      %p227 = scmp.lt.s32.totalorder %s16, 2
      // Predicated region
      $region37: #{tpu_custom_call.1} parent=5 // pred_check
        %p228 = pneg %p227
      $region38: #{tpu_custom_call.1} parent=5 // pred_check_branch
        %230 = sbr.rel (%p228) target = $region40
      $region39: #{tpu_custom_call.1} parent=5 // pred_region
        // Predicated region
        $region41: #{tpu_custom_call.1} parent=39 // pred_check
          %p231 = pneg %p36
        $region42: #{tpu_custom_call.1} parent=39 // pred_check_branch
          %233 = sbr.rel (%p231) target = $region44
        $region43: #{tpu_custom_call.1} parent=39 // pred_region
          %s234 = smul.u32 64, %s16
          %s235 = ssub.s32 125, %s234
          %p236 = scmp.lt.s32.totalorder %s235, 64
          %s237 = scalar_select %p236, %s235, 64
          %s238 = smul.u32 128, %s237
          %p239 = scmp.lt.s32.totalorder %s234, 124
          %s240 = scalar_select %p239, %s234, 124
          %s241 = smul.addr %s240, 8
          %s242 = scalar_lea.vmem %s0, %s241
          %s243 = smul.u32 64, %s16
          %s244 = ssub.s32 125, %s243
          %p245 = scmp.lt.s32.totalorder %s244, 64
          %s246 = scalar_select %p245, %s244, 64
          %s247 = smul.u32 128, %s246
        $region44: #{tpu_custom_call.1} parent=39 // pred_fallthru
          _
      $region40: #{tpu_custom_call.1} parent=5 // pred_fallthru
        _
      %p248 = scmp.le.s32.totalorder 1, %s16
      %p249 = scmp.lt.s32.totalorder %s16, 3
      %p250 = pnand %p248, %p249
      %p251 = pneg %p250
      // Predicated region
      $region45: #{tpu_custom_call.1} parent=5 // pred_check
        _
      $region46: #{tpu_custom_call.1} parent=5 // pred_check_branch
        %253 = sbr.rel (%p250) target = $region48
      $region47: #{tpu_custom_call.1} parent=5 // pred_region
        %s254 = ssub.s32 %s16, 1
        %s255 = smul.u32 64, %s21
        %s256 = ssub.s32 125, %s255
        %p257 = scmp.lt.s32.totalorder %s256, 64
        %s258 = scalar_select %p257, %s256, 64
        %s259 = smul.u32 128, %s258
        %p260 = scmp.lt.s32.totalorder %s255, 124
        %s261 = scalar_select %p260, %s255, 124
        %s262 = smul.addr %s261, 8
        %s263 = scalar_lea.vmem %s0, %s262
        %p264 = pneg %p42
        %p265 = pneg %p39
        %p266 = pneg %p63
        %p267 = pneg %p60
        %p268 = pneg %p84
        %p269 = pneg %p81
        %p270 = pneg %p105
        %p271 = pneg %p102
        %p272 = pneg %p126
        %p273 = pneg %p123
        %p274 = pneg %p147
        %p275 = pneg %p144
        %p276 = pneg %p168
        %p277 = pneg %p165
        %p278 = pneg %p194
        %p279 = pneg %p191
        %s280 = sand.u32 %s181, 1
        %s281 = scalar_lea.sflag [#allocation3], %s280
        %s282 = sand.u32 %s181, 1
        %s283 = smul.addr %s282, 256
        %s284 = scalar_lea.vmem [#allocation2], %s283
        %s285 = smul.u32 64, %s21
        %s286 = ssub.s32 125, %s285
        %p287 = scmp.lt.s32.totalorder %s286, 64
        %s288 = scalar_select %p287, %s286, 64
        %s289 = smul.u32 128, %s288
        %p290 = scmp.lt.s32.totalorder %s285, 124
        %s291 = scalar_select %p290, %s285, 124
        %s292 = smul.addr %s291, 8
        %s293 = scalar_lea.vmem %s0, %s292
        %s294 = smul.u32 64, %s21
        %s295 = ssub.s32 125, %s294
        %p296 = scmp.lt.s32.totalorder %s295, 64
        %s297 = scalar_select %p296, %s295, 64
        %s298 = smul.u32 128, %s297
        %s299 = smul.u32 64, %s21
        %s300 = ssub.s32 125, %s299
        %p301 = scmp.lt.s32.totalorder %s300, 64
        %s302 = scalar_select %p301, %s300, 64
        %s303 = smul.u32 64, %s302
        %v305 = vld [vmem:[%s293] sm:$0xff]
        %v306 = vld [vmem:[%s293 + $0x8] sm:$0xff]
        %v307 = vld [vmem:[%s293 + $0x10] sm:$0xff]
        %v308 = vld [vmem:[%s293 + $0x18] sm:$0xff]
        %v309 = vld [vmem:[%s293 + $0x20] sm:$0xff]
        %v310 = vld [vmem:[%s293 + $0x28] sm:$0xff]
        %v311 = vld [vmem:[%s293 + $0x30] sm:$0xff]
        %v312 = vld [vmem:[%s293 + $0x38] sm:$0xff]
        %v313 = vld [vmem:[%s293 + $0x40] sm:$0xff]
        %v314 = vld [vmem:[%s293 + $0x48] sm:$0xff]
        %v315 = vld [vmem:[%s293 + $0x50] sm:$0xff]
        %v316 = vld [vmem:[%s293 + $0x58] sm:$0xff]
        %v317 = vld [vmem:[%s293 + $0x60] sm:$0xff]
        %v318 = vld [vmem:[%s293 + $0x68] sm:$0xff]
        %v319 = vld [vmem:[%s293 + $0x70] sm:$0xff]
        %v320 = vld [vmem:[%s293 + $0x78] sm:$0xff]
        %v321 = vld [vmem:[%s293 + $0x80] sm:$0xff]
        %v322 = vld [vmem:[%s293 + $0x88] sm:$0xff]
        %v323 = vld [vmem:[%s293 + $0x90] sm:$0xff]
        %v324 = vld [vmem:[%s293 + $0x98] sm:$0xff]
        %v325 = vld [vmem:[%s293 + $0xa0] sm:$0xff]
        %v326 = vld [vmem:[%s293 + $0xa8] sm:$0xff]
        %v327 = vld [vmem:[%s293 + $0xb0] sm:$0xff]
        %v328 = vld [vmem:[%s293 + $0xb8] sm:$0xff]
        %v329 = vld [vmem:[%s293 + $0xc0] sm:$0xff]
        %v330 = vld [vmem:[%s293 + $0xc8] sm:$0xff]
        %v331 = vld [vmem:[%s293 + $0xd0] sm:$0xff]
        %v332 = vld [vmem:[%s293 + $0xd8] sm:$0xff]
        %v333 = vld [vmem:[%s293 + $0xe0] sm:$0xff]
        %v334 = vld [vmem:[%s293 + $0xe8] sm:$0xff]
        %v335 = vld [vmem:[%s293 + $0xf0] sm:$0xff]
        %v336 = vld [vmem:[%s293 + $0xf8] sm:$0xff]
        %v337 = vld [vmem:[%s293 + $0x100] sm:$0xff]
        %v338 = vld [vmem:[%s293 + $0x108] sm:$0xff]
        %v339 = vld [vmem:[%s293 + $0x110] sm:$0xff]
        %v340 = vld [vmem:[%s293 + $0x118] sm:$0xff]
        %v341 = vld [vmem:[%s293 + $0x120] sm:$0xff]
        %v342 = vld [vmem:[%s293 + $0x128] sm:$0xff]
        %v343 = vld [vmem:[%s293 + $0x130] sm:$0xff]
        %v344 = vld [vmem:[%s293 + $0x138] sm:$0xff]
        %v345 = vld [vmem:[%s293 + $0x140] sm:$0xff]
        %v346 = vld [vmem:[%s293 + $0x148] sm:$0xff]
        %v347 = vld [vmem:[%s293 + $0x150] sm:$0xff]
        %v348 = vld [vmem:[%s293 + $0x158] sm:$0xff]
        %v349 = vld [vmem:[%s293 + $0x160] sm:$0xff]
        %v350 = vld [vmem:[%s293 + $0x168] sm:$0xff]
        %v351 = vld [vmem:[%s293 + $0x170] sm:$0xff]
        %v352 = vld [vmem:[%s293 + $0x178] sm:$0xff]
        %v353 = vld [vmem:[%s293 + $0x180] sm:$0xff]
        %v354 = vld [vmem:[%s293 + $0x188] sm:$0xff]
        %v355 = vld [vmem:[%s293 + $0x190] sm:$0xff]
        %v356 = vld [vmem:[%s293 + $0x198] sm:$0xff]
        %v357 = vld [vmem:[%s293 + $0x1a0] sm:$0xff]
        %v358 = vld [vmem:[%s293 + $0x1a8] sm:$0xff]
        %v359 = vld [vmem:[%s293 + $0x1b0] sm:$0xff]
        %v360 = vld [vmem:[%s293 + $0x1b8] sm:$0xff]
        %v361 = vld [vmem:[%s293 + $0x1c0] sm:$0xff]
        %v362 = vld [vmem:[%s293 + $0x1c8] sm:$0xff]
        %v363 = vld [vmem:[%s293 + $0x1d0] sm:$0xff]
        %v364 = vld [vmem:[%s293 + $0x1d8] sm:$0xff]
        %v365 = vld [vmem:[%s293 + $0x1e0] sm:$0xff]
        %v366 = vld [vmem:[%s293 + $0x1e8] sm:$0xff]
        %v367 = vld [vmem:[%s293 + $0x1f0] sm:$0xff]
        %v368 = vld [vmem:[%s293 + $0x1f8] sm:$0xff]
        %v369 = vpack.c.bf16 %v306, %v305
        %v370 = vpack.c.bf16 %v308, %v307
        %v371 = vpack.c.bf16 %v310, %v309
        %v372 = vpack.c.bf16 %v312, %v311
        %v373 = vpack.c.bf16 %v314, %v313
        %v374 = vpack.c.bf16 %v316, %v315
        %v375 = vpack.c.bf16 %v318, %v317
        %v376 = vpack.c.bf16 %v320, %v319
        %v377 = vpack.c.bf16 %v322, %v321
        %v378 = vpack.c.bf16 %v324, %v323
        %v379 = vpack.c.bf16 %v326, %v325
        %v380 = vpack.c.bf16 %v328, %v327
        %v381 = vpack.c.bf16 %v330, %v329
        %v382 = vpack.c.bf16 %v332, %v331
        %v383 = vpack.c.bf16 %v334, %v333
        %v384 = vpack.c.bf16 %v336, %v335
        %v385 = vpack.c.bf16 %v338, %v337
        %v386 = vpack.c.bf16 %v340, %v339
        %v387 = vpack.c.bf16 %v342, %v341
        %v388 = vpack.c.bf16 %v344, %v343
        %v389 = vpack.c.bf16 %v346, %v345
        %v390 = vpack.c.bf16 %v348, %v347
        %v391 = vpack.c.bf16 %v350, %v349
        %v392 = vpack.c.bf16 %v352, %v351
        %v393 = vpack.c.bf16 %v354, %v353
        %v394 = vpack.c.bf16 %v356, %v355
        %v395 = vpack.c.bf16 %v358, %v357
        %v396 = vpack.c.bf16 %v360, %v359
        %v397 = vpack.c.bf16 %v362, %v361
        %v398 = vpack.c.bf16 %v364, %v363
        %v399 = vpack.c.bf16 %v366, %v365
        %v400 = vpack.c.bf16 %v368, %v367
        %v401 = vld [vmem:[%s1] sm:$0xff]
        %v402 = vld [vmem:[%s1 + $0x8] sm:$0xff]
        %v403 = vld [vmem:[%s1 + $0x10] sm:$0xff]
        %v404 = vld [vmem:[%s1 + $0x18] sm:$0xff]
        %v405 = vld [vmem:[%s1 + $0x20] sm:$0xff]
        %v406 = vld [vmem:[%s1 + $0x28] sm:$0xff]
        %v407 = vld [vmem:[%s1 + $0x30] sm:$0xff]
        %v408 = vld [vmem:[%s1 + $0x38] sm:$0xff]
        %v409 = vld [vmem:[%s1 + $0x40] sm:$0xff]
        %v410 = vld [vmem:[%s1 + $0x48] sm:$0xff]
        %v411 = vld [vmem:[%s1 + $0x50] sm:$0xff]
        %v412 = vld [vmem:[%s1 + $0x58] sm:$0xff]
        %v413 = vld [vmem:[%s1 + $0x60] sm:$0x33]
        %v414 = vld [vmem:[%s2] sm:$0x3]
        %v416 = vlaneseq
        %v417 = vshrl.u32 %v416, 7
        %v418 = vsub.s32 0, %v417
        %v419 = vrot.slane %v414, %v418
        %v420 = vlaneseq
        %v421 = vshrl.u32 %v420, 7
        %v422 = vsub.s32 1, %v421
        %v423 = vrot.slane %v414, %v422
        %v439 = vunpack.c.l.b16 %v401
        %v440 = vunpack.c.h.b16 %v401
        %v441 = vunpack.c.l.b16 %v402
        %v442 = vunpack.c.h.b16 %v402
        %v443 = vunpack.c.l.b16 %v403
        %v444 = vunpack.c.h.b16 %v403
        %v445 = vunpack.c.l.b16 %v404
        %v446 = vunpack.c.h.b16 %v404
        %v447 = vunpack.c.l.b16 %v405
        %v448 = vunpack.c.h.b16 %v405
        %v449 = vunpack.c.l.b16 %v406
        %v450 = vunpack.c.h.b16 %v406
        %v451 = vunpack.c.l.b16 %v407
        %v452 = vunpack.c.h.b16 %v407
        %v453 = vunpack.c.l.b16 %v408
        %v454 = vunpack.c.h.b16 %v408
        %v455 = vunpack.c.l.b16 %v409
        %v456 = vunpack.c.h.b16 %v409
        %v457 = vunpack.c.l.b16 %v410
        %v458 = vunpack.c.h.b16 %v410
        %v459 = vunpack.c.l.b16 %v411
        %v460 = vunpack.c.h.b16 %v411
        %v461 = vunpack.c.l.b16 %v412
        %v462 = vunpack.c.h.b16 %v412
        %v463 = vunpack.c.l.b16 %v413
        %v464 = vunpack.c.h.b16 %v413
        %v465 = vpack.c.b16 %v441, %v439
        %v466 = vpack.c.b16 %v442, %v440
        %v467 = vpack.c.b16 %v445, %v443
        %v468 = vpack.c.b16 %v446, %v444
        %v469 = vpack.c.b16 %v449, %v447
        %v470 = vpack.c.b16 %v450, %v448
        %v471 = vpack.c.b16 %v453, %v451
        %v472 = vpack.c.b16 %v454, %v452
        %v473 = vpack.c.b16 %v457, %v455
        %v474 = vpack.c.b16 %v458, %v456
        %v475 = vpack.c.b16 %v461, %v459
        %v476 = vpack.c.b16 %v462, %v460
        %v477 = vpack.c.b16 %v463, %v463
        %v478 = vpack.c.b16 %v464, %v464
        %vm491 = vcmask 818176
        %v493 = vsel %vm491, %v369, 0
        %v496 = vsel %vm491, %v370, 0
        %v499 = vsel %vm491, %v371, 0
        %v502 = vsel %vm491, %v372, 0
        %v505 = vsel %vm491, %v373, 0
        %v508 = vsel %vm491, %v374, 0
        %v511 = vsel %vm491, %v375, 0
        %v514 = vsel %vm491, %v376, 0
        %v517 = vsel %vm491, %v377, 0
        %v520 = vsel %vm491, %v378, 0
        %v523 = vsel %vm491, %v379, 0
        %v526 = vsel %vm491, %v380, 0
        %v529 = vsel %vm491, %v381, 0
        %v532 = vsel %vm491, %v382, 0
        %v535 = vsel %vm491, %v383, 0
        %v538 = vsel %vm491, %v384, 0
        %v541 = vsel %vm491, %v385, 0
        %v544 = vsel %vm491, %v386, 0
        %v547 = vsel %vm491, %v387, 0
        %v550 = vsel %vm491, %v388, 0
        %v553 = vsel %vm491, %v389, 0
        %v556 = vsel %vm491, %v390, 0
        %v559 = vsel %vm491, %v391, 0
        %v562 = vsel %vm491, %v392, 0
        %v565 = vsel %vm491, %v393, 0
        %v568 = vsel %vm491, %v394, 0
        %v571 = vsel %vm491, %v395, 0
        %v574 = vsel %vm491, %v396, 0
        %v577 = vsel %vm491, %v397, 0
        %v580 = vsel %vm491, %v398, 0
        %v583 = vsel %vm491, %v399, 0
        %v586 = vsel %vm491, %v400, 0
        %vm588 = vcmask 1041408
        %v590 = vsel %vm588, %v477, 0
        %v593 = vsel %vm588, %v478, 0
        %595 = vmatprep.subr.bf16.mxu0 0
        %596 = vmatpush1.bf16.msra.mxu0 0
        %597 = vmatprep.subr.bf16.mxu0 %v593
        %598 = vmatpush1.bf16.msra.mxu0 %v590
        %599 = vmatprep.subr.bf16.mxu0 %v476
        %600 = vmatpush1.bf16.msra.mxu0 %v475
        %601 = vmatprep.subr.bf16.mxu0 %v474
        %602 = vmatpush1.bf16.msra.mxu0 %v473
        %603 = vmatprep.subr.bf16.mxu0 %v472
        %604 = vmatpush1.bf16.msra.mxu0 %v471
        %605 = vmatprep.subr.bf16.mxu0 %v470
        %606 = vmatpush1.bf16.msra.mxu0 %v469
        %607 = vmatprep.subr.bf16.mxu0 %v468
        %608 = vmatpush1.bf16.msra.mxu0 %v467
        %609 = vmatprep.subr.bf16.mxu0 %v466
        %610 = vmatpush1.bf16.msra.mxu0 %v465
        %611 = vmatprep.subr.bf16.mxu0 0
        %612 = vmatpush2.bf16.msra.mxu0 0
        %613 = vmatprep.subr.bf16.mxu0 0
        %614 = vmatpush2.bf16.msra.mxu0 0
        %615 = vmatprep.subr.bf16.mxu0 0
        %616 = vmatpush2.bf16.msra.mxu0 0
        %617 = vmatprep.subr.bf16.mxu0 0
        %618 = vmatpush2.bf16.msra.mxu0 0
        %619 = vmatprep.subr.bf16.mxu0 0
        %620 = vmatpush2.bf16.msra.mxu0 0
        %621 = vmatprep.subr.bf16.mxu0 0
        %622 = vmatpush2.bf16.msra.mxu0 0
        %623 = vmatprep.subr.bf16.mxu0 0
        %624 = vmatpush2.bf16.msra.mxu0 0
        %625 = vmatprep.subr.bf16.mxu0 0
        %626 = vmatpush2.bf16.msra.mxu0 0
        %627 = vmatprep.mubr.bf16.mxu0 0
        %628 = vmatmul.mubr.bf16.gmra.mxu0 %v493
        %v629 = vpop.f32.mrf.mxu0
        %v630 = vadd.f32 %v419, %v629
        %v631 = vpop.f32.mrf.mxu0
        %v632 = vadd.f32 %v423, %v631
        %v633 = vpop.f32.mrf.mxu0
        %v634 = vadd.f32 %v419, %v633
        %v635 = vpop.f32.mrf.mxu0
        %v636 = vadd.f32 %v423, %v635
        %637 = vmatprep.mubr.bf16.mxu0 0
        %638 = vmatmul.mubr.bf16.gmra.mxu0 %v496
        %v639 = vpop.f32.mrf.mxu0
        %v640 = vadd.f32 %v419, %v639
        %v641 = vpop.f32.mrf.mxu0
        %v642 = vadd.f32 %v423, %v641
        %v643 = vpop.f32.mrf.mxu0
        %v644 = vadd.f32 %v419, %v643
        %v645 = vpop.f32.mrf.mxu0
        %v646 = vadd.f32 %v423, %v645
        %647 = vmatprep.mubr.bf16.mxu0 0
        %648 = vmatmul.mubr.bf16.gmra.mxu0 %v499
        %v649 = vpop.f32.mrf.mxu0
        %v650 = vadd.f32 %v419, %v649
        %v651 = vpop.f32.mrf.mxu0
        %v652 = vadd.f32 %v423, %v651
        %v653 = vpop.f32.mrf.mxu0
        %v654 = vadd.f32 %v419, %v653
        %v655 = vpop.f32.mrf.mxu0
        %v656 = vadd.f32 %v423, %v655
        %657 = vmatprep.mubr.bf16.mxu0 0
        %658 = vmatmul.mubr.bf16.gmra.mxu0 %v502
        %v659 = vpop.f32.mrf.mxu0
        %v660 = vadd.f32 %v419, %v659
        %v661 = vpop.f32.mrf.mxu0
        %v662 = vadd.f32 %v423, %v661
        %v663 = vpop.f32.mrf.mxu0
        %v664 = vadd.f32 %v419, %v663
        %v665 = vpop.f32.mrf.mxu0
        %v666 = vadd.f32 %v423, %v665
        %667 = vmatprep.mubr.bf16.mxu0 0
        %668 = vmatmul.mubr.bf16.gmra.mxu0 %v505
        %v669 = vpop.f32.mrf.mxu0
        %v670 = vadd.f32 %v419, %v669
        %v671 = vpop.f32.mrf.mxu0
        %v672 = vadd.f32 %v423, %v671
        %v673 = vpop.f32.mrf.mxu0
        %v674 = vadd.f32 %v419, %v673
        %v675 = vpop.f32.mrf.mxu0
        %v676 = vadd.f32 %v423, %v675
        %677 = vmatprep.mubr.bf16.mxu0 0
        %678 = vmatmul.mubr.bf16.gmra.mxu0 %v508
        %v679 = vpop.f32.mrf.mxu0
        %v680 = vadd.f32 %v419, %v679
        %v681 = vpop.f32.mrf.mxu0
        %v682 = vadd.f32 %v423, %v681
        %v683 = vpop.f32.mrf.mxu0
        %v684 = vadd.f32 %v419, %v683
        %v685 = vpop.f32.mrf.mxu0
        %v686 = vadd.f32 %v423, %v685
        %687 = vmatprep.mubr.bf16.mxu0 0
        %688 = vmatmul.mubr.bf16.gmra.mxu0 %v511
        %v689 = vpop.f32.mrf.mxu0
        %v690 = vadd.f32 %v419, %v689
        %v691 = vpop.f32.mrf.mxu0
        %v692 = vadd.f32 %v423, %v691
        %v693 = vpop.f32.mrf.mxu0
        %v694 = vadd.f32 %v419, %v693
        %v695 = vpop.f32.mrf.mxu0
        %v696 = vadd.f32 %v423, %v695
        %697 = vmatprep.mubr.bf16.mxu0 0
        %698 = vmatmul.mubr.bf16.gmra.mxu0 %v514
        %v699 = vpop.f32.mrf.mxu0
        %v700 = vadd.f32 %v419, %v699
        %v701 = vpop.f32.mrf.mxu0
        %v702 = vadd.f32 %v423, %v701
        %v703 = vpop.f32.mrf.mxu0
        %v704 = vadd.f32 %v419, %v703
        %v705 = vpop.f32.mrf.mxu0
        %v706 = vadd.f32 %v423, %v705
        %707 = vmatprep.mubr.bf16.mxu0 0
        %708 = vmatmul.mubr.bf16.gmra.mxu0 %v517
        %v709 = vpop.f32.mrf.mxu0
        %v710 = vadd.f32 %v419, %v709
        %v711 = vpop.f32.mrf.mxu0
        %v712 = vadd.f32 %v423, %v711
        %v713 = vpop.f32.mrf.mxu0
        %v714 = vadd.f32 %v419, %v713
        %v715 = vpop.f32.mrf.mxu0
        %v716 = vadd.f32 %v423, %v715
        %717 = vmatprep.mubr.bf16.mxu0 0
        %718 = vmatmul.mubr.bf16.gmra.mxu0 %v520
        %v719 = vpop.f32.mrf.mxu0
        %v720 = vadd.f32 %v419, %v719
        %v721 = vpop.f32.mrf.mxu0
        %v722 = vadd.f32 %v423, %v721
        %v723 = vpop.f32.mrf.mxu0
        %v724 = vadd.f32 %v419, %v723
        %v725 = vpop.f32.mrf.mxu0
        %v726 = vadd.f32 %v423, %v725
        %727 = vmatprep.mubr.bf16.mxu0 0
        %728 = vmatmul.mubr.bf16.gmra.mxu0 %v523
        %v729 = vpop.f32.mrf.mxu0
        %v730 = vadd.f32 %v419, %v729
        %v731 = vpop.f32.mrf.mxu0
        %v732 = vadd.f32 %v423, %v731
        %v733 = vpop.f32.mrf.mxu0
        %v734 = vadd.f32 %v419, %v733
        %v735 = vpop.f32.mrf.mxu0
        %v736 = vadd.f32 %v423, %v735
        %737 = vmatprep.mubr.bf16.mxu0 0
        %738 = vmatmul.mubr.bf16.gmra.mxu0 %v526
        %v739 = vpop.f32.mrf.mxu0
        %v740 = vadd.f32 %v419, %v739
        %v741 = vpop.f32.mrf.mxu0
        %v742 = vadd.f32 %v423, %v741
        %v743 = vpop.f32.mrf.mxu0
        %v744 = vadd.f32 %v419, %v743
        %v745 = vpop.f32.mrf.mxu0
        %v746 = vadd.f32 %v423, %v745
        %747 = vmatprep.mubr.bf16.mxu0 0
        %748 = vmatmul.mubr.bf16.gmra.mxu0 %v529
        %v749 = vpop.f32.mrf.mxu0
        %v750 = vadd.f32 %v419, %v749
        %v751 = vpop.f32.mrf.mxu0
        %v752 = vadd.f32 %v423, %v751
        %v753 = vpop.f32.mrf.mxu0
        %v754 = vadd.f32 %v419, %v753
        %v755 = vpop.f32.mrf.mxu0
        %v756 = vadd.f32 %v423, %v755
        %757 = vmatprep.mubr.bf16.mxu0 0
        %758 = vmatmul.mubr.bf16.gmra.mxu0 %v532
        %v759 = vpop.f32.mrf.mxu0
        %v760 = vadd.f32 %v419, %v759
        %v761 = vpop.f32.mrf.mxu0
        %v762 = vadd.f32 %v423, %v761
        %v763 = vpop.f32.mrf.mxu0
        %v764 = vadd.f32 %v419, %v763
        %v765 = vpop.f32.mrf.mxu0
        %v766 = vadd.f32 %v423, %v765
        %767 = vmatprep.mubr.bf16.mxu0 0
        %768 = vmatmul.mubr.bf16.gmra.mxu0 %v535
        %v769 = vpop.f32.mrf.mxu0
        %v770 = vadd.f32 %v419, %v769
        %v771 = vpop.f32.mrf.mxu0
        %v772 = vadd.f32 %v423, %v771
        %v773 = vpop.f32.mrf.mxu0
        %v774 = vadd.f32 %v419, %v773
        %v775 = vpop.f32.mrf.mxu0
        %v776 = vadd.f32 %v423, %v775
        %777 = vmatprep.mubr.bf16.mxu0 0
        %778 = vmatmul.mubr.bf16.gmra.mxu0 %v538
        %v779 = vpop.f32.mrf.mxu0
        %v780 = vadd.f32 %v419, %v779
        %v781 = vpop.f32.mrf.mxu0
        %v782 = vadd.f32 %v423, %v781
        %v783 = vpop.f32.mrf.mxu0
        %v784 = vadd.f32 %v419, %v783
        %v785 = vpop.f32.mrf.mxu0
        %v786 = vadd.f32 %v423, %v785
        %787 = vmatprep.mubr.bf16.mxu0 0
        %788 = vmatmul.mubr.bf16.gmra.mxu0 %v541
        %v789 = vpop.f32.mrf.mxu0
        %v790 = vadd.f32 %v419, %v789
        %v791 = vpop.f32.mrf.mxu0
        %v792 = vadd.f32 %v423, %v791
        %v793 = vpop.f32.mrf.mxu0
        %v794 = vadd.f32 %v419, %v793
        %v795 = vpop.f32.mrf.mxu0
        %v796 = vadd.f32 %v423, %v795
        %797 = vmatprep.mubr.bf16.mxu0 0
        %798 = vmatmul.mubr.bf16.gmra.mxu0 %v544
        %v799 = vpop.f32.mrf.mxu0
        %v800 = vadd.f32 %v419, %v799
        %v801 = vpop.f32.mrf.mxu0
        %v802 = vadd.f32 %v423, %v801
        %v803 = vpop.f32.mrf.mxu0
        %v804 = vadd.f32 %v419, %v803
        %v805 = vpop.f32.mrf.mxu0
        %v806 = vadd.f32 %v423, %v805
        %807 = vmatprep.mubr.bf16.mxu0 0
        %808 = vmatmul.mubr.bf16.gmra.mxu0 %v547
        %v809 = vpop.f32.mrf.mxu0
        %v810 = vadd.f32 %v419, %v809
        %v811 = vpop.f32.mrf.mxu0
        %v812 = vadd.f32 %v423, %v811
        %v813 = vpop.f32.mrf.mxu0
        %v814 = vadd.f32 %v419, %v813
        %v815 = vpop.f32.mrf.mxu0
        %v816 = vadd.f32 %v423, %v815
        %817 = vmatprep.mubr.bf16.mxu0 0
        %818 = vmatmul.mubr.bf16.gmra.mxu0 %v550
        %v819 = vpop.f32.mrf.mxu0
        %v820 = vadd.f32 %v419, %v819
        %v821 = vpop.f32.mrf.mxu0
        %v822 = vadd.f32 %v423, %v821
        %v823 = vpop.f32.mrf.mxu0
        %v824 = vadd.f32 %v419, %v823
        %v825 = vpop.f32.mrf.mxu0
        %v826 = vadd.f32 %v423, %v825
        %827 = vmatprep.mubr.bf16.mxu0 0
        %828 = vmatmul.mubr.bf16.gmra.mxu0 %v553
        %v829 = vpop.f32.mrf.mxu0
        %v830 = vadd.f32 %v419, %v829
        %v831 = vpop.f32.mrf.mxu0
        %v832 = vadd.f32 %v423, %v831
        %v833 = vpop.f32.mrf.mxu0
        %v834 = vadd.f32 %v419, %v833
        %v835 = vpop.f32.mrf.mxu0
        %v836 = vadd.f32 %v423, %v835
        %837 = vmatprep.mubr.bf16.mxu0 0
        %838 = vmatmul.mubr.bf16.gmra.mxu0 %v556
        %v839 = vpop.f32.mrf.mxu0
        %v840 = vadd.f32 %v419, %v839
        %v841 = vpop.f32.mrf.mxu0
        %v842 = vadd.f32 %v423, %v841
        %v843 = vpop.f32.mrf.mxu0
        %v844 = vadd.f32 %v419, %v843
        %v845 = vpop.f32.mrf.mxu0
        %v846 = vadd.f32 %v423, %v845
        %847 = vmatprep.mubr.bf16.mxu0 0
        %848 = vmatmul.mubr.bf16.gmra.mxu0 %v559
        %v849 = vpop.f32.mrf.mxu0
        %v850 = vadd.f32 %v419, %v849
        %v851 = vpop.f32.mrf.mxu0
        %v852 = vadd.f32 %v423, %v851
        %v853 = vpop.f32.mrf.mxu0
        %v854 = vadd.f32 %v419, %v853
        %v855 = vpop.f32.mrf.mxu0
        %v856 = vadd.f32 %v423, %v855
        %857 = vmatprep.mubr.bf16.mxu0 0
        %858 = vmatmul.mubr.bf16.gmra.mxu0 %v562
        %v859 = vpop.f32.mrf.mxu0
        %v860 = vadd.f32 %v419, %v859
        %v861 = vpop.f32.mrf.mxu0
        %v862 = vadd.f32 %v423, %v861
        %v863 = vpop.f32.mrf.mxu0
        %v864 = vadd.f32 %v419, %v863
        %v865 = vpop.f32.mrf.mxu0
        %v866 = vadd.f32 %v423, %v865
        %867 = vmatprep.mubr.bf16.mxu0 0
        %868 = vmatmul.mubr.bf16.gmra.mxu0 %v565
        %v869 = vpop.f32.mrf.mxu0
        %v870 = vadd.f32 %v419, %v869
        %v871 = vpop.f32.mrf.mxu0
        %v872 = vadd.f32 %v423, %v871
        %v873 = vpop.f32.mrf.mxu0
        %v874 = vadd.f32 %v419, %v873
        %v875 = vpop.f32.mrf.mxu0
        %v876 = vadd.f32 %v423, %v875
        %877 = vmatprep.mubr.bf16.mxu0 0
        %878 = vmatmul.mubr.bf16.gmra.mxu0 %v568
        %v879 = vpop.f32.mrf.mxu0
        %v880 = vadd.f32 %v419, %v879
        %v881 = vpop.f32.mrf.mxu0
        %v882 = vadd.f32 %v423, %v881
        %v883 = vpop.f32.mrf.mxu0
        %v884 = vadd.f32 %v419, %v883
        %v885 = vpop.f32.mrf.mxu0
        %v886 = vadd.f32 %v423, %v885
        %887 = vmatprep.mubr.bf16.mxu0 0
        %888 = vmatmul.mubr.bf16.gmra.mxu0 %v571
        %v889 = vpop.f32.mrf.mxu0
        %v890 = vadd.f32 %v419, %v889
        %v891 = vpop.f32.mrf.mxu0
        %v892 = vadd.f32 %v423, %v891
        %v893 = vpop.f32.mrf.mxu0
        %v894 = vadd.f32 %v419, %v893
        %v895 = vpop.f32.mrf.mxu0
        %v896 = vadd.f32 %v423, %v895
        %897 = vmatprep.mubr.bf16.mxu0 0
        %898 = vmatmul.mubr.bf16.gmra.mxu0 %v574
        %v899 = vpop.f32.mrf.mxu0
        %v900 = vadd.f32 %v419, %v899
        %v901 = vpop.f32.mrf.mxu0
        %v902 = vadd.f32 %v423, %v901
        %v903 = vpop.f32.mrf.mxu0
        %v904 = vadd.f32 %v419, %v903
        %v905 = vpop.f32.mrf.mxu0
        %v906 = vadd.f32 %v423, %v905
        %907 = vmatprep.mubr.bf16.mxu0 0
        %908 = vmatmul.mubr.bf16.gmra.mxu0 %v577
        %v909 = vpop.f32.mrf.mxu0
        %v910 = vadd.f32 %v419, %v909
        %v911 = vpop.f32.mrf.mxu0
        %v912 = vadd.f32 %v423, %v911
        %v913 = vpop.f32.mrf.mxu0
        %v914 = vadd.f32 %v419, %v913
        %v915 = vpop.f32.mrf.mxu0
        %v916 = vadd.f32 %v423, %v915
        %917 = vmatprep.mubr.bf16.mxu0 0
        %918 = vmatmul.mubr.bf16.gmra.mxu0 %v580
        %v919 = vpop.f32.mrf.mxu0
        %v920 = vadd.f32 %v419, %v919
        %v921 = vpop.f32.mrf.mxu0
        %v922 = vadd.f32 %v423, %v921
        %v923 = vpop.f32.mrf.mxu0
        %v924 = vadd.f32 %v419, %v923
        %v925 = vpop.f32.mrf.mxu0
        %v926 = vadd.f32 %v423, %v925
        %927 = vmatprep.mubr.bf16.mxu0 0
        %928 = vmatmul.mubr.bf16.gmra.mxu0 %v583
        %v929 = vpop.f32.mrf.mxu0
        %v930 = vadd.f32 %v419, %v929
        %v931 = vpop.f32.mrf.mxu0
        %v932 = vadd.f32 %v423, %v931
        %v933 = vpop.f32.mrf.mxu0
        %v934 = vadd.f32 %v419, %v933
        %v935 = vpop.f32.mrf.mxu0
        %v936 = vadd.f32 %v423, %v935
        %937 = vmatprep.mubr.bf16.mxu0 0
        %938 = vmatmul.mubr.bf16.gmra.mxu0 %v586
        %v939 = vpop.f32.mrf.mxu0
        %v940 = vadd.f32 %v419, %v939
        %v941 = vpop.f32.mrf.mxu0
        %v942 = vadd.f32 %v423, %v941
        %v943 = vpop.f32.mrf.mxu0
        %v944 = vadd.f32 %v419, %v943
        %v945 = vpop.f32.mrf.mxu0
        %v946 = vadd.f32 %v423, %v945
        %947 = vdwg.mxu0
        %v948 = vmax.f32 %v630, 0.0
        %v949 = vmax.f32 %v632, 0.0
        %v950 = vmax.f32 %v634, 0.0
        %v951 = vmax.f32 %v636, 0.0
        %v952 = vmax.f32 %v640, 0.0
        %v953 = vmax.f32 %v642, 0.0
        %v954 = vmax.f32 %v644, 0.0
        %v955 = vmax.f32 %v646, 0.0
        %v956 = vmax.f32 %v650, 0.0
        %v957 = vmax.f32 %v652, 0.0
        %v958 = vmax.f32 %v654, 0.0
        %v959 = vmax.f32 %v656, 0.0
        %v960 = vmax.f32 %v660, 0.0
        %v961 = vmax.f32 %v662, 0.0
        %v962 = vmax.f32 %v664, 0.0
        %v963 = vmax.f32 %v666, 0.0
        %v964 = vmax.f32 %v670, 0.0
        %v965 = vmax.f32 %v672, 0.0
        %v966 = vmax.f32 %v674, 0.0
        %v967 = vmax.f32 %v676, 0.0
        %v968 = vmax.f32 %v680, 0.0
        %v969 = vmax.f32 %v682, 0.0
        %v970 = vmax.f32 %v684, 0.0
        %v971 = vmax.f32 %v686, 0.0
        %v972 = vmax.f32 %v690, 0.0
        %v973 = vmax.f32 %v692, 0.0
        %v974 = vmax.f32 %v694, 0.0
        %v975 = vmax.f32 %v696, 0.0
        %v976 = vmax.f32 %v700, 0.0
        %v977 = vmax.f32 %v702, 0.0
        %v978 = vmax.f32 %v704, 0.0
        %v979 = vmax.f32 %v706, 0.0
        %v980 = vmax.f32 %v710, 0.0
        %v981 = vmax.f32 %v712, 0.0
        %v982 = vmax.f32 %v714, 0.0
        %v983 = vmax.f32 %v716, 0.0
        %v984 = vmax.f32 %v720, 0.0
        %v985 = vmax.f32 %v722, 0.0
        %v986 = vmax.f32 %v724, 0.0
        %v987 = vmax.f32 %v726, 0.0
        %v988 = vmax.f32 %v730, 0.0
        %v989 = vmax.f32 %v732, 0.0
        %v990 = vmax.f32 %v734, 0.0
        %v991 = vmax.f32 %v736, 0.0
        %v992 = vmax.f32 %v740, 0.0
        %v993 = vmax.f32 %v742, 0.0
        %v994 = vmax.f32 %v744, 0.0
        %v995 = vmax.f32 %v746, 0.0
        %v996 = vmax.f32 %v750, 0.0
        %v997 = vmax.f32 %v752, 0.0
        %v998 = vmax.f32 %v754, 0.0
        %v999 = vmax.f32 %v756, 0.0
        %v1000 = vmax.f32 %v760, 0.0
        %v1001 = vmax.f32 %v762, 0.0
        %v1002 = vmax.f32 %v764, 0.0
        %v1003 = vmax.f32 %v766, 0.0
        %v1004 = vmax.f32 %v770, 0.0
        %v1005 = vmax.f32 %v772, 0.0
        %v1006 = vmax.f32 %v774, 0.0
        %v1007 = vmax.f32 %v776, 0.0
        %v1008 = vmax.f32 %v780, 0.0
        %v1009 = vmax.f32 %v782, 0.0
        %v1010 = vmax.f32 %v784, 0.0
        %v1011 = vmax.f32 %v786, 0.0
        %v1012 = vmax.f32 %v790, 0.0
        %v1013 = vmax.f32 %v792, 0.0
        %v1014 = vmax.f32 %v794, 0.0
        %v1015 = vmax.f32 %v796, 0.0
        %v1016 = vmax.f32 %v800, 0.0
        %v1017 = vmax.f32 %v802, 0.0
        %v1018 = vmax.f32 %v804, 0.0
        %v1019 = vmax.f32 %v806, 0.0
        %v1020 = vmax.f32 %v810, 0.0
        %v1021 = vmax.f32 %v812, 0.0
        %v1022 = vmax.f32 %v814, 0.0
        %v1023 = vmax.f32 %v816, 0.0
        %v1024 = vmax.f32 %v820, 0.0
        %v1025 = vmax.f32 %v822, 0.0
        %v1026 = vmax.f32 %v824, 0.0
        %v1027 = vmax.f32 %v826, 0.0
        %v1028 = vmax.f32 %v830, 0.0
        %v1029 = vmax.f32 %v832, 0.0
        %v1030 = vmax.f32 %v834, 0.0
        %v1031 = vmax.f32 %v836, 0.0
        %v1032 = vmax.f32 %v840, 0.0
        %v1033 = vmax.f32 %v842, 0.0
        %v1034 = vmax.f32 %v844, 0.0
        %v1035 = vmax.f32 %v846, 0.0
        %v1036 = vmax.f32 %v850, 0.0
        %v1037 = vmax.f32 %v852, 0.0
        %v1038 = vmax.f32 %v854, 0.0
        %v1039 = vmax.f32 %v856, 0.0
        %v1040 = vmax.f32 %v860, 0.0
        %v1041 = vmax.f32 %v862, 0.0
        %v1042 = vmax.f32 %v864, 0.0
        %v1043 = vmax.f32 %v866, 0.0
        %v1044 = vmax.f32 %v870, 0.0
        %v1045 = vmax.f32 %v872, 0.0
        %v1046 = vmax.f32 %v874, 0.0
        %v1047 = vmax.f32 %v876, 0.0
        %v1048 = vmax.f32 %v880, 0.0
        %v1049 = vmax.f32 %v882, 0.0
        %v1050 = vmax.f32 %v884, 0.0
        %v1051 = vmax.f32 %v886, 0.0
        %v1052 = vmax.f32 %v890, 0.0
        %v1053 = vmax.f32 %v892, 0.0
        %v1054 = vmax.f32 %v894, 0.0
        %v1055 = vmax.f32 %v896, 0.0
        %v1056 = vmax.f32 %v900, 0.0
        %v1057 = vmax.f32 %v902, 0.0
        %v1058 = vmax.f32 %v904, 0.0
        %v1059 = vmax.f32 %v906, 0.0
        %v1060 = vmax.f32 %v910, 0.0
        %v1061 = vmax.f32 %v912, 0.0
        %v1062 = vmax.f32 %v914, 0.0
        %v1063 = vmax.f32 %v916, 0.0
        %v1064 = vmax.f32 %v920, 0.0
        %v1065 = vmax.f32 %v922, 0.0
        %v1066 = vmax.f32 %v924, 0.0
        %v1067 = vmax.f32 %v926, 0.0
        %v1068 = vmax.f32 %v930, 0.0
        %v1069 = vmax.f32 %v932, 0.0
        %v1070 = vmax.f32 %v934, 0.0
        %v1071 = vmax.f32 %v936, 0.0
        %v1072 = vmax.f32 %v940, 0.0
        %v1073 = vmax.f32 %v942, 0.0
        %v1074 = vmax.f32 %v944, 0.0
        %v1075 = vmax.f32 %v946, 0.0
        %v1076 = vpack.c.bf16 %v950, %v948
        %v1077 = vpack.c.bf16 %v951, %v949
        %v1078 = vpack.c.bf16 %v954, %v952
        %v1079 = vpack.c.bf16 %v955, %v953
        %v1080 = vpack.c.bf16 %v958, %v956
        %v1081 = vpack.c.bf16 %v959, %v957
        %v1082 = vpack.c.bf16 %v962, %v960
        %v1083 = vpack.c.bf16 %v963, %v961
        %v1084 = vpack.c.bf16 %v966, %v964
        %v1085 = vpack.c.bf16 %v967, %v965
        %v1086 = vpack.c.bf16 %v970, %v968
        %v1087 = vpack.c.bf16 %v971, %v969
        %v1088 = vpack.c.bf16 %v974, %v972
        %v1089 = vpack.c.bf16 %v975, %v973
        %v1090 = vpack.c.bf16 %v978, %v976
        %v1091 = vpack.c.bf16 %v979, %v977
        %v1092 = vpack.c.bf16 %v982, %v980
        %v1093 = vpack.c.bf16 %v983, %v981
        %v1094 = vpack.c.bf16 %v986, %v984
        %v1095 = vpack.c.bf16 %v987, %v985
        %v1096 = vpack.c.bf16 %v990, %v988
        %v1097 = vpack.c.bf16 %v991, %v989
        %v1098 = vpack.c.bf16 %v994, %v992
        %v1099 = vpack.c.bf16 %v995, %v993
        %v1100 = vpack.c.bf16 %v998, %v996
        %v1101 = vpack.c.bf16 %v999, %v997
        %v1102 = vpack.c.bf16 %v1002, %v1000
        %v1103 = vpack.c.bf16 %v1003, %v1001
        %v1104 = vpack.c.bf16 %v1006, %v1004
        %v1105 = vpack.c.bf16 %v1007, %v1005
        %v1106 = vpack.c.bf16 %v1010, %v1008
        %v1107 = vpack.c.bf16 %v1011, %v1009
        %v1108 = vpack.c.bf16 %v1014, %v1012
        %v1109 = vpack.c.bf16 %v1015, %v1013
        %v1110 = vpack.c.bf16 %v1018, %v1016
        %v1111 = vpack.c.bf16 %v1019, %v1017
        %v1112 = vpack.c.bf16 %v1022, %v1020
        %v1113 = vpack.c.bf16 %v1023, %v1021
        %v1114 = vpack.c.bf16 %v1026, %v1024
        %v1115 = vpack.c.bf16 %v1027, %v1025
        %v1116 = vpack.c.bf16 %v1030, %v1028
        %v1117 = vpack.c.bf16 %v1031, %v1029
        %v1118 = vpack.c.bf16 %v1034, %v1032
        %v1119 = vpack.c.bf16 %v1035, %v1033
        %v1120 = vpack.c.bf16 %v1038, %v1036
        %v1121 = vpack.c.bf16 %v1039, %v1037
        %v1122 = vpack.c.bf16 %v1042, %v1040
        %v1123 = vpack.c.bf16 %v1043, %v1041
        %v1124 = vpack.c.bf16 %v1046, %v1044
        %v1125 = vpack.c.bf16 %v1047, %v1045
        %v1126 = vpack.c.bf16 %v1050, %v1048
        %v1127 = vpack.c.bf16 %v1051, %v1049
        %v1128 = vpack.c.bf16 %v1054, %v1052
        %v1129 = vpack.c.bf16 %v1055, %v1053
        %v1130 = vpack.c.bf16 %v1058, %v1056
        %v1131 = vpack.c.bf16 %v1059, %v1057
        %v1132 = vpack.c.bf16 %v1062, %v1060
        %v1133 = vpack.c.bf16 %v1063, %v1061
        %v1134 = vpack.c.bf16 %v1066, %v1064
        %v1135 = vpack.c.bf16 %v1067, %v1065
        %v1136 = vpack.c.bf16 %v1070, %v1068
        %v1137 = vpack.c.bf16 %v1071, %v1069
        %v1138 = vpack.c.bf16 %v1074, %v1072
        %v1139 = vpack.c.bf16 %v1075, %v1073
        %v1140 = vld [vmem:[%s3] sm:$0xff]
        %v1141 = vld [vmem:[%s3 + $0x8] sm:$0xff]
        %v1142 = vld [vmem:[%s3 + $0x10] sm:$0xff]
        %v1143 = vld [vmem:[%s3 + $0x18] sm:$0xff]
        %v1144 = vld [vmem:[%s3 + $0x20] sm:$0xff]
        %v1145 = vld [vmem:[%s3 + $0x28] sm:$0xff]
        %v1146 = vld [vmem:[%s3 + $0x30] sm:$0xff]
        %v1147 = vld [vmem:[%s3 + $0x38] sm:$0xff]
        %v1148 = vld [vmem:[%s3 + $0x40] sm:$0xff]
        %v1149 = vld [vmem:[%s3 + $0x48] sm:$0xff]
        %v1150 = vld [vmem:[%s3 + $0x50] sm:$0xff]
        %v1151 = vld [vmem:[%s3 + $0x58] sm:$0xff]
        %v1152 = vld [vmem:[%s3 + $0x60] sm:$0xff]
        %v1153 = vld [vmem:[%s3 + $0x68] sm:$0xff]
        %v1154 = vld [vmem:[%s3 + $0x70] sm:$0xff]
        %v1155 = vld [vmem:[%s3 + $0x78] sm:$0xff]
        %v1156 = vld [vmem:[%s3 + $0x80] sm:$0xff]
        %v1157 = vld [vmem:[%s3 + $0x88] sm:$0xff]
        %v1158 = vld [vmem:[%s3 + $0x90] sm:$0xff]
        %v1159 = vld [vmem:[%s3 + $0x98] sm:$0xff]
        %v1160 = vld [vmem:[%s3 + $0xa0] sm:$0xff]
        %v1161 = vld [vmem:[%s3 + $0xa8] sm:$0xff]
        %v1162 = vld [vmem:[%s3 + $0xb0] sm:$0xff]
        %v1163 = vld [vmem:[%s3 + $0xb8] sm:$0xff]
        %v1164 = vld [vmem:[%s3 + $0xc0] sm:$0xff]
        %v1165 = vld [vmem:[%s3 + $0xc8] sm:$0xff]
        %v1166 = vld [vmem:[%s3 + $0xd0] sm:$0xff]
        %v1167 = vld [vmem:[%s3 + $0xd8] sm:$0xff]
        %v1168 = vld [vmem:[%s3 + $0xe0] sm:$0xff]
        %v1169 = vld [vmem:[%s3 + $0xe8] sm:$0xff]
        %v1170 = vld [vmem:[%s3 + $0xf0] sm:$0xff]
        %v1171 = vld [vmem:[%s3 + $0xf8] sm:$0xff]
        %v1172 = vld [vmem:[%s4] sm:$0x3]
        %v1174 = vlaneseq
        %v1175 = vshrl.u32 %v1174, 7
        %v1176 = vsub.s32 0, %v1175
        %v1177 = vrot.slane %v1172, %v1176
        %v1178 = vlaneseq
        %v1179 = vshrl.u32 %v1178, 7
        %v1180 = vsub.s32 1, %v1179
        %v1181 = vrot.slane %v1172, %v1180
        %v1216 = vunpack.c.l.b16 %v1140
        %v1217 = vunpack.c.h.b16 %v1140
        %v1218 = vunpack.c.l.b16 %v1141
        %v1219 = vunpack.c.h.b16 %v1141
        %v1220 = vunpack.c.l.b16 %v1142
        %v1221 = vunpack.c.h.b16 %v1142
        %v1222 = vunpack.c.l.b16 %v1143
        %v1223 = vunpack.c.h.b16 %v1143
        %v1224 = vunpack.c.l.b16 %v1144
        %v1225 = vunpack.c.h.b16 %v1144
        %v1226 = vunpack.c.l.b16 %v1145
        %v1227 = vunpack.c.h.b16 %v1145
        %v1228 = vunpack.c.l.b16 %v1146
        %v1229 = vunpack.c.h.b16 %v1146
        %v1230 = vunpack.c.l.b16 %v1147
        %v1231 = vunpack.c.h.b16 %v1147
        %v1232 = vunpack.c.l.b16 %v1148
        %v1233 = vunpack.c.h.b16 %v1148
        %v1234 = vunpack.c.l.b16 %v1149
        %v1235 = vunpack.c.h.b16 %v1149
        %v1236 = vunpack.c.l.b16 %v1150
        %v1237 = vunpack.c.h.b16 %v1150
        %v1238 = vunpack.c.l.b16 %v1151
        %v1239 = vunpack.c.h.b16 %v1151
        %v1240 = vunpack.c.l.b16 %v1152
        %v1241 = vunpack.c.h.b16 %v1152
        %v1242 = vunpack.c.l.b16 %v1153
        %v1243 = vunpack.c.h.b16 %v1153
        %v1244 = vunpack.c.l.b16 %v1154
        %v1245 = vunpack.c.h.b16 %v1154
        %v1246 = vunpack.c.l.b16 %v1155
        %v1247 = vunpack.c.h.b16 %v1155
        %v1248 = vunpack.c.l.b16 %v1156
        %v1249 = vunpack.c.h.b16 %v1156
        %v1250 = vunpack.c.l.b16 %v1157
        %v1251 = vunpack.c.h.b16 %v1157
        %v1252 = vunpack.c.l.b16 %v1158
        %v1253 = vunpack.c.h.b16 %v1158
        %v1254 = vunpack.c.l.b16 %v1159
        %v1255 = vunpack.c.h.b16 %v1159
        %v1256 = vunpack.c.l.b16 %v1160
        %v1257 = vunpack.c.h.b16 %v1160
        %v1258 = vunpack.c.l.b16 %v1161
        %v1259 = vunpack.c.h.b16 %v1161
        %v1260 = vunpack.c.l.b16 %v1162
        %v1261 = vunpack.c.h.b16 %v1162
        %v1262 = vunpack.c.l.b16 %v1163
        %v1263 = vunpack.c.h.b16 %v1163
        %v1264 = vunpack.c.l.b16 %v1164
        %v1265 = vunpack.c.h.b16 %v1164
        %v1266 = vunpack.c.l.b16 %v1165
        %v1267 = vunpack.c.h.b16 %v1165
        %v1268 = vunpack.c.l.b16 %v1166
        %v1269 = vunpack.c.h.b16 %v1166
        %v1270 = vunpack.c.l.b16 %v1167
        %v1271 = vunpack.c.h.b16 %v1167
        %v1272 = vunpack.c.l.b16 %v1168
        %v1273 = vunpack.c.h.b16 %v1168
        %v1274 = vunpack.c.l.b16 %v1169
        %v1275 = vunpack.c.h.b16 %v1169
        %v1276 = vunpack.c.l.b16 %v1170
        %v1277 = vunpack.c.h.b16 %v1170
        %v1278 = vunpack.c.l.b16 %v1171
        %v1279 = vunpack.c.h.b16 %v1171
        %v1280 = vpack.c.b16 %v1218, %v1216
        %v1281 = vpack.c.b16 %v1219, %v1217
        %v1282 = vpack.c.b16 %v1222, %v1220
        %v1283 = vpack.c.b16 %v1223, %v1221
        %v1284 = vpack.c.b16 %v1226, %v1224
        %v1285 = vpack.c.b16 %v1227, %v1225
        %v1286 = vpack.c.b16 %v1230, %v1228
        %v1287 = vpack.c.b16 %v1231, %v1229
        %v1288 = vpack.c.b16 %v1234, %v1232
        %v1289 = vpack.c.b16 %v1235, %v1233
        %v1290 = vpack.c.b16 %v1238, %v1236
        %v1291 = vpack.c.b16 %v1239, %v1237
        %v1292 = vpack.c.b16 %v1242, %v1240
        %v1293 = vpack.c.b16 %v1243, %v1241
        %v1294 = vpack.c.b16 %v1246, %v1244
        %v1295 = vpack.c.b16 %v1247, %v1245
        %v1296 = vpack.c.b16 %v1250, %v1248
        %v1297 = vpack.c.b16 %v1251, %v1249
        %v1298 = vpack.c.b16 %v1254, %v1252
        %v1299 = vpack.c.b16 %v1255, %v1253
        %v1300 = vpack.c.b16 %v1258, %v1256
        %v1301 = vpack.c.b16 %v1259, %v1257
        %v1302 = vpack.c.b16 %v1262, %v1260
        %v1303 = vpack.c.b16 %v1263, %v1261
        %v1304 = vpack.c.b16 %v1266, %v1264
        %v1305 = vpack.c.b16 %v1267, %v1265
        %v1306 = vpack.c.b16 %v1270, %v1268
        %v1307 = vpack.c.b16 %v1271, %v1269
        %v1308 = vpack.c.b16 %v1274, %v1272
        %v1309 = vpack.c.b16 %v1275, %v1273
        %v1310 = vpack.c.b16 %v1278, %v1276
        %v1311 = vpack.c.b16 %v1279, %v1277
        %1344 = vmatprep.subr.bf16.mxu0 %v1295
        %1345 = vmatpush1.bf16.msra.mxu0 %v1294
        %1346 = vmatprep.subr.bf16.mxu0 %v1293
        %1347 = vmatpush1.bf16.msra.mxu0 %v1292
        %1348 = vmatprep.subr.bf16.mxu0 %v1291
        %1349 = vmatpush1.bf16.msra.mxu0 %v1290
        %1350 = vmatprep.subr.bf16.mxu0 %v1289
        %1351 = vmatpush1.bf16.msra.mxu0 %v1288
        %1352 = vmatprep.subr.bf16.mxu0 %v1287
        %1353 = vmatpush1.bf16.msra.mxu0 %v1286
        %1354 = vmatprep.subr.bf16.mxu0 %v1285
        %1355 = vmatpush1.bf16.msra.mxu0 %v1284
        %1356 = vmatprep.subr.bf16.mxu0 %v1283
        %1357 = vmatpush1.bf16.msra.mxu0 %v1282
        %1358 = vmatprep.subr.bf16.mxu0 %v1281
        %1359 = vmatpush1.bf16.msra.mxu0 %v1280
        %1360 = vmatprep.subr.bf16.mxu0 %v1311
        %1361 = vmatpush2.bf16.msra.mxu0 %v1310
        %1362 = vmatprep.subr.bf16.mxu0 %v1309
        %1363 = vmatpush2.bf16.msra.mxu0 %v1308
        %1364 = vmatprep.subr.bf16.mxu0 %v1307
        %1365 = vmatpush2.bf16.msra.mxu0 %v1306
        %1366 = vmatprep.subr.bf16.mxu0 %v1305
        %1367 = vmatpush2.bf16.msra.mxu0 %v1304
        %1368 = vmatprep.subr.bf16.mxu0 %v1303
        %1369 = vmatpush2.bf16.msra.mxu0 %v1302
        %1370 = vmatprep.subr.bf16.mxu0 %v1301
        %1371 = vmatpush2.bf16.msra.mxu0 %v1300
        %1372 = vmatprep.subr.bf16.mxu0 %v1299
        %1373 = vmatpush2.bf16.msra.mxu0 %v1298
        %1374 = vmatprep.subr.bf16.mxu0 %v1297
        %1375 = vmatpush2.bf16.msra.mxu0 %v1296
        %1376 = vmatprep.mubr.bf16.mxu0 %v1077
        %1377 = vmatmul.mubr.bf16.gmra.mxu0 %v1076
        %v1378 = vpop.f32.mrf.mxu0
        %v1379 = vadd.f32 %v1177, %v1378
        %v1380 = vpop.f32.mrf.mxu0
        %v1381 = vadd.f32 %v1181, %v1380
        %v1382 = vpop.f32.mrf.mxu0
        %v1383 = vadd.f32 %v1177, %v1382
        %v1384 = vpop.f32.mrf.mxu0
        %v1385 = vadd.f32 %v1181, %v1384
        %1386 = vmatprep.mubr.bf16.mxu0 %v1079
        %1387 = vmatmul.mubr.bf16.gmra.mxu0 %v1078
        %v1388 = vpop.f32.mrf.mxu0
        %v1389 = vadd.f32 %v1177, %v1388
        %v1390 = vpop.f32.mrf.mxu0
        %v1391 = vadd.f32 %v1181, %v1390
        %v1392 = vpop.f32.mrf.mxu0
        %v1393 = vadd.f32 %v1177, %v1392
        %v1394 = vpop.f32.mrf.mxu0
        %v1395 = vadd.f32 %v1181, %v1394
        %1396 = vmatprep.mubr.bf16.mxu0 %v1081
        %1397 = vmatmul.mubr.bf16.gmra.mxu0 %v1080
        %v1398 = vpop.f32.mrf.mxu0
        %v1399 = vadd.f32 %v1177, %v1398
        %v1400 = vpop.f32.mrf.mxu0
        %v1401 = vadd.f32 %v1181, %v1400
        %v1402 = vpop.f32.mrf.mxu0
        %v1403 = vadd.f32 %v1177, %v1402
        %v1404 = vpop.f32.mrf.mxu0
        %v1405 = vadd.f32 %v1181, %v1404
        %1406 = vmatprep.mubr.bf16.mxu0 %v1083
        %1407 = vmatmul.mubr.bf16.gmra.mxu0 %v1082
        %v1408 = vpop.f32.mrf.mxu0
        %v1409 = vadd.f32 %v1177, %v1408
        %v1410 = vpop.f32.mrf.mxu0
        %v1411 = vadd.f32 %v1181, %v1410
        %v1412 = vpop.f32.mrf.mxu0
        %v1413 = vadd.f32 %v1177, %v1412
        %v1414 = vpop.f32.mrf.mxu0
        %v1415 = vadd.f32 %v1181, %v1414
        %1416 = vmatprep.mubr.bf16.mxu0 %v1085
        %1417 = vmatmul.mubr.bf16.gmra.mxu0 %v1084
        %v1418 = vpop.f32.mrf.mxu0
        %v1419 = vadd.f32 %v1177, %v1418
        %v1420 = vpop.f32.mrf.mxu0
        %v1421 = vadd.f32 %v1181, %v1420
        %v1422 = vpop.f32.mrf.mxu0
        %v1423 = vadd.f32 %v1177, %v1422
        %v1424 = vpop.f32.mrf.mxu0
        %v1425 = vadd.f32 %v1181, %v1424
        %1426 = vmatprep.mubr.bf16.mxu0 %v1087
        %1427 = vmatmul.mubr.bf16.gmra.mxu0 %v1086
        %v1428 = vpop.f32.mrf.mxu0
        %v1429 = vadd.f32 %v1177, %v1428
        %v1430 = vpop.f32.mrf.mxu0
        %v1431 = vadd.f32 %v1181, %v1430
        %v1432 = vpop.f32.mrf.mxu0
        %v1433 = vadd.f32 %v1177, %v1432
        %v1434 = vpop.f32.mrf.mxu0
        %v1435 = vadd.f32 %v1181, %v1434
        %1436 = vmatprep.mubr.bf16.mxu0 %v1089
        %1437 = vmatmul.mubr.bf16.gmra.mxu0 %v1088
        %v1438 = vpop.f32.mrf.mxu0
        %v1439 = vadd.f32 %v1177, %v1438
        %v1440 = vpop.f32.mrf.mxu0
        %v1441 = vadd.f32 %v1181, %v1440
        %v1442 = vpop.f32.mrf.mxu0
        %v1443 = vadd.f32 %v1177, %v1442
        %v1444 = vpop.f32.mrf.mxu0
        %v1445 = vadd.f32 %v1181, %v1444
        %1446 = vmatprep.mubr.bf16.mxu0 %v1091
        %1447 = vmatmul.mubr.bf16.gmra.mxu0 %v1090
        %v1448 = vpop.f32.mrf.mxu0
        %v1449 = vadd.f32 %v1177, %v1448
        %v1450 = vpop.f32.mrf.mxu0
        %v1451 = vadd.f32 %v1181, %v1450
        %v1452 = vpop.f32.mrf.mxu0
        %v1453 = vadd.f32 %v1177, %v1452
        %v1454 = vpop.f32.mrf.mxu0
        %v1455 = vadd.f32 %v1181, %v1454
        %1456 = vmatprep.mubr.bf16.mxu0 %v1093
        %1457 = vmatmul.mubr.bf16.gmra.mxu0 %v1092
        %v1458 = vpop.f32.mrf.mxu0
        %v1459 = vadd.f32 %v1177, %v1458
        %v1460 = vpop.f32.mrf.mxu0
        %v1461 = vadd.f32 %v1181, %v1460
        %v1462 = vpop.f32.mrf.mxu0
        %v1463 = vadd.f32 %v1177, %v1462
        %v1464 = vpop.f32.mrf.mxu0
        %v1465 = vadd.f32 %v1181, %v1464
        %1466 = vmatprep.mubr.bf16.mxu0 %v1095
        %1467 = vmatmul.mubr.bf16.gmra.mxu0 %v1094
        %v1468 = vpop.f32.mrf.mxu0
        %v1469 = vadd.f32 %v1177, %v1468
        %v1470 = vpop.f32.mrf.mxu0
        %v1471 = vadd.f32 %v1181, %v1470
        %v1472 = vpop.f32.mrf.mxu0
        %v1473 = vadd.f32 %v1177, %v1472
        %v1474 = vpop.f32.mrf.mxu0
        %v1475 = vadd.f32 %v1181, %v1474
        %1476 = vmatprep.mubr.bf16.mxu0 %v1097
        %1477 = vmatmul.mubr.bf16.gmra.mxu0 %v1096
        %v1478 = vpop.f32.mrf.mxu0
        %v1479 = vadd.f32 %v1177, %v1478
        %v1480 = vpop.f32.mrf.mxu0
        %v1481 = vadd.f32 %v1181, %v1480
        %v1482 = vpop.f32.mrf.mxu0
        %v1483 = vadd.f32 %v1177, %v1482
        %v1484 = vpop.f32.mrf.mxu0
        %v1485 = vadd.f32 %v1181, %v1484
        %1486 = vmatprep.mubr.bf16.mxu0 %v1099
        %1487 = vmatmul.mubr.bf16.gmra.mxu0 %v1098
        %v1488 = vpop.f32.mrf.mxu0
        %v1489 = vadd.f32 %v1177, %v1488
        %v1490 = vpop.f32.mrf.mxu0
        %v1491 = vadd.f32 %v1181, %v1490
        %v1492 = vpop.f32.mrf.mxu0
        %v1493 = vadd.f32 %v1177, %v1492
        %v1494 = vpop.f32.mrf.mxu0
        %v1495 = vadd.f32 %v1181, %v1494
        %1496 = vmatprep.mubr.bf16.mxu0 %v1101
        %1497 = vmatmul.mubr.bf16.gmra.mxu0 %v1100
        %v1498 = vpop.f32.mrf.mxu0
        %v1499 = vadd.f32 %v1177, %v1498
        %v1500 = vpop.f32.mrf.mxu0
        %v1501 = vadd.f32 %v1181, %v1500
        %v1502 = vpop.f32.mrf.mxu0
        %v1503 = vadd.f32 %v1177, %v1502
        %v1504 = vpop.f32.mrf.mxu0
        %v1505 = vadd.f32 %v1181, %v1504
        %1506 = vmatprep.mubr.bf16.mxu0 %v1103
        %1507 = vmatmul.mubr.bf16.gmra.mxu0 %v1102
        %v1508 = vpop.f32.mrf.mxu0
        %v1509 = vadd.f32 %v1177, %v1508
        %v1510 = vpop.f32.mrf.mxu0
        %v1511 = vadd.f32 %v1181, %v1510
        %v1512 = vpop.f32.mrf.mxu0
        %v1513 = vadd.f32 %v1177, %v1512
        %v1514 = vpop.f32.mrf.mxu0
        %v1515 = vadd.f32 %v1181, %v1514
        %1516 = vmatprep.mubr.bf16.mxu0 %v1105
        %1517 = vmatmul.mubr.bf16.gmra.mxu0 %v1104
        %v1518 = vpop.f32.mrf.mxu0
        %v1519 = vadd.f32 %v1177, %v1518
        %v1520 = vpop.f32.mrf.mxu0
        %v1521 = vadd.f32 %v1181, %v1520
        %v1522 = vpop.f32.mrf.mxu0
        %v1523 = vadd.f32 %v1177, %v1522
        %v1524 = vpop.f32.mrf.mxu0
        %v1525 = vadd.f32 %v1181, %v1524
        %1526 = vmatprep.mubr.bf16.mxu0 %v1107
        %1527 = vmatmul.mubr.bf16.gmra.mxu0 %v1106
        %v1528 = vpop.f32.mrf.mxu0
        %v1529 = vadd.f32 %v1177, %v1528
        %v1530 = vpop.f32.mrf.mxu0
        %v1531 = vadd.f32 %v1181, %v1530
        %v1532 = vpop.f32.mrf.mxu0
        %v1533 = vadd.f32 %v1177, %v1532
        %v1534 = vpop.f32.mrf.mxu0
        %v1535 = vadd.f32 %v1181, %v1534
        %1536 = vmatprep.mubr.bf16.mxu0 %v1109
        %1537 = vmatmul.mubr.bf16.gmra.mxu0 %v1108
        %v1538 = vpop.f32.mrf.mxu0
        %v1539 = vadd.f32 %v1177, %v1538
        %v1540 = vpop.f32.mrf.mxu0
        %v1541 = vadd.f32 %v1181, %v1540
        %v1542 = vpop.f32.mrf.mxu0
        %v1543 = vadd.f32 %v1177, %v1542
        %v1544 = vpop.f32.mrf.mxu0
        %v1545 = vadd.f32 %v1181, %v1544
        %1546 = vmatprep.mubr.bf16.mxu0 %v1111
        %1547 = vmatmul.mubr.bf16.gmra.mxu0 %v1110
        %v1548 = vpop.f32.mrf.mxu0
        %v1549 = vadd.f32 %v1177, %v1548
        %v1550 = vpop.f32.mrf.mxu0
        %v1551 = vadd.f32 %v1181, %v1550
        %v1552 = vpop.f32.mrf.mxu0
        %v1553 = vadd.f32 %v1177, %v1552
        %v1554 = vpop.f32.mrf.mxu0
        %v1555 = vadd.f32 %v1181, %v1554
        %1556 = vmatprep.mubr.bf16.mxu0 %v1113
        %1557 = vmatmul.mubr.bf16.gmra.mxu0 %v1112
        %v1558 = vpop.f32.mrf.mxu0
        %v1559 = vadd.f32 %v1177, %v1558
        %v1560 = vpop.f32.mrf.mxu0
        %v1561 = vadd.f32 %v1181, %v1560
        %v1562 = vpop.f32.mrf.mxu0
        %v1563 = vadd.f32 %v1177, %v1562
        %v1564 = vpop.f32.mrf.mxu0
        %v1565 = vadd.f32 %v1181, %v1564
        %1566 = vmatprep.mubr.bf16.mxu0 %v1115
        %1567 = vmatmul.mubr.bf16.gmra.mxu0 %v1114
        %v1568 = vpop.f32.mrf.mxu0
        %v1569 = vadd.f32 %v1177, %v1568
        %v1570 = vpop.f32.mrf.mxu0
        %v1571 = vadd.f32 %v1181, %v1570
        %v1572 = vpop.f32.mrf.mxu0
        %v1573 = vadd.f32 %v1177, %v1572
        %v1574 = vpop.f32.mrf.mxu0
        %v1575 = vadd.f32 %v1181, %v1574
        %1576 = vmatprep.mubr.bf16.mxu0 %v1117
        %1577 = vmatmul.mubr.bf16.gmra.mxu0 %v1116
        %v1578 = vpop.f32.mrf.mxu0
        %v1579 = vadd.f32 %v1177, %v1578
        %v1580 = vpop.f32.mrf.mxu0
        %v1581 = vadd.f32 %v1181, %v1580
        %v1582 = vpop.f32.mrf.mxu0
        %v1583 = vadd.f32 %v1177, %v1582
        %v1584 = vpop.f32.mrf.mxu0
        %v1585 = vadd.f32 %v1181, %v1584
        %1586 = vmatprep.mubr.bf16.mxu0 %v1119
        %1587 = vmatmul.mubr.bf16.gmra.mxu0 %v1118
        %v1588 = vpop.f32.mrf.mxu0
        %v1589 = vadd.f32 %v1177, %v1588
        %v1590 = vpop.f32.mrf.mxu0
        %v1591 = vadd.f32 %v1181, %v1590
        %v1592 = vpop.f32.mrf.mxu0
        %v1593 = vadd.f32 %v1177, %v1592
        %v1594 = vpop.f32.mrf.mxu0
        %v1595 = vadd.f32 %v1181, %v1594
        %1596 = vmatprep.mubr.bf16.mxu0 %v1121
        %1597 = vmatmul.mubr.bf16.gmra.mxu0 %v1120
        %v1598 = vpop.f32.mrf.mxu0
        %v1599 = vadd.f32 %v1177, %v1598
        %v1600 = vpop.f32.mrf.mxu0
        %v1601 = vadd.f32 %v1181, %v1600
        %v1602 = vpop.f32.mrf.mxu0
        %v1603 = vadd.f32 %v1177, %v1602
        %v1604 = vpop.f32.mrf.mxu0
        %v1605 = vadd.f32 %v1181, %v1604
        %1606 = vmatprep.mubr.bf16.mxu0 %v1123
        %1607 = vmatmul.mubr.bf16.gmra.mxu0 %v1122
        %v1608 = vpop.f32.mrf.mxu0
        %v1609 = vadd.f32 %v1177, %v1608
        %v1610 = vpop.f32.mrf.mxu0
        %v1611 = vadd.f32 %v1181, %v1610
        %v1612 = vpop.f32.mrf.mxu0
        %v1613 = vadd.f32 %v1177, %v1612
        %v1614 = vpop.f32.mrf.mxu0
        %v1615 = vadd.f32 %v1181, %v1614
        %1616 = vmatprep.mubr.bf16.mxu0 %v1125
        %1617 = vmatmul.mubr.bf16.gmra.mxu0 %v1124
        %v1618 = vpop.f32.mrf.mxu0
        %v1619 = vadd.f32 %v1177, %v1618
        %v1620 = vpop.f32.mrf.mxu0
        %v1621 = vadd.f32 %v1181, %v1620
        %v1622 = vpop.f32.mrf.mxu0
        %v1623 = vadd.f32 %v1177, %v1622
        %v1624 = vpop.f32.mrf.mxu0
        %v1625 = vadd.f32 %v1181, %v1624
        %1626 = vmatprep.mubr.bf16.mxu0 %v1127
        %1627 = vmatmul.mubr.bf16.gmra.mxu0 %v1126
        %v1628 = vpop.f32.mrf.mxu0
        %v1629 = vadd.f32 %v1177, %v1628
        %v1630 = vpop.f32.mrf.mxu0
        %v1631 = vadd.f32 %v1181, %v1630
        %v1632 = vpop.f32.mrf.mxu0
        %v1633 = vadd.f32 %v1177, %v1632
        %v1634 = vpop.f32.mrf.mxu0
        %v1635 = vadd.f32 %v1181, %v1634
        %1636 = vmatprep.mubr.bf16.mxu0 %v1129
        %1637 = vmatmul.mubr.bf16.gmra.mxu0 %v1128
        %v1638 = vpop.f32.mrf.mxu0
        %v1639 = vadd.f32 %v1177, %v1638
        %v1640 = vpop.f32.mrf.mxu0
        %v1641 = vadd.f32 %v1181, %v1640
        %v1642 = vpop.f32.mrf.mxu0
        %v1643 = vadd.f32 %v1177, %v1642
        %v1644 = vpop.f32.mrf.mxu0
        %v1645 = vadd.f32 %v1181, %v1644
        %1646 = vmatprep.mubr.bf16.mxu0 %v1131
        %1647 = vmatmul.mubr.bf16.gmra.mxu0 %v1130
        %v1648 = vpop.f32.mrf.mxu0
        %v1649 = vadd.f32 %v1177, %v1648
        %v1650 = vpop.f32.mrf.mxu0
        %v1651 = vadd.f32 %v1181, %v1650
        %v1652 = vpop.f32.mrf.mxu0
        %v1653 = vadd.f32 %v1177, %v1652
        %v1654 = vpop.f32.mrf.mxu0
        %v1655 = vadd.f32 %v1181, %v1654
        %1656 = vmatprep.mubr.bf16.mxu0 %v1133
        %1657 = vmatmul.mubr.bf16.gmra.mxu0 %v1132
        %v1658 = vpop.f32.mrf.mxu0
        %v1659 = vadd.f32 %v1177, %v1658
        %v1660 = vpop.f32.mrf.mxu0
        %v1661 = vadd.f32 %v1181, %v1660
        %v1662 = vpop.f32.mrf.mxu0
        %v1663 = vadd.f32 %v1177, %v1662
        %v1664 = vpop.f32.mrf.mxu0
        %v1665 = vadd.f32 %v1181, %v1664
        %1666 = vmatprep.mubr.bf16.mxu0 %v1135
        %1667 = vmatmul.mubr.bf16.gmra.mxu0 %v1134
        %v1668 = vpop.f32.mrf.mxu0
        %v1669 = vadd.f32 %v1177, %v1668
        %v1670 = vpop.f32.mrf.mxu0
        %v1671 = vadd.f32 %v1181, %v1670
        %v1672 = vpop.f32.mrf.mxu0
        %v1673 = vadd.f32 %v1177, %v1672
        %v1674 = vpop.f32.mrf.mxu0
        %v1675 = vadd.f32 %v1181, %v1674
        %1676 = vmatprep.mubr.bf16.mxu0 %v1137
        %1677 = vmatmul.mubr.bf16.gmra.mxu0 %v1136
        %v1678 = vpop.f32.mrf.mxu0
        %v1679 = vadd.f32 %v1177, %v1678
        %v1680 = vpop.f32.mrf.mxu0
        %v1681 = vadd.f32 %v1181, %v1680
        %v1682 = vpop.f32.mrf.mxu0
        %v1683 = vadd.f32 %v1177, %v1682
        %v1684 = vpop.f32.mrf.mxu0
        %v1685 = vadd.f32 %v1181, %v1684
        %1686 = vmatprep.mubr.bf16.mxu0 %v1139
        %1687 = vmatmul.mubr.bf16.gmra.mxu0 %v1138
        %v1688 = vpop.f32.mrf.mxu0
        %v1689 = vadd.f32 %v1177, %v1688
        %v1690 = vpop.f32.mrf.mxu0
        %v1691 = vadd.f32 %v1181, %v1690
        %v1692 = vpop.f32.mrf.mxu0
        %v1693 = vadd.f32 %v1177, %v1692
        %v1694 = vpop.f32.mrf.mxu0
        %v1695 = vadd.f32 %v1181, %v1694
        %1696 = vdwg.mxu0
        %v1697 = vmax.f32 %v1379, 0.0
        %v1698 = vmax.f32 %v1381, 0.0
        %v1699 = vmax.f32 %v1383, 0.0
        %v1700 = vmax.f32 %v1385, 0.0
        %v1701 = vmax.f32 %v1389, 0.0
        %v1702 = vmax.f32 %v1391, 0.0
        %v1703 = vmax.f32 %v1393, 0.0
        %v1704 = vmax.f32 %v1395, 0.0
        %v1705 = vmax.f32 %v1399, 0.0
        %v1706 = vmax.f32 %v1401, 0.0
        %v1707 = vmax.f32 %v1403, 0.0
        %v1708 = vmax.f32 %v1405, 0.0
        %v1709 = vmax.f32 %v1409, 0.0
        %v1710 = vmax.f32 %v1411, 0.0
        %v1711 = vmax.f32 %v1413, 0.0
        %v1712 = vmax.f32 %v1415, 0.0
        %v1713 = vmax.f32 %v1419, 0.0
        %v1714 = vmax.f32 %v1421, 0.0
        %v1715 = vmax.f32 %v1423, 0.0
        %v1716 = vmax.f32 %v1425, 0.0
        %v1717 = vmax.f32 %v1429, 0.0
        %v1718 = vmax.f32 %v1431, 0.0
        %v1719 = vmax.f32 %v1433, 0.0
        %v1720 = vmax.f32 %v1435, 0.0
        %v1721 = vmax.f32 %v1439, 0.0
        %v1722 = vmax.f32 %v1441, 0.0
        %v1723 = vmax.f32 %v1443, 0.0
        %v1724 = vmax.f32 %v1445, 0.0
        %v1725 = vmax.f32 %v1449, 0.0
        %v1726 = vmax.f32 %v1451, 0.0
        %v1727 = vmax.f32 %v1453, 0.0
        %v1728 = vmax.f32 %v1455, 0.0
        %v1729 = vmax.f32 %v1459, 0.0
        %v1730 = vmax.f32 %v1461, 0.0
        %v1731 = vmax.f32 %v1463, 0.0
        %v1732 = vmax.f32 %v1465, 0.0
        %v1733 = vmax.f32 %v1469, 0.0
        %v1734 = vmax.f32 %v1471, 0.0
        %v1735 = vmax.f32 %v1473, 0.0
        %v1736 = vmax.f32 %v1475, 0.0
        %v1737 = vmax.f32 %v1479, 0.0
        %v1738 = vmax.f32 %v1481, 0.0
        %v1739 = vmax.f32 %v1483, 0.0
        %v1740 = vmax.f32 %v1485, 0.0
        %v1741 = vmax.f32 %v1489, 0.0
        %v1742 = vmax.f32 %v1491, 0.0
        %v1743 = vmax.f32 %v1493, 0.0
        %v1744 = vmax.f32 %v1495, 0.0
        %v1745 = vmax.f32 %v1499, 0.0
        %v1746 = vmax.f32 %v1501, 0.0
        %v1747 = vmax.f32 %v1503, 0.0
        %v1748 = vmax.f32 %v1505, 0.0
        %v1749 = vmax.f32 %v1509, 0.0
        %v1750 = vmax.f32 %v1511, 0.0
        %v1751 = vmax.f32 %v1513, 0.0
        %v1752 = vmax.f32 %v1515, 0.0
        %v1753 = vmax.f32 %v1519, 0.0
        %v1754 = vmax.f32 %v1521, 0.0
        %v1755 = vmax.f32 %v1523, 0.0
        %v1756 = vmax.f32 %v1525, 0.0
        %v1757 = vmax.f32 %v1529, 0.0
        %v1758 = vmax.f32 %v1531, 0.0
        %v1759 = vmax.f32 %v1533, 0.0
        %v1760 = vmax.f32 %v1535, 0.0
        %v1761 = vmax.f32 %v1539, 0.0
        %v1762 = vmax.f32 %v1541, 0.0
        %v1763 = vmax.f32 %v1543, 0.0
        %v1764 = vmax.f32 %v1545, 0.0
        %v1765 = vmax.f32 %v1549, 0.0
        %v1766 = vmax.f32 %v1551, 0.0
        %v1767 = vmax.f32 %v1553, 0.0
        %v1768 = vmax.f32 %v1555, 0.0
        %v1769 = vmax.f32 %v1559, 0.0
        %v1770 = vmax.f32 %v1561, 0.0
        %v1771 = vmax.f32 %v1563, 0.0
        %v1772 = vmax.f32 %v1565, 0.0
        %v1773 = vmax.f32 %v1569, 0.0
        %v1774 = vmax.f32 %v1571, 0.0
        %v1775 = vmax.f32 %v1573, 0.0
        %v1776 = vmax.f32 %v1575, 0.0
        %v1777 = vmax.f32 %v1579, 0.0
        %v1778 = vmax.f32 %v1581, 0.0
        %v1779 = vmax.f32 %v1583, 0.0
        %v1780 = vmax.f32 %v1585, 0.0
        %v1781 = vmax.f32 %v1589, 0.0
        %v1782 = vmax.f32 %v1591, 0.0
        %v1783 = vmax.f32 %v1593, 0.0
        %v1784 = vmax.f32 %v1595, 0.0
        %v1785 = vmax.f32 %v1599, 0.0
        %v1786 = vmax.f32 %v1601, 0.0
        %v1787 = vmax.f32 %v1603, 0.0
        %v1788 = vmax.f32 %v1605, 0.0
        %v1789 = vmax.f32 %v1609, 0.0
        %v1790 = vmax.f32 %v1611, 0.0
        %v1791 = vmax.f32 %v1613, 0.0
        %v1792 = vmax.f32 %v1615, 0.0
        %v1793 = vmax.f32 %v1619, 0.0
        %v1794 = vmax.f32 %v1621, 0.0
        %v1795 = vmax.f32 %v1623, 0.0
        %v1796 = vmax.f32 %v1625, 0.0
        %v1797 = vmax.f32 %v1629, 0.0
        %v1798 = vmax.f32 %v1631, 0.0
        %v1799 = vmax.f32 %v1633, 0.0
        %v1800 = vmax.f32 %v1635, 0.0
        %v1801 = vmax.f32 %v1639, 0.0
        %v1802 = vmax.f32 %v1641, 0.0
        %v1803 = vmax.f32 %v1643, 0.0
        %v1804 = vmax.f32 %v1645, 0.0
        %v1805 = vmax.f32 %v1649, 0.0
        %v1806 = vmax.f32 %v1651, 0.0
        %v1807 = vmax.f32 %v1653, 0.0
        %v1808 = vmax.f32 %v1655, 0.0
        %v1809 = vmax.f32 %v1659, 0.0
        %v1810 = vmax.f32 %v1661, 0.0
        %v1811 = vmax.f32 %v1663, 0.0
        %v1812 = vmax.f32 %v1665, 0.0
        %v1813 = vmax.f32 %v1669, 0.0
        %v1814 = vmax.f32 %v1671, 0.0
        %v1815 = vmax.f32 %v1673, 0.0
        %v1816 = vmax.f32 %v1675, 0.0
        %v1817 = vmax.f32 %v1679, 0.0
        %v1818 = vmax.f32 %v1681, 0.0
        %v1819 = vmax.f32 %v1683, 0.0
        %v1820 = vmax.f32 %v1685, 0.0
        %v1821 = vmax.f32 %v1689, 0.0
        %v1822 = vmax.f32 %v1691, 0.0
        %v1823 = vmax.f32 %v1693, 0.0
        %v1824 = vmax.f32 %v1695, 0.0
        %v1825 = vpack.c.bf16 %v1699, %v1697
        %v1826 = vpack.c.bf16 %v1700, %v1698
        %v1827 = vpack.c.bf16 %v1703, %v1701
        %v1828 = vpack.c.bf16 %v1704, %v1702
        %v1829 = vpack.c.bf16 %v1707, %v1705
        %v1830 = vpack.c.bf16 %v1708, %v1706
        %v1831 = vpack.c.bf16 %v1711, %v1709
        %v1832 = vpack.c.bf16 %v1712, %v1710
        %v1833 = vpack.c.bf16 %v1715, %v1713
        %v1834 = vpack.c.bf16 %v1716, %v1714
        %v1835 = vpack.c.bf16 %v1719, %v1717
        %v1836 = vpack.c.bf16 %v1720, %v1718
        %v1837 = vpack.c.bf16 %v1723, %v1721
        %v1838 = vpack.c.bf16 %v1724, %v1722
        %v1839 = vpack.c.bf16 %v1727, %v1725
        %v1840 = vpack.c.bf16 %v1728, %v1726
        %v1841 = vpack.c.bf16 %v1731, %v1729
        %v1842 = vpack.c.bf16 %v1732, %v1730
        %v1843 = vpack.c.bf16 %v1735, %v1733
        %v1844 = vpack.c.bf16 %v1736, %v1734
        %v1845 = vpack.c.bf16 %v1739, %v1737
        %v1846 = vpack.c.bf16 %v1740, %v1738
        %v1847 = vpack.c.bf16 %v1743, %v1741
        %v1848 = vpack.c.bf16 %v1744, %v1742
        %v1849 = vpack.c.bf16 %v1747, %v1745
        %v1850 = vpack.c.bf16 %v1748, %v1746
        %v1851 = vpack.c.bf16 %v1751, %v1749
        %v1852 = vpack.c.bf16 %v1752, %v1750
        %v1853 = vpack.c.bf16 %v1755, %v1753
        %v1854 = vpack.c.bf16 %v1756, %v1754
        %v1855 = vpack.c.bf16 %v1759, %v1757
        %v1856 = vpack.c.bf16 %v1760, %v1758
        %v1857 = vpack.c.bf16 %v1763, %v1761
        %v1858 = vpack.c.bf16 %v1764, %v1762
        %v1859 = vpack.c.bf16 %v1767, %v1765
        %v1860 = vpack.c.bf16 %v1768, %v1766
        %v1861 = vpack.c.bf16 %v1771, %v1769
        %v1862 = vpack.c.bf16 %v1772, %v1770
        %v1863 = vpack.c.bf16 %v1775, %v1773
        %v1864 = vpack.c.bf16 %v1776, %v1774
        %v1865 = vpack.c.bf16 %v1779, %v1777
        %v1866 = vpack.c.bf16 %v1780, %v1778
        %v1867 = vpack.c.bf16 %v1783, %v1781
        %v1868 = vpack.c.bf16 %v1784, %v1782
        %v1869 = vpack.c.bf16 %v1787, %v1785
        %v1870 = vpack.c.bf16 %v1788, %v1786
        %v1871 = vpack.c.bf16 %v1791, %v1789
        %v1872 = vpack.c.bf16 %v1792, %v1790
        %v1873 = vpack.c.bf16 %v1795, %v1793
        %v1874 = vpack.c.bf16 %v1796, %v1794
        %v1875 = vpack.c.bf16 %v1799, %v1797
        %v1876 = vpack.c.bf16 %v1800, %v1798
        %v1877 = vpack.c.bf16 %v1803, %v1801
        %v1878 = vpack.c.bf16 %v1804, %v1802
        %v1879 = vpack.c.bf16 %v1807, %v1805
        %v1880 = vpack.c.bf16 %v1808, %v1806
        %v1881 = vpack.c.bf16 %v1811, %v1809
        %v1882 = vpack.c.bf16 %v1812, %v1810
        %v1883 = vpack.c.bf16 %v1815, %v1813
        %v1884 = vpack.c.bf16 %v1816, %v1814
        %v1885 = vpack.c.bf16 %v1819, %v1817
        %v1886 = vpack.c.bf16 %v1820, %v1818
        %v1887 = vpack.c.bf16 %v1823, %v1821
        %v1888 = vpack.c.bf16 %v1824, %v1822
        %v1889 = vld [vmem:[%s5] sm:$0xf]
        %v1890 = vld [vmem:[%s5 + $0x4] sm:$0xf]
        %v1891 = vld [vmem:[%s5 + $0x8] sm:$0xf]
        %v1892 = vld [vmem:[%s5 + $0xc] sm:$0xf]
        %v1893 = vld [vmem:[%s5 + $0x10] sm:$0xf]
        %v1894 = vld [vmem:[%s5 + $0x14] sm:$0xf]
        %v1895 = vld [vmem:[%s5 + $0x18] sm:$0xf]
        %v1896 = vld [vmem:[%s5 + $0x1c] sm:$0xf]
        %v1897 = vld [vmem:[%s5 + $0x20] sm:$0xf]
        %v1898 = vld [vmem:[%s5 + $0x24] sm:$0xf]
        %v1899 = vld [vmem:[%s5 + $0x28] sm:$0xf]
        %v1900 = vld [vmem:[%s5 + $0x2c] sm:$0xf]
        %v1901 = vld [vmem:[%s5 + $0x30] sm:$0xf]
        %v1902 = vld [vmem:[%s5 + $0x34] sm:$0xf]
        %v1903 = vld [vmem:[%s5 + $0x38] sm:$0xf]
        %v1904 = vld [vmem:[%s5 + $0x3c] sm:$0xf]
        %v1905 = vld [vmem:[%s5 + $0x40] sm:$0xf]
        %v1906 = vld [vmem:[%s5 + $0x44] sm:$0xf]
        %v1907 = vld [vmem:[%s5 + $0x48] sm:$0xf]
        %v1908 = vld [vmem:[%s5 + $0x4c] sm:$0xf]
        %v1909 = vld [vmem:[%s5 + $0x50] sm:$0xf]
        %v1910 = vld [vmem:[%s5 + $0x54] sm:$0xf]
        %v1911 = vld [vmem:[%s5 + $0x58] sm:$0xf]
        %v1912 = vld [vmem:[%s5 + $0x5c] sm:$0xf]
        %v1913 = vld [vmem:[%s5 + $0x60] sm:$0xf]
        %v1914 = vld [vmem:[%s5 + $0x64] sm:$0xf]
        %v1915 = vld [vmem:[%s5 + $0x68] sm:$0xf]
        %v1916 = vld [vmem:[%s5 + $0x6c] sm:$0xf]
        %v1917 = vld [vmem:[%s5 + $0x70] sm:$0xf]
        %v1918 = vld [vmem:[%s5 + $0x74] sm:$0xf]
        %v1919 = vld [vmem:[%s5 + $0x78] sm:$0xf]
        %v1920 = vld [vmem:[%s5 + $0x7c] sm:$0xf]
        %v1921 = vld [vmem:[%s6] sm:$0x1]
        %v1923 = vlaneseq
        %v1924 = vshrl.u32 %v1923, 7
        %v1925 = vsub.s32 0, %v1924
        %v1926 = vrot.slane %v1921, %v1925
        %v1960 = vunpack.c.l.b16 %v1889
        %v1961 = vunpack.c.l.b16 %v1890
        %v1962 = vunpack.c.l.b16 %v1891
        %v1963 = vunpack.c.l.b16 %v1892
        %v1964 = vunpack.c.l.b16 %v1893
        %v1965 = vunpack.c.l.b16 %v1894
        %v1966 = vunpack.c.l.b16 %v1895
        %v1967 = vunpack.c.l.b16 %v1896
        %v1968 = vunpack.c.l.b16 %v1897
        %v1969 = vunpack.c.l.b16 %v1898
        %v1970 = vunpack.c.l.b16 %v1899
        %v1971 = vunpack.c.l.b16 %v1900
        %v1972 = vunpack.c.l.b16 %v1901
        %v1973 = vunpack.c.l.b16 %v1902
        %v1974 = vunpack.c.l.b16 %v1903
        %v1975 = vunpack.c.l.b16 %v1904
        %v1976 = vunpack.c.l.b16 %v1905
        %v1977 = vunpack.c.l.b16 %v1906
        %v1978 = vunpack.c.l.b16 %v1907
        %v1979 = vunpack.c.l.b16 %v1908
        %v1980 = vunpack.c.l.b16 %v1909
        %v1981 = vunpack.c.l.b16 %v1910
        %v1982 = vunpack.c.l.b16 %v1911
        %v1983 = vunpack.c.l.b16 %v1912
        %v1984 = vunpack.c.l.b16 %v1913
        %v1985 = vunpack.c.l.b16 %v1914
        %v1986 = vunpack.c.l.b16 %v1915
        %v1987 = vunpack.c.l.b16 %v1916
        %v1988 = vunpack.c.l.b16 %v1917
        %v1989 = vunpack.c.l.b16 %v1918
        %v1990 = vunpack.c.l.b16 %v1919
        %v1991 = vunpack.c.l.b16 %v1920
        %v1992 = vpack.c.b16 %v1961, %v1960
        %v1993 = vpack.c.b16 %v1963, %v1962
        %v1994 = vpack.c.b16 %v1965, %v1964
        %v1995 = vpack.c.b16 %v1967, %v1966
        %v1996 = vpack.c.b16 %v1969, %v1968
        %v1997 = vpack.c.b16 %v1971, %v1970
        %v1998 = vpack.c.b16 %v1973, %v1972
        %v1999 = vpack.c.b16 %v1975, %v1974
        %v2000 = vpack.c.b16 %v1977, %v1976
        %v2001 = vpack.c.b16 %v1979, %v1978
        %v2002 = vpack.c.b16 %v1981, %v1980
        %v2003 = vpack.c.b16 %v1983, %v1982
        %v2004 = vpack.c.b16 %v1985, %v1984
        %v2005 = vpack.c.b16 %v1987, %v1986
        %v2006 = vpack.c.b16 %v1989, %v1988
        %v2007 = vpack.c.b16 %v1991, %v1990
        %2024 = vmatprep.subr.bf16.mxu0 0
        %2025 = vmatpush1.bf16.msra.mxu0 %v1999
        %2026 = vmatprep.subr.bf16.mxu0 0
        %2027 = vmatpush1.bf16.msra.mxu0 %v1998
        %2028 = vmatprep.subr.bf16.mxu0 0
        %2029 = vmatpush1.bf16.msra.mxu0 %v1997
        %2030 = vmatprep.subr.bf16.mxu0 0
        %2031 = vmatpush1.bf16.msra.mxu0 %v1996
        %2032 = vmatprep.subr.bf16.mxu0 0
        %2033 = vmatpush1.bf16.msra.mxu0 %v1995
        %2034 = vmatprep.subr.bf16.mxu0 0
        %2035 = vmatpush1.bf16.msra.mxu0 %v1994
        %2036 = vmatprep.subr.bf16.mxu0 0
        %2037 = vmatpush1.bf16.msra.mxu0 %v1993
        %2038 = vmatprep.subr.bf16.mxu0 0
        %2039 = vmatpush1.bf16.msra.mxu0 %v1992
        %2040 = vmatprep.subr.bf16.mxu0 0
        %2041 = vmatpush2.bf16.msra.mxu0 %v2007
        %2042 = vmatprep.subr.bf16.mxu0 0
        %2043 = vmatpush2.bf16.msra.mxu0 %v2006
        %2044 = vmatprep.subr.bf16.mxu0 0
        %2045 = vmatpush2.bf16.msra.mxu0 %v2005
        %2046 = vmatprep.subr.bf16.mxu0 0
        %2047 = vmatpush2.bf16.msra.mxu0 %v2004
        %2048 = vmatprep.subr.bf16.mxu0 0
        %2049 = vmatpush2.bf16.msra.mxu0 %v2003
        %2050 = vmatprep.subr.bf16.mxu0 0
        %2051 = vmatpush2.bf16.msra.mxu0 %v2002
        %2052 = vmatprep.subr.bf16.mxu0 0
        %2053 = vmatpush2.bf16.msra.mxu0 %v2001
        %2054 = vmatprep.subr.bf16.mxu0 0
        %2055 = vmatpush2.bf16.msra.mxu0 %v2000
        %2056 = vmatprep.mubr.bf16.mxu0 %v1826
        %2057 = vmatmul.mubr.bf16.gmra.mxu0 %v1825
        %v2058 = vpop.f32.mrf.mxu0
        %v2059 = vadd.f32 %v1926, %v2058
        %v2060 = vpop.f32.mrf.mxu0
        %v2061 = vpop.f32.mrf.mxu0
        %v2062 = vadd.f32 %v1926, %v2061
        %v2063 = vpop.f32.mrf.mxu0
        %2064 = vmatprep.mubr.bf16.mxu0 %v1828
        %2065 = vmatmul.mubr.bf16.gmra.mxu0 %v1827
        %v2066 = vpop.f32.mrf.mxu0
        %v2067 = vadd.f32 %v1926, %v2066
        %v2068 = vpop.f32.mrf.mxu0
        %v2069 = vpop.f32.mrf.mxu0
        %v2070 = vadd.f32 %v1926, %v2069
        %v2071 = vpop.f32.mrf.mxu0
        %2072 = vmatprep.mubr.bf16.mxu0 %v1830
        %2073 = vmatmul.mubr.bf16.gmra.mxu0 %v1829
        %v2074 = vpop.f32.mrf.mxu0
        %v2075 = vadd.f32 %v1926, %v2074
        %v2076 = vpop.f32.mrf.mxu0
        %v2077 = vpop.f32.mrf.mxu0
        %v2078 = vadd.f32 %v1926, %v2077
        %v2079 = vpop.f32.mrf.mxu0
        %2080 = vmatprep.mubr.bf16.mxu0 %v1832
        %2081 = vmatmul.mubr.bf16.gmra.mxu0 %v1831
        %v2082 = vpop.f32.mrf.mxu0
        %v2083 = vadd.f32 %v1926, %v2082
        %v2084 = vpop.f32.mrf.mxu0
        %v2085 = vpop.f32.mrf.mxu0
        %v2086 = vadd.f32 %v1926, %v2085
        %v2087 = vpop.f32.mrf.mxu0
        %2088 = vmatprep.mubr.bf16.mxu0 %v1834
        %2089 = vmatmul.mubr.bf16.gmra.mxu0 %v1833
        %v2090 = vpop.f32.mrf.mxu0
        %v2091 = vadd.f32 %v1926, %v2090
        %v2092 = vpop.f32.mrf.mxu0
        %v2093 = vpop.f32.mrf.mxu0
        %v2094 = vadd.f32 %v1926, %v2093
        %v2095 = vpop.f32.mrf.mxu0
        %2096 = vmatprep.mubr.bf16.mxu0 %v1836
        %2097 = vmatmul.mubr.bf16.gmra.mxu0 %v1835
        %v2098 = vpop.f32.mrf.mxu0
        %v2099 = vadd.f32 %v1926, %v2098
        %v2100 = vpop.f32.mrf.mxu0
        %v2101 = vpop.f32.mrf.mxu0
        %v2102 = vadd.f32 %v1926, %v2101
        %v2103 = vpop.f32.mrf.mxu0
        %2104 = vmatprep.mubr.bf16.mxu0 %v1838
        %2105 = vmatmul.mubr.bf16.gmra.mxu0 %v1837
        %v2106 = vpop.f32.mrf.mxu0
        %v2107 = vadd.f32 %v1926, %v2106
        %v2108 = vpop.f32.mrf.mxu0
        %v2109 = vpop.f32.mrf.mxu0
        %v2110 = vadd.f32 %v1926, %v2109
        %v2111 = vpop.f32.mrf.mxu0
        %2112 = vmatprep.mubr.bf16.mxu0 %v1840
        %2113 = vmatmul.mubr.bf16.gmra.mxu0 %v1839
        %v2114 = vpop.f32.mrf.mxu0
        %v2115 = vadd.f32 %v1926, %v2114
        %v2116 = vpop.f32.mrf.mxu0
        %v2117 = vpop.f32.mrf.mxu0
        %v2118 = vadd.f32 %v1926, %v2117
        %v2119 = vpop.f32.mrf.mxu0
        %2120 = vmatprep.mubr.bf16.mxu0 %v1842
        %2121 = vmatmul.mubr.bf16.gmra.mxu0 %v1841
        %v2122 = vpop.f32.mrf.mxu0
        %v2123 = vadd.f32 %v1926, %v2122
        %v2124 = vpop.f32.mrf.mxu0
        %v2125 = vpop.f32.mrf.mxu0
        %v2126 = vadd.f32 %v1926, %v2125
        %v2127 = vpop.f32.mrf.mxu0
        %2128 = vmatprep.mubr.bf16.mxu0 %v1844
        %2129 = vmatmul.mubr.bf16.gmra.mxu0 %v1843
        %v2130 = vpop.f32.mrf.mxu0
        %v2131 = vadd.f32 %v1926, %v2130
        %v2132 = vpop.f32.mrf.mxu0
        %v2133 = vpop.f32.mrf.mxu0
        %v2134 = vadd.f32 %v1926, %v2133
        %v2135 = vpop.f32.mrf.mxu0
        %2136 = vmatprep.mubr.bf16.mxu0 %v1846
        %2137 = vmatmul.mubr.bf16.gmra.mxu0 %v1845
        %v2138 = vpop.f32.mrf.mxu0
        %v2139 = vadd.f32 %v1926, %v2138
        %v2140 = vpop.f32.mrf.mxu0
        %v2141 = vpop.f32.mrf.mxu0
        %v2142 = vadd.f32 %v1926, %v2141
        %v2143 = vpop.f32.mrf.mxu0
        %2144 = vmatprep.mubr.bf16.mxu0 %v1848
        %2145 = vmatmul.mubr.bf16.gmra.mxu0 %v1847
        %v2146 = vpop.f32.mrf.mxu0
        %v2147 = vadd.f32 %v1926, %v2146
        %v2148 = vpop.f32.mrf.mxu0
        %v2149 = vpop.f32.mrf.mxu0
        %v2150 = vadd.f32 %v1926, %v2149
        %v2151 = vpop.f32.mrf.mxu0
        %2152 = vmatprep.mubr.bf16.mxu0 %v1850
        %2153 = vmatmul.mubr.bf16.gmra.mxu0 %v1849
        %v2154 = vpop.f32.mrf.mxu0
        %v2155 = vadd.f32 %v1926, %v2154
        %v2156 = vpop.f32.mrf.mxu0
        %v2157 = vpop.f32.mrf.mxu0
        %v2158 = vadd.f32 %v1926, %v2157
        %v2159 = vpop.f32.mrf.mxu0
        %2160 = vmatprep.mubr.bf16.mxu0 %v1852
        %2161 = vmatmul.mubr.bf16.gmra.mxu0 %v1851
        %v2162 = vpop.f32.mrf.mxu0
        %v2163 = vadd.f32 %v1926, %v2162
        %v2164 = vpop.f32.mrf.mxu0
        %v2165 = vpop.f32.mrf.mxu0
        %v2166 = vadd.f32 %v1926, %v2165
        %v2167 = vpop.f32.mrf.mxu0
        %2168 = vmatprep.mubr.bf16.mxu0 %v1854
        %2169 = vmatmul.mubr.bf16.gmra.mxu0 %v1853
        %v2170 = vpop.f32.mrf.mxu0
        %v2171 = vadd.f32 %v1926, %v2170
        %v2172 = vpop.f32.mrf.mxu0
        %v2173 = vpop.f32.mrf.mxu0
        %v2174 = vadd.f32 %v1926, %v2173
        %v2175 = vpop.f32.mrf.mxu0
        %2176 = vmatprep.mubr.bf16.mxu0 %v1856
        %2177 = vmatmul.mubr.bf16.gmra.mxu0 %v1855
        %v2178 = vpop.f32.mrf.mxu0
        %v2179 = vadd.f32 %v1926, %v2178
        %v2180 = vpop.f32.mrf.mxu0
        %v2181 = vpop.f32.mrf.mxu0
        %v2182 = vadd.f32 %v1926, %v2181
        %v2183 = vpop.f32.mrf.mxu0
        %2184 = vmatprep.mubr.bf16.mxu0 %v1858
        %2185 = vmatmul.mubr.bf16.gmra.mxu0 %v1857
        %v2186 = vpop.f32.mrf.mxu0
        %v2187 = vadd.f32 %v1926, %v2186
        %v2188 = vpop.f32.mrf.mxu0
        %v2189 = vpop.f32.mrf.mxu0
        %v2190 = vadd.f32 %v1926, %v2189
        %v2191 = vpop.f32.mrf.mxu0
        %2192 = vmatprep.mubr.bf16.mxu0 %v1860
        %2193 = vmatmul.mubr.bf16.gmra.mxu0 %v1859
        %v2194 = vpop.f32.mrf.mxu0
        %v2195 = vadd.f32 %v1926, %v2194
        %v2196 = vpop.f32.mrf.mxu0
        %v2197 = vpop.f32.mrf.mxu0
        %v2198 = vadd.f32 %v1926, %v2197
        %v2199 = vpop.f32.mrf.mxu0
        %2200 = vmatprep.mubr.bf16.mxu0 %v1862
        %2201 = vmatmul.mubr.bf16.gmra.mxu0 %v1861
        %v2202 = vpop.f32.mrf.mxu0
        %v2203 = vadd.f32 %v1926, %v2202
        %v2204 = vpop.f32.mrf.mxu0
        %v2205 = vpop.f32.mrf.mxu0
        %v2206 = vadd.f32 %v1926, %v2205
        %v2207 = vpop.f32.mrf.mxu0
        %2208 = vmatprep.mubr.bf16.mxu0 %v1864
        %2209 = vmatmul.mubr.bf16.gmra.mxu0 %v1863
        %v2210 = vpop.f32.mrf.mxu0
        %v2211 = vadd.f32 %v1926, %v2210
        %v2212 = vpop.f32.mrf.mxu0
        %v2213 = vpop.f32.mrf.mxu0
        %v2214 = vadd.f32 %v1926, %v2213
        %v2215 = vpop.f32.mrf.mxu0
        %2216 = vmatprep.mubr.bf16.mxu0 %v1866
        %2217 = vmatmul.mubr.bf16.gmra.mxu0 %v1865
        %v2218 = vpop.f32.mrf.mxu0
        %v2219 = vadd.f32 %v1926, %v2218
        %v2220 = vpop.f32.mrf.mxu0
        %v2221 = vpop.f32.mrf.mxu0
        %v2222 = vadd.f32 %v1926, %v2221
        %v2223 = vpop.f32.mrf.mxu0
        %2224 = vmatprep.mubr.bf16.mxu0 %v1868
        %2225 = vmatmul.mubr.bf16.gmra.mxu0 %v1867
        %v2226 = vpop.f32.mrf.mxu0
        %v2227 = vadd.f32 %v1926, %v2226
        %v2228 = vpop.f32.mrf.mxu0
        %v2229 = vpop.f32.mrf.mxu0
        %v2230 = vadd.f32 %v1926, %v2229
        %v2231 = vpop.f32.mrf.mxu0
        %2232 = vmatprep.mubr.bf16.mxu0 %v1870
        %2233 = vmatmul.mubr.bf16.gmra.mxu0 %v1869
        %v2234 = vpop.f32.mrf.mxu0
        %v2235 = vadd.f32 %v1926, %v2234
        %v2236 = vpop.f32.mrf.mxu0
        %v2237 = vpop.f32.mrf.mxu0
        %v2238 = vadd.f32 %v1926, %v2237
        %v2239 = vpop.f32.mrf.mxu0
        %2240 = vmatprep.mubr.bf16.mxu0 %v1872
        %2241 = vmatmul.mubr.bf16.gmra.mxu0 %v1871
        %v2242 = vpop.f32.mrf.mxu0
        %v2243 = vadd.f32 %v1926, %v2242
        %v2244 = vpop.f32.mrf.mxu0
        %v2245 = vpop.f32.mrf.mxu0
        %v2246 = vadd.f32 %v1926, %v2245
        %v2247 = vpop.f32.mrf.mxu0
        %2248 = vmatprep.mubr.bf16.mxu0 %v1874
        %2249 = vmatmul.mubr.bf16.gmra.mxu0 %v1873
        %v2250 = vpop.f32.mrf.mxu0
        %v2251 = vadd.f32 %v1926, %v2250
        %v2252 = vpop.f32.mrf.mxu0
        %v2253 = vpop.f32.mrf.mxu0
        %v2254 = vadd.f32 %v1926, %v2253
        %v2255 = vpop.f32.mrf.mxu0
        %2256 = vmatprep.mubr.bf16.mxu0 %v1876
        %2257 = vmatmul.mubr.bf16.gmra.mxu0 %v1875
        %v2258 = vpop.f32.mrf.mxu0
        %v2259 = vadd.f32 %v1926, %v2258
        %v2260 = vpop.f32.mrf.mxu0
        %v2261 = vpop.f32.mrf.mxu0
        %v2262 = vadd.f32 %v1926, %v2261
        %v2263 = vpop.f32.mrf.mxu0
        %2264 = vmatprep.mubr.bf16.mxu0 %v1878
        %2265 = vmatmul.mubr.bf16.gmra.mxu0 %v1877
        %v2266 = vpop.f32.mrf.mxu0
        %v2267 = vadd.f32 %v1926, %v2266
        %v2268 = vpop.f32.mrf.mxu0
        %v2269 = vpop.f32.mrf.mxu0
        %v2270 = vadd.f32 %v1926, %v2269
        %v2271 = vpop.f32.mrf.mxu0
        %2272 = vmatprep.mubr.bf16.mxu0 %v1880
        %2273 = vmatmul.mubr.bf16.gmra.mxu0 %v1879
        %v2274 = vpop.f32.mrf.mxu0
        %v2275 = vadd.f32 %v1926, %v2274
        %v2276 = vpop.f32.mrf.mxu0
        %v2277 = vpop.f32.mrf.mxu0
        %v2278 = vadd.f32 %v1926, %v2277
        %v2279 = vpop.f32.mrf.mxu0
        %2280 = vmatprep.mubr.bf16.mxu0 %v1882
        %2281 = vmatmul.mubr.bf16.gmra.mxu0 %v1881
        %v2282 = vpop.f32.mrf.mxu0
        %v2283 = vadd.f32 %v1926, %v2282
        %v2284 = vpop.f32.mrf.mxu0
        %v2285 = vpop.f32.mrf.mxu0
        %v2286 = vadd.f32 %v1926, %v2285
        %v2287 = vpop.f32.mrf.mxu0
        %2288 = vmatprep.mubr.bf16.mxu0 %v1884
        %2289 = vmatmul.mubr.bf16.gmra.mxu0 %v1883
        %v2290 = vpop.f32.mrf.mxu0
        %v2291 = vadd.f32 %v1926, %v2290
        %v2292 = vpop.f32.mrf.mxu0
        %v2293 = vpop.f32.mrf.mxu0
        %v2294 = vadd.f32 %v1926, %v2293
        %v2295 = vpop.f32.mrf.mxu0
        %2296 = vmatprep.mubr.bf16.mxu0 %v1886
        %2297 = vmatmul.mubr.bf16.gmra.mxu0 %v1885
        %v2298 = vpop.f32.mrf.mxu0
        %v2299 = vadd.f32 %v1926, %v2298
        %v2300 = vpop.f32.mrf.mxu0
        %v2301 = vpop.f32.mrf.mxu0
        %v2302 = vadd.f32 %v1926, %v2301
        %v2303 = vpop.f32.mrf.mxu0
        %2304 = vmatprep.mubr.bf16.mxu0 %v1888
        %2305 = vmatmul.mubr.bf16.gmra.mxu0 %v1887
        %v2306 = vpop.f32.mrf.mxu0
        %v2307 = vadd.f32 %v1926, %v2306
        %v2308 = vpop.f32.mrf.mxu0
        %v2309 = vpop.f32.mrf.mxu0
        %v2310 = vadd.f32 %v1926, %v2309
        %v2311 = vpop.f32.mrf.mxu0
        %2312 = vdwg.mxu0
        %v2313 = vpack.c.bf16 %v2062, %v2059
        %v2314 = vpack.c.bf16 %v2070, %v2067
        %v2315 = vpack.c.bf16 %v2078, %v2075
        %v2316 = vpack.c.bf16 %v2086, %v2083
        %v2317 = vpack.c.bf16 %v2094, %v2091
        %v2318 = vpack.c.bf16 %v2102, %v2099
        %v2319 = vpack.c.bf16 %v2110, %v2107
        %v2320 = vpack.c.bf16 %v2118, %v2115
        %v2321 = vpack.c.bf16 %v2126, %v2123
        %v2322 = vpack.c.bf16 %v2134, %v2131
        %v2323 = vpack.c.bf16 %v2142, %v2139
        %v2324 = vpack.c.bf16 %v2150, %v2147
        %v2325 = vpack.c.bf16 %v2158, %v2155
        %v2326 = vpack.c.bf16 %v2166, %v2163
        %v2327 = vpack.c.bf16 %v2174, %v2171
        %v2328 = vpack.c.bf16 %v2182, %v2179
        %v2329 = vpack.c.bf16 %v2190, %v2187
        %v2330 = vpack.c.bf16 %v2198, %v2195
        %v2331 = vpack.c.bf16 %v2206, %v2203
        %v2332 = vpack.c.bf16 %v2214, %v2211
        %v2333 = vpack.c.bf16 %v2222, %v2219
        %v2334 = vpack.c.bf16 %v2230, %v2227
        %v2335 = vpack.c.bf16 %v2238, %v2235
        %v2336 = vpack.c.bf16 %v2246, %v2243
        %v2337 = vpack.c.bf16 %v2254, %v2251
        %v2338 = vpack.c.bf16 %v2262, %v2259
        %v2339 = vpack.c.bf16 %v2270, %v2267
        %v2340 = vpack.c.bf16 %v2278, %v2275
        %v2341 = vpack.c.bf16 %v2286, %v2283
        %v2342 = vpack.c.bf16 %v2294, %v2291
        %v2343 = vpack.c.bf16 %v2302, %v2299
        %v2344 = vpack.c.bf16 %v2310, %v2307
        %v2377 = vunpack.c.l.b16 %v2313
        %v2378 = vunpack.c.h.b16 %v2313
        %v2379 = vunpack.c.l.b16 %v2314
        %v2380 = vunpack.c.h.b16 %v2314
        %v2381 = vunpack.c.l.b16 %v2315
        %v2382 = vunpack.c.h.b16 %v2315
        %v2383 = vunpack.c.l.b16 %v2316
        %v2384 = vunpack.c.h.b16 %v2316
        %v2385 = vunpack.c.l.b16 %v2317
        %v2386 = vunpack.c.h.b16 %v2317
        %v2387 = vunpack.c.l.b16 %v2318
        %v2388 = vunpack.c.h.b16 %v2318
        %v2389 = vunpack.c.l.b16 %v2319
        %v2390 = vunpack.c.h.b16 %v2319
        %v2391 = vunpack.c.l.b16 %v2320
        %v2392 = vunpack.c.h.b16 %v2320
        %v2393 = vunpack.c.l.b16 %v2321
        %v2394 = vunpack.c.h.b16 %v2321
        %v2395 = vunpack.c.l.b16 %v2322
        %v2396 = vunpack.c.h.b16 %v2322
        %v2397 = vunpack.c.l.b16 %v2323
        %v2398 = vunpack.c.h.b16 %v2323
        %v2399 = vunpack.c.l.b16 %v2324
        %v2400 = vunpack.c.h.b16 %v2324
        %v2401 = vunpack.c.l.b16 %v2325
        %v2402 = vunpack.c.h.b16 %v2325
        %v2403 = vunpack.c.l.b16 %v2326
        %v2404 = vunpack.c.h.b16 %v2326
        %v2405 = vunpack.c.l.b16 %v2327
        %v2406 = vunpack.c.h.b16 %v2327
        %v2407 = vunpack.c.l.b16 %v2328
        %v2408 = vunpack.c.h.b16 %v2328
        %v2409 = vunpack.c.l.b16 %v2329
        %v2410 = vunpack.c.h.b16 %v2329
        %v2411 = vunpack.c.l.b16 %v2330
        %v2412 = vunpack.c.h.b16 %v2330
        %v2413 = vunpack.c.l.b16 %v2331
        %v2414 = vunpack.c.h.b16 %v2331
        %v2415 = vunpack.c.l.b16 %v2332
        %v2416 = vunpack.c.h.b16 %v2332
        %v2417 = vunpack.c.l.b16 %v2333
        %v2418 = vunpack.c.h.b16 %v2333
        %v2419 = vunpack.c.l.b16 %v2334
        %v2420 = vunpack.c.h.b16 %v2334
        %v2421 = vunpack.c.l.b16 %v2335
        %v2422 = vunpack.c.h.b16 %v2335
        %v2423 = vunpack.c.l.b16 %v2336
        %v2424 = vunpack.c.h.b16 %v2336
        %v2425 = vunpack.c.l.b16 %v2337
        %v2426 = vunpack.c.h.b16 %v2337
        %v2427 = vunpack.c.l.b16 %v2338
        %v2428 = vunpack.c.h.b16 %v2338
        %v2429 = vunpack.c.l.b16 %v2339
        %v2430 = vunpack.c.h.b16 %v2339
        %v2431 = vunpack.c.l.b16 %v2340
        %v2432 = vunpack.c.h.b16 %v2340
        %v2433 = vunpack.c.l.b16 %v2341
        %v2434 = vunpack.c.h.b16 %v2341
        %v2435 = vunpack.c.l.b16 %v2342
        %v2436 = vunpack.c.h.b16 %v2342
        %v2437 = vunpack.c.l.b16 %v2343
        %v2438 = vunpack.c.h.b16 %v2343
        %v2439 = vunpack.c.l.b16 %v2344
        %v2440 = vunpack.c.h.b16 %v2344
        %v2441 = vpack.c.b16 %v2377, %v2377
        %v2442 = vpack.c.b16 %v2378, %v2378
        %v2443 = vpack.c.b16 %v2379, %v2379
        %v2444 = vpack.c.b16 %v2380, %v2380
        %v2445 = vpack.c.b16 %v2381, %v2381
        %v2446 = vpack.c.b16 %v2382, %v2382
        %v2447 = vpack.c.b16 %v2383, %v2383
        %v2448 = vpack.c.b16 %v2384, %v2384
        %v2449 = vpack.c.b16 %v2385, %v2385
        %v2450 = vpack.c.b16 %v2386, %v2386
        %v2451 = vpack.c.b16 %v2387, %v2387
        %v2452 = vpack.c.b16 %v2388, %v2388
        %v2453 = vpack.c.b16 %v2389, %v2389
        %v2454 = vpack.c.b16 %v2390, %v2390
        %v2455 = vpack.c.b16 %v2391, %v2391
        %v2456 = vpack.c.b16 %v2392, %v2392
        %v2457 = vpack.c.b16 %v2393, %v2393
        %v2458 = vpack.c.b16 %v2394, %v2394
        %v2459 = vpack.c.b16 %v2395, %v2395
        %v2460 = vpack.c.b16 %v2396, %v2396
        %v2461 = vpack.c.b16 %v2397, %v2397
        %v2462 = vpack.c.b16 %v2398, %v2398
        %v2463 = vpack.c.b16 %v2399, %v2399
        %v2464 = vpack.c.b16 %v2400, %v2400
        %v2465 = vpack.c.b16 %v2401, %v2401
        %v2466 = vpack.c.b16 %v2402, %v2402
        %v2467 = vpack.c.b16 %v2403, %v2403
        %v2468 = vpack.c.b16 %v2404, %v2404
        %v2469 = vpack.c.b16 %v2405, %v2405
        %v2470 = vpack.c.b16 %v2406, %v2406
        %v2471 = vpack.c.b16 %v2407, %v2407
        %v2472 = vpack.c.b16 %v2408, %v2408
        %v2473 = vpack.c.b16 %v2409, %v2409
        %v2474 = vpack.c.b16 %v2410, %v2410
        %v2475 = vpack.c.b16 %v2411, %v2411
        %v2476 = vpack.c.b16 %v2412, %v2412
        %v2477 = vpack.c.b16 %v2413, %v2413
        %v2478 = vpack.c.b16 %v2414, %v2414
        %v2479 = vpack.c.b16 %v2415, %v2415
        %v2480 = vpack.c.b16 %v2416, %v2416
        %v2481 = vpack.c.b16 %v2417, %v2417
        %v2482 = vpack.c.b16 %v2418, %v2418
        %v2483 = vpack.c.b16 %v2419, %v2419
        %v2484 = vpack.c.b16 %v2420, %v2420
        %v2485 = vpack.c.b16 %v2421, %v2421
        %v2486 = vpack.c.b16 %v2422, %v2422
        %v2487 = vpack.c.b16 %v2423, %v2423
        %v2488 = vpack.c.b16 %v2424, %v2424
        %v2489 = vpack.c.b16 %v2425, %v2425
        %v2490 = vpack.c.b16 %v2426, %v2426
        %v2491 = vpack.c.b16 %v2427, %v2427
        %v2492 = vpack.c.b16 %v2428, %v2428
        %v2493 = vpack.c.b16 %v2429, %v2429
        %v2494 = vpack.c.b16 %v2430, %v2430
        %v2495 = vpack.c.b16 %v2431, %v2431
        %v2496 = vpack.c.b16 %v2432, %v2432
        %v2497 = vpack.c.b16 %v2433, %v2433
        %v2498 = vpack.c.b16 %v2434, %v2434
        %v2499 = vpack.c.b16 %v2435, %v2435
        %v2500 = vpack.c.b16 %v2436, %v2436
        %v2501 = vpack.c.b16 %v2437, %v2437
        %v2502 = vpack.c.b16 %v2438, %v2438
        %v2503 = vpack.c.b16 %v2439, %v2439
        %v2504 = vpack.c.b16 %v2440, %v2440
        %2569 = vst [vmem:[%s284] sm:$0xf] %v2441
        %2570 = vst [vmem:[%s284 + $0x4] sm:$0xf] %v2442
        %2571 = vst [vmem:[%s284 + $0x8] sm:$0xf] %v2443
        %2572 = vst [vmem:[%s284 + $0xc] sm:$0xf] %v2444
        %2573 = vst [vmem:[%s284 + $0x10] sm:$0xf] %v2445
        %2574 = vst [vmem:[%s284 + $0x14] sm:$0xf] %v2446
        %2575 = vst [vmem:[%s284 + $0x18] sm:$0xf] %v2447
        %2576 = vst [vmem:[%s284 + $0x1c] sm:$0xf] %v2448
        %2577 = vst [vmem:[%s284 + $0x20] sm:$0xf] %v2449
        %2578 = vst [vmem:[%s284 + $0x24] sm:$0xf] %v2450
        %2579 = vst [vmem:[%s284 + $0x28] sm:$0xf] %v2451
        %2580 = vst [vmem:[%s284 + $0x2c] sm:$0xf] %v2452
        %2581 = vst [vmem:[%s284 + $0x30] sm:$0xf] %v2453
        %2582 = vst [vmem:[%s284 + $0x34] sm:$0xf] %v2454
        %2583 = vst [vmem:[%s284 + $0x38] sm:$0xf] %v2455
        %2584 = vst [vmem:[%s284 + $0x3c] sm:$0xf] %v2456
        %2585 = vst [vmem:[%s284 + $0x40] sm:$0xf] %v2457
        %2586 = vst [vmem:[%s284 + $0x44] sm:$0xf] %v2458
        %2587 = vst [vmem:[%s284 + $0x48] sm:$0xf] %v2459
        %2588 = vst [vmem:[%s284 + $0x4c] sm:$0xf] %v2460
        %2589 = vst [vmem:[%s284 + $0x50] sm:$0xf] %v2461
        %2590 = vst [vmem:[%s284 + $0x54] sm:$0xf] %v2462
        %2591 = vst [vmem:[%s284 + $0x58] sm:$0xf] %v2463
        %2592 = vst [vmem:[%s284 + $0x5c] sm:$0xf] %v2464
        %2593 = vst [vmem:[%s284 + $0x60] sm:$0xf] %v2465
        %2594 = vst [vmem:[%s284 + $0x64] sm:$0xf] %v2466
        %2595 = vst [vmem:[%s284 + $0x68] sm:$0xf] %v2467
        %2596 = vst [vmem:[%s284 + $0x6c] sm:$0xf] %v2468
        %2597 = vst [vmem:[%s284 + $0x70] sm:$0xf] %v2469
        %2598 = vst [vmem:[%s284 + $0x74] sm:$0xf] %v2470
        %2599 = vst [vmem:[%s284 + $0x78] sm:$0xf] %v2471
        %2600 = vst [vmem:[%s284 + $0x7c] sm:$0xf] %v2472
        %2601 = vst [vmem:[%s284 + $0x80] sm:$0xf] %v2473
        %2602 = vst [vmem:[%s284 + $0x84] sm:$0xf] %v2474
        %2603 = vst [vmem:[%s284 + $0x88] sm:$0xf] %v2475
        %2604 = vst [vmem:[%s284 + $0x8c] sm:$0xf] %v2476
        %2605 = vst [vmem:[%s284 + $0x90] sm:$0xf] %v2477
        %2606 = vst [vmem:[%s284 + $0x94] sm:$0xf] %v2478
        %2607 = vst [vmem:[%s284 + $0x98] sm:$0xf] %v2479
        %2608 = vst [vmem:[%s284 + $0x9c] sm:$0xf] %v2480
        %2609 = vst [vmem:[%s284 + $0xa0] sm:$0xf] %v2481
        %2610 = vst [vmem:[%s284 + $0xa4] sm:$0xf] %v2482
        %2611 = vst [vmem:[%s284 + $0xa8] sm:$0xf] %v2483
        %2612 = vst [vmem:[%s284 + $0xac] sm:$0xf] %v2484
        %2613 = vst [vmem:[%s284 + $0xb0] sm:$0xf] %v2485
        %2614 = vst [vmem:[%s284 + $0xb4] sm:$0xf] %v2486
        %2615 = vst [vmem:[%s284 + $0xb8] sm:$0xf] %v2487
        %2616 = vst [vmem:[%s284 + $0xbc] sm:$0xf] %v2488
        %2617 = vst [vmem:[%s284 + $0xc0] sm:$0xf] %v2489
        %2618 = vst [vmem:[%s284 + $0xc4] sm:$0xf] %v2490
        %2619 = vst [vmem:[%s284 + $0xc8] sm:$0xf] %v2491
        %2620 = vst [vmem:[%s284 + $0xcc] sm:$0xf] %v2492
        %2621 = vst [vmem:[%s284 + $0xd0] sm:$0xf] %v2493
        %2622 = vst [vmem:[%s284 + $0xd4] sm:$0xf] %v2494
        %2623 = vst [vmem:[%s284 + $0xd8] sm:$0xf] %v2495
        %2624 = vst [vmem:[%s284 + $0xdc] sm:$0xf] %v2496
        %2625 = vst [vmem:[%s284 + $0xe0] sm:$0xf] %v2497
        %2626 = vst [vmem:[%s284 + $0xe4] sm:$0xf] %v2498
        %2627 = vst [vmem:[%s284 + $0xe8] sm:$0xf] %v2499
        %2628 = vst [vmem:[%s284 + $0xec] sm:$0xf] %v2500
        %2629 = vst [vmem:[%s284 + $0xf0] sm:$0xf] %v2501
        %2630 = vst [vmem:[%s284 + $0xf4] sm:$0xf] %v2502
        %2631 = vst [vmem:[%s284 + $0xf8] sm:$0xf] %v2503
        %2632 = vst [vmem:[%s284 + $0xfc] sm:$0xf] %v2504
        %s2633 = sand.u32 %s181, 1
        %s2634 = scalar_lea.sflag [#allocation3], %s2633
        %s2635 = sand.u32 %s181, 1
        %s2636 = smul.addr %s2635, 256
        %s2637 = scalar_lea.vmem [#allocation2], %s2636
        // Predicated region
        $region49: #{tpu_custom_call.1} parent=47 // pred_check
          %p2638 = pneg %p191
        $region50: #{tpu_custom_call.1} parent=47 // pred_check_branch
          %2640 = sbr.rel (%p2638) target = $region52
        $region51: #{tpu_custom_call.1} parent=47 // pred_region
          %s2641 = smul.u32 64, %s21
          %s2642 = ssub.s32 125, %s2641
          %p2643 = scmp.lt.s32.totalorder %s2642, 64
          %s2644 = scalar_select %p2643, %s2642, 64
          %s2645 = smul.u32 64, %s2644
          %s2647 = ssub.s32 4096, %s2645
          %2648 = vsyncadd %s2634, %s2647
          %p2649 = scmp.ne.s32.totalorder 0, %s2645
          %s2650 = smul.addr %s2641, 64
          %s2651 = scalar_lea.hbm %s7, %s2650
          %s2652 = smul.u32 4, %s2644
          %s2653 = sshll.u32 %s2637, 4
          %s2654 = int_to_ptr.vmem [resolvable:$true] %s2653
          %s2655 = sshll.u32 %s2652, 4
          %2659 = dma.vmem_to_hbm [thread:$0]  (%p2649), %s2654, %s2655, %s2651, %s2634, 64, 64, 4
        $region52: #{tpu_custom_call.1} parent=47 // pred_fallthru
          _
      $region48: #{tpu_custom_call.1} parent=5 // pred_fallthru
        _
      %p2660 = scmp.le.s32.totalorder 2, %s16
      // Predicated region
      $region53: #{tpu_custom_call.1} parent=5 // pred_check
        %p2661 = pneg %p2660
      $region54: #{tpu_custom_call.1} parent=5 // pred_check_branch
        %2663 = sbr.rel (%p2661) target = $region56
      $region55: #{tpu_custom_call.1} parent=5 // pred_region
        %s2664 = ssub.s32 %s16, 2
        // Predicated region
        $region57: #{tpu_custom_call.1} parent=55 // pred_check
          %p2665 = pneg %p197
        $region58: #{tpu_custom_call.1} parent=55 // pred_check_branch
          %2667 = sbr.rel (%p2665) target = $region60
        $region59: #{tpu_custom_call.1} parent=55 // pred_region
          %s2668 = sand.u32 %s182, 1
          %s2669 = scalar_lea.sflag [#allocation3], %s2668
          %s2670 = sand.u32 %s182, 1
          %s2671 = smul.addr %s2670, 256
          %s2672 = scalar_lea.vmem [#allocation2], %s2671
          %2673 = dma.done %s2669, 4096
        $region60: #{tpu_custom_call.1} parent=55 // pred_fallthru
          _
      $region56: #{tpu_custom_call.1} parent=5 // pred_fallthru
        _
    $region6: #{tpu_custom_call.1} parent=1 // loop_footer
      %s20 = sadd.s32 1, %s16
    $region7: #{tpu_custom_call.1} parent=1 // loop_footer_branch
      %15 = sbr.rel target = $region3
    $region8: #{tpu_custom_call.1} parent=1 // loop_exit
      _
    %2674 = vsyncpa [#allocation3], 1
    %s2675 = scalar_lea.sflag [#allocation3], 1
    %2676 = vsyncpa %s2675, 1

</llo_original>
